<compile_context>
chip_gen: v6e
topology: v6e:2x2x1
jax: 0.10.0
libtpu: 0.0.40
codegen_flags: <defaults>
</compile_context>

<pallas_src>
import functools

import jax
import jax.numpy as jnp
from jax.experimental import pallas as pl
from jax.experimental.pallas import tpu as pltpu


# ---------------------------------------------------------------------------
# Kernel: one grid step == one UnconditionalFlatDoubleCouplingFlowBlock
# ---------------------------------------------------------------------------
def _flow_block_kernel(x_ref, loc_ref, scale_ref, w_in_ref, b_in_ref,
                       w_mid_ref, b_mid_ref, w_out_ref, b_out_ref, perm_ref,
                       out_x_ref, out_ld_ref,
                       xa_ref, xb_ref, ld_ref,
                       *, depth, alpha, neg_slope):
    f32 = jnp.float32
    f = pl.program_id(0)

    @pl.when(f == 0)
    def _init():
        xa_ref[...] = x_ref[0].astype(f32)      # first channel half  (B, Ch)
        xb_ref[...] = x_ref[1].astype(f32)      # second channel half (B, Ch)
        ld_ref[...] = jnp.zeros_like(ld_ref)

    a = xa_ref[...]
    b = xb_ref[...]
    ld = ld_ref[...]                            # (B, 1) f32

    # ---------------- ActNorm (spatial 1x1): h = scale * (x + loc) ----------
    loc_a = loc_ref[0, 0].astype(f32)           # (1, Ch)
    loc_b = loc_ref[0, 1].astype(f32)
    sc_a = scale_ref[0, 0].astype(f32)
    sc_b = scale_ref[0, 1].astype(f32)
    a = sc_a * (a + loc_a)
    b = sc_b * (b + loc_b)
    ld = ld + (jnp.sum(jnp.log(jnp.abs(sc_a))) + jnp.sum(jnp.log(jnp.abs(sc_b))))

    # ---------------- InvLeakyRelu (module returns logdet = 0.0) ------------
    a = jnp.where(a >= 0, a, a * alpha)
    b = jnp.where(b >= 0, b, b * alpha)

    # ---------------- DoubleVectorCouplingBlock -----------------------------
    # nets stacked along axis 1 of the weight tensors: [s0, s1, t0, t1]
    def mlp(z, net, use_tanh):
        h = jnp.dot(z, w_in_ref[0, net].astype(f32),
                    preferred_element_type=f32) + b_in_ref[0, net].astype(f32)
        h = jnp.where(h >= 0, h, h * neg_slope)
        for d in range(depth):
            h = jnp.dot(h, w_mid_ref[0, net * depth + d].astype(f32),
                        preferred_element_type=f32) \
                + b_mid_ref[0, net * depth + d].astype(f32)
            h = jnp.where(h >= 0, h, h * neg_slope)
        h = jnp.dot(h, w_out_ref[0, net].astype(f32),
                    preferred_element_type=f32) + b_out_ref[0, net].astype(f32)
        return jnp.tanh(h) if use_tanh else h

    # coupling layer 0: transform second half conditioned on first half
    s0 = mlp(a, 0, True)
    b = b * jnp.exp(s0) + mlp(a, 2, False)
    ld = ld + jnp.sum(s0, axis=1, keepdims=True)

    # coupling layer 1: halves are swapped first -> transform the (old) first
    # half conditioned on the freshly transformed second half.
    s1 = mlp(b, 1, True)
    a_new = a * jnp.exp(s1) + mlp(b, 3, False)
    ld = ld + jnp.sum(s1, axis=1, keepdims=True)
    a, b = b, a_new                             # full vector is now [b, a_new]

    # ---------------- Shuffle: channel permutation as exact 0/1 block matmul
    # perm_ref blocks: [0]=P_aa, [1]=P_ab, [2]=P_ba, [3]=P_bb
    y_a = (jnp.dot(a, perm_ref[0, 0].astype(f32), preferred_element_type=f32) +
           jnp.dot(b, perm_ref[0, 2].astype(f32), preferred_element_type=f32))
    y_b = (jnp.dot(a, perm_ref[0, 1].astype(f32), preferred_element_type=f32) +
           jnp.dot(b, perm_ref[0, 3].astype(f32), preferred_element_type=f32))

    xa_ref[...] = y_a
    xb_ref[...] = y_b
    ld_ref[...] = ld

    @pl.when(f == pl.num_programs(0) - 1)
    def _finalize():
        out_x_ref[0] = y_a.astype(out_x_ref.dtype)
        out_x_ref[1] = y_b.astype(out_x_ref.dtype)
        out_ld_ref[...] = ld


# ---------------------------------------------------------------------------
# Wrapper (pallas_call glue)
# ---------------------------------------------------------------------------
def unconditional_flow_forward(x, params, *, alpha=0.95, neg_slope=0.01):
    """Forward pass of UnconditionalFlow. Returns (h, logdet) like the module."""
    was_4d = (x.ndim == 4)
    if was_4d:
        assert x.shape[2] == 1 and x.shape[3] == 1
        x2d = x.reshape(x.shape[0], x.shape[1])
    else:
        x2d = x

    B, C = x2d.shape
    assert C % 2 == 0
    Ch = C // 2
    nf, _, _, H = params["w_in"].shape
    D = params["w_mid"].shape[2]
    assert D >= 1  # TODO(synk): hidden_depth == 0 (single hidden layer) not handled

    # --- layout plumbing (wrapper side; cheap XLA reshapes) ------------------
    x_halves = x2d.reshape(B, 2, Ch).transpose(1, 0, 2)          # (2, B, Ch)
    loc = params["actnorm_loc"].reshape(nf, 2, 1, Ch)
    scale = params["actnorm_scale"].reshape(nf, 2, 1, Ch)
    b_in = params["b_in"].reshape(nf, 4, 1, H)
    w_mid = params["w_mid"].reshape(nf, 4 * D, H, H)
    b_mid = params["b_mid"].reshape(nf, 4 * D, 1, H)
    b_out = params["b_out"].reshape(nf, 4, 1, Ch)

    # one-hot permutation, split into 2x2 half-to-half blocks, flattened to 4
    perm = params["perm"]                                         # (nf, C) int32
    onehot = (jnp.arange(C, dtype=perm.dtype)[None, :, None]
              == perm[:, None, :]).astype(x2d.dtype)              # (nf, C, C)
    perm_blk = (onehot.reshape(nf, 2, Ch, 2, Ch)
                .transpose(0, 1, 3, 2, 4)
                .reshape(nf, 4, Ch, Ch))                          # [aa, ab, ba, bb]

    kernel = functools.partial(_flow_block_kernel, depth=D, alpha=alpha,
                               neg_slope=neg_slope)

    out_x, out_ld = pl.pallas_call(
        kernel,
        out_shape=(jax.ShapeDtypeStruct((2, B, Ch), x2d.dtype),
                   jax.ShapeDtypeStruct((B, 1), jnp.float32)),
        grid=(nf,),
        in_specs=[
            pl.BlockSpec((2, B, Ch), lambda f: (0, 0, 0)),               # x halves
            pl.BlockSpec((1, 2, 1, Ch), lambda f: (f, 0, 0, 0)),          # actnorm loc
            pl.BlockSpec((1, 2, 1, Ch), lambda f: (f, 0, 0, 0)),          # actnorm scale
            pl.BlockSpec((1, 4, Ch, H), lambda f: (f, 0, 0, 0)),          # W_in
            pl.BlockSpec((1, 4, 1, H), lambda f: (f, 0, 0, 0)),           # b_in
            pl.BlockSpec((1, 4 * D, H, H), lambda f: (f, 0, 0, 0)),       # W_mid
            pl.BlockSpec((1, 4 * D, 1, H), lambda f: (f, 0, 0, 0)),       # b_mid
            pl.BlockSpec((1, 4, H, Ch), lambda f: (f, 0, 0, 0)),          # W_out
            pl.BlockSpec((1, 4, 1, Ch), lambda f: (f, 0, 0, 0)),          # b_out
            pl.BlockSpec((1, 4, Ch, Ch), lambda f: (f, 0, 0, 0)),         # shuffle P
        ],
        out_specs=(
            pl.BlockSpec((2, B, Ch), lambda f: (0, 0, 0)),
            pl.BlockSpec((B, 1), lambda f: (0, 0)),
        ),
        scratch_shapes=[
            pltpu.VMEM((B, Ch), jnp.float32),    # first-half state
            pltpu.VMEM((B, Ch), jnp.float32),    # second-half state
            pltpu.VMEM((B, 1), jnp.float32),     # per-sample logdet
        ],
        compiler_params=pltpu.CompilerParams(
            dimension_semantics=("arbitrary",)),  # flows are sequential
    )(x_halves, loc, scale, params["w_in"], b_in, w_mid, b_mid,
      params["w_out"], b_out, perm_blk)

    h = out_x.transpose(1, 0, 2).reshape(B, C)
    logdet = out_ld[:, 0]
    if was_4d:
        h = h[:, :, None, None]
    return h, logdet


# ---------------------------------------------------------------------------
# Parameter construction (stands in for the PyTorch module's state_dict)
# ---------------------------------------------------------------------------
def init_params(key, in_channels, hidden_dim, hidden_depth, n_flows):
    C, H, D, nf = in_channels, hidden_dim, hidden_depth, n_flows
    Ch = C // 2
    ks = jax.random.split(key, 9)

    def w(k, shape, fan_in, gain=1.0):
        return gain * jax.random.normal(k, shape, jnp.float32) / jnp.sqrt(fan_in)

    params = {
        "actnorm_loc": 0.1 * jax.random.normal(ks[0], (nf, C), jnp.float32),
        "actnorm_scale": jax.random.uniform(ks[1], (nf, C), jnp.float32, 0.7, 1.3),
        # net axis ordering: [s0, s1, t0, t1]
        "w_in": w(ks[2], (nf, 4, Ch, H), Ch),
        "b_in": 0.05 * jax.random.normal(ks[3], (nf, 4, H), jnp.float32),
        "w_mid": w(ks[4], (nf, 4, D, H, H), H),
        "b_mid": 0.05 * jax.random.normal(ks[5], (nf, 4, D, H), jnp.float32),
        "w_out": w(ks[6], (nf, 4, H, Ch), H, gain=0.1),
        "b_out": 0.01 * jax.random.normal(ks[7], (nf, 4, Ch), jnp.float32),
    }
    perms, pk = [], ks[8]
    for _ in range(nf):
        pk, sub = jax.random.split(pk)
        perms.append(jax.random.permutation(sub, C))
    params["perm"] = jnp.stack(perms).astype(jnp.int32)
    return params


# ---------------------------------------------------------------------------
# Pure-JAX reference mirroring the PyTorch forward
# ---------------------------------------------------------------------------
def _ref_forward(x, params, *, alpha=0.95, neg_slope=0.01):
    was_4d = (x.ndim == 4)
    h = (x.reshape(x.shape[0], x.shape[1]) if was_4d else x).astype(jnp.float32)
    B, C = h.shape
    Ch = C // 2
    nf = params["w_in"].shape[0]
    D = params["w_mid"].shape[2]
    ld = jnp.zeros((B,), jnp.float32)

    def lrelu(z):
        return jnp.where(z >= 0, z, neg_slope * z)

    def mlp(z, f, net, use_tanh):
        y = lrelu(z @ params["w_in"][f, net] + params["b_in"][f, net])
        for d in range(D):
            y = lrelu(y @ params["w_mid"][f, net, d] + params["b_mid"][f, net, d])
        y = y @ params["w_out"][f, net] + params["b_out"][f, net]
        return jnp.tanh(y) if use_tanh else y

    for f in range(nf):
        sc, lc = params["actnorm_scale"][f], params["actnorm_loc"][f]
        h = sc[None, :] * (h + lc[None, :])                    # ActNorm
        ld = ld + jnp.sum(jnp.log(jnp.abs(sc)))
        h = jnp.where(h >= 0, h, alpha * h)                    # InvLeakyRelu (ld += 0)
        for i in range(2):                                     # coupling
            if i % 2 != 0:
                h = jnp.concatenate([h[:, Ch:], h[:, :Ch]], axis=1)
            xa, xb = h[:, :Ch], h[:, Ch:]
            s = mlp(xa, f, i, True)
            t = mlp(xa, f, 2 + i, False)
            h = jnp.concatenate([xa, xb * jnp.exp(s) + t], axis=1)
            ld = ld + jnp.sum(s, axis=1)
        h = h[:, params["perm"][f]]                            # Shuffle
    if was_4d:
        h = h[:, :, None, None]
    return h, ld


if __name__ == "__main__":
    key = jax.random.PRNGKey(0)
    B, C, HID, DEPTH, NFLOWS = 8, 16, 32, 2, 4

    kx, kp = jax.random.split(key)
    x = jax.random.normal(kx, (B, C, 1, 1), dtype=jnp.float32)
    params = init_params(kp, C, HID, DEPTH, NFLOWS)

    out, logdet = unconditional_flow_forward(x, params)
    out = jax.block_until_ready(out)
    logdet = jax.block_until_ready(logdet)

    ref_out, ref_ld = _ref_forward(x, params)

    assert out.shape == (B, C, 1, 1), out.shape
    assert logdet.shape == (B,), logdet.shape
    assert jnp.allclose(out, ref_out, atol=2e-3, rtol=2e-3), \
        float(jnp.max(jnp.abs(out - ref_out)))
    assert jnp.allclose(logdet, ref_ld, atol=2e-3, rtol=2e-3), \
        float(jnp.max(jnp.abs(logdet - ref_ld)))

    print("KERNEL_OK")
</pallas_src>

<mosaic_0001>
module attributes {stable_mosaic.version = 11 : i64} {
  func.func @_flow_block_kernel(%arg0: i32, %arg1: memref<2x8x8xf32, #tpu.memory_space<vmem>>, %arg2: memref<1x2x1x8xf32, #tpu.memory_space<vmem>>, %arg3: memref<1x2x1x8xf32, #tpu.memory_space<vmem>>, %arg4: memref<1x4x8x32xf32, #tpu.memory_space<vmem>>, %arg5: memref<1x4x1x32xf32, #tpu.memory_space<vmem>>, %arg6: memref<1x8x32x32xf32, #tpu.memory_space<vmem>>, %arg7: memref<1x8x1x32xf32, #tpu.memory_space<vmem>>, %arg8: memref<1x4x32x8xf32, #tpu.memory_space<vmem>>, %arg9: memref<1x4x1x8xf32, #tpu.memory_space<vmem>>, %arg10: memref<1x4x8x8xf32, #tpu.memory_space<vmem>>, %arg11: memref<2x8x8xf32, #tpu.memory_space<vmem>>, %arg12: memref<8x1xf32, #tpu.memory_space<vmem>>, %arg13: memref<8x8xf32, #tpu.memory_space<vmem>>, %arg14: memref<8x8xf32, #tpu.memory_space<vmem>>, %arg15: memref<8x1xf32, #tpu.memory_space<vmem>>) attributes {dimension_semantics = [#tpu.dimension_semantics<arbitrary>], iteration_bounds = array<i64: 4>, scalar_prefetch = 0 : i64, scratch_operands = 3 : i64, tpu.core_type = #tpu.core_type<tc>, window_params = [{pipeline_mode = #tpu.pipeline_mode<synchronous>, transform_indices = @transform_0, window_bounds = array<i64: 2, 8, 8>}, {transform_indices = @transform_1, window_bounds = array<i64: 1, 2, 1, 8>}, {transform_indices = @transform_2, window_bounds = array<i64: 1, 2, 1, 8>}, {transform_indices = @transform_3, window_bounds = array<i64: 1, 4, 8, 32>}, {transform_indices = @transform_4, window_bounds = array<i64: 1, 4, 1, 32>}, {transform_indices = @transform_5, window_bounds = array<i64: 1, 8, 32, 32>}, {transform_indices = @transform_6, window_bounds = array<i64: 1, 8, 1, 32>}, {transform_indices = @transform_7, window_bounds = array<i64: 1, 4, 32, 8>}, {transform_indices = @transform_8, window_bounds = array<i64: 1, 4, 1, 8>}, {transform_indices = @transform_9, window_bounds = array<i64: 1, 4, 8, 8>}, {pipeline_mode = #tpu.pipeline_mode<synchronous>, transform_indices = @transform_10, window_bounds = array<i64: 2, 8, 8>}, {pipeline_mode = #tpu.pipeline_mode<synchronous>, transform_indices = @transform_11, window_bounds = array<i64: 8, 1>}]} {
    %c0_i32 = arith.constant 0 : i32
    %0 = arith.cmpi eq, %arg0, %c0_i32 : i32
    %1 = arith.extui %0 : i1 to i32
    %c0_i32_0 = arith.constant 0 : i32
    %2 = arith.cmpi ne, %1, %c0_i32_0 : i32
    scf.if %2 {
      %c0_217 = arith.constant 0 : index
      %c0_218 = arith.constant 0 : index
      %c0_219 = arith.constant 0 : index
      %253 = vector.load %arg1[%c0_217, %c0_218, %c0_219] : memref<2x8x8xf32, #tpu.memory_space<vmem>>, vector<1x8x8xf32>
      %254 = vector.shape_cast %253 : vector<1x8x8xf32> to vector<8x8xf32>
      %c0_220 = arith.constant 0 : index
      %c0_221 = arith.constant 0 : index
      %255 = vector.load %arg13[%c0_220, %c0_221] : memref<8x8xf32, #tpu.memory_space<vmem>>, vector<8x8xf32>
      tpu.vector_store %arg13[%c0_220, %c0_221], %254 {strides = array<i32>} : memref<8x8xf32, #tpu.memory_space<vmem>>, vector<8x8xf32>,
      %c1_222 = arith.constant 1 : index
      %c0_223 = arith.constant 0 : index
      %c0_224 = arith.constant 0 : index
      %256 = vector.load %arg1[%c1_222, %c0_223, %c0_224] : memref<2x8x8xf32, #tpu.memory_space<vmem>>, vector<1x8x8xf32>
      %257 = vector.shape_cast %256 : vector<1x8x8xf32> to vector<8x8xf32>
      %c0_225 = arith.constant 0 : index
      %c0_226 = arith.constant 0 : index
      %258 = vector.load %arg14[%c0_225, %c0_226] : memref<8x8xf32, #tpu.memory_space<vmem>>, vector<8x8xf32>
      tpu.vector_store %arg14[%c0_225, %c0_226], %257 {strides = array<i32>} : memref<8x8xf32, #tpu.memory_space<vmem>>, vector<8x8xf32>,
      %cst_227 = arith.constant 0.000000e+00 : f32
      %259 = vector.broadcast %cst_227 : f32 to vector<8x1xf32>
      %c0_228 = arith.constant 0 : index
      %c0_229 = arith.constant 0 : index
      %260 = vector.load %arg15[%c0_228, %c0_229] : memref<8x1xf32, #tpu.memory_space<vmem>>, vector<8x1xf32>
      tpu.vector_store %arg15[%c0_228, %c0_229], %259 {strides = array<i32>} : memref<8x1xf32, #tpu.memory_space<vmem>>, vector<8x1xf32>,
    } else {
    }
    %c0 = arith.constant 0 : index
    %c0_1 = arith.constant 0 : index
    %3 = vector.load %arg13[%c0, %c0_1] : memref<8x8xf32, #tpu.memory_space<vmem>>, vector<8x8xf32>
    %c0_2 = arith.constant 0 : index
    %c0_3 = arith.constant 0 : index
    %4 = vector.load %arg14[%c0_2, %c0_3] : memref<8x8xf32, #tpu.memory_space<vmem>>, vector<8x8xf32>
    %c0_4 = arith.constant 0 : index
    %c0_5 = arith.constant 0 : index
    %5 = vector.load %arg15[%c0_4, %c0_5] : memref<8x1xf32, #tpu.memory_space<vmem>>, vector<8x1xf32>
    %c0_6 = arith.constant 0 : index
    %c0_7 = arith.constant 0 : index
    %c0_8 = arith.constant 0 : index
    %c0_9 = arith.constant 0 : index
    %6 = vector.load %arg2[%c0_6, %c0_7, %c0_8, %c0_9] : memref<1x2x1x8xf32, #tpu.memory_space<vmem>>, vector<1x1x1x8xf32>
    %7 = vector.shape_cast %6 : vector<1x1x1x8xf32> to vector<1x8xf32>
    %c0_10 = arith.constant 0 : index
    %c1 = arith.constant 1 : index
    %c0_11 = arith.constant 0 : index
    %c0_12 = arith.constant 0 : index
    %8 = vector.load %arg2[%c0_10, %c1, %c0_11, %c0_12] : memref<1x2x1x8xf32, #tpu.memory_space<vmem>>, vector<1x1x1x8xf32>
    %9 = vector.shape_cast %8 : vector<1x1x1x8xf32> to vector<1x8xf32>
    %c0_13 = arith.constant 0 : index
    %c0_14 = arith.constant 0 : index
    %c0_15 = arith.constant 0 : index
    %c0_16 = arith.constant 0 : index
    %10 = vector.load %arg3[%c0_13, %c0_14, %c0_15, %c0_16] : memref<1x2x1x8xf32, #tpu.memory_space<vmem>>, vector<1x1x1x8xf32>
    %11 = vector.shape_cast %10 : vector<1x1x1x8xf32> to vector<1x8xf32>
    %c0_17 = arith.constant 0 : index
    %c1_18 = arith.constant 1 : index
    %c0_19 = arith.constant 0 : index
    %c0_20 = arith.constant 0 : index
    %12 = vector.load %arg3[%c0_17, %c1_18, %c0_19, %c0_20] : memref<1x2x1x8xf32, #tpu.memory_space<vmem>>, vector<1x1x1x8xf32>
    %13 = vector.shape_cast %12 : vector<1x1x1x8xf32> to vector<1x8xf32>
    %14 = vector.broadcast %7 : vector<1x8xf32> to vector<8x8xf32>
    %15 = arith.addf %3, %14 : vector<8x8xf32>
    %16 = vector.broadcast %11 : vector<1x8xf32> to vector<8x8xf32>
    %17 = arith.mulf %16, %15 : vector<8x8xf32>
    %18 = vector.broadcast %9 : vector<1x8xf32> to vector<8x8xf32>
    %19 = arith.addf %4, %18 : vector<8x8xf32>
    %20 = vector.broadcast %13 : vector<1x8xf32> to vector<8x8xf32>
    %21 = arith.mulf %20, %19 : vector<8x8xf32>
    %22 = math.absf %11 : vector<1x8xf32>
    %23 = math.log %22 : vector<1x8xf32>
    %24 = vector.shape_cast %23 : vector<1x8xf32> to vector<1x1x8xf32>
    %cst = arith.constant dense<0.000000e+00> : vector<1xf32>
    %25 = vector.multi_reduction <add>, %24, %cst [1, 2] : vector<1x1x8xf32> to vector<1xf32>
    %26 = vector.shape_cast %25 : vector<1xf32> to vector<1x1x1xf32>
    %27 = vector.extract %26[0, 0, 0] : f32 from vector<1x1x1xf32>
    %28 = math.absf %13 : vector<1x8xf32>
    %29 = math.log %28 : vector<1x8xf32>
    %30 = vector.shape_cast %29 : vector<1x8xf32> to vector<1x1x8xf32>
    %cst_21 = arith.constant dense<0.000000e+00> : vector<1xf32>
    %31 = vector.multi_reduction <add>, %30, %cst_21 [1, 2] : vector<1x1x8xf32> to vector<1xf32>
    %32 = vector.shape_cast %31 : vector<1xf32> to vector<1x1x1xf32>
    %33 = vector.extract %32[0, 0, 0] : f32 from vector<1x1x1xf32>
    %34 = arith.addf %27, %33 : f32
    %35 = vector.broadcast %34 : f32 to vector<8x1xf32>
    %36 = arith.addf %5, %35 : vector<8x1xf32>
    %cst_22 = arith.constant 0.000000e+00 : f32
    %37 = vector.broadcast %cst_22 : f32 to vector<8x8xf32>
    %38 = arith.cmpf oge, %17, %37 : vector<8x8xf32>
    %cst_23 = arith.constant 0.949999988 : f32
    %39 = vector.broadcast %cst_23 : f32 to vector<8x8xf32>
    %40 = arith.mulf %17, %39 : vector<8x8xf32>
    %41 = arith.select %38, %17, %40 : vector<8x8xi1>, vector<8x8xf32>
    %cst_24 = arith.constant 0.000000e+00 : f32
    %42 = vector.broadcast %cst_24 : f32 to vector<8x8xf32>
    %43 = arith.cmpf oge, %21, %42 : vector<8x8xf32>
    %cst_25 = arith.constant 0.949999988 : f32
    %44 = vector.broadcast %cst_25 : f32 to vector<8x8xf32>
    %45 = arith.mulf %21, %44 : vector<8x8xf32>
    %46 = arith.select %43, %21, %45 : vector<8x8xi1>, vector<8x8xf32>
    %c0_26 = arith.constant 0 : index
    %c0_27 = arith.constant 0 : index
    %c0_28 = arith.constant 0 : index
    %c0_29 = arith.constant 0 : index
    %47 = vector.load %arg4[%c0_26, %c0_27, %c0_28, %c0_29] : memref<1x4x8x32xf32, #tpu.memory_space<vmem>>, vector<1x1x8x32xf32>
    %48 = vector.shape_cast %47 : vector<1x1x8x32xf32> to vector<8x32xf32>
    %cst_30 = arith.constant dense<0.000000e+00> : vector<8x32xf32>
    %49 = tpu.matmul %41, %48, %cst_30 {dimension_numbers = #tpu.dot_dimension_numbers<[1], [0], [0], [1], [0, 0, 1, 1], [], []>} : vector<8x8xf32>, vector<8x32xf32>, vector<8x32xf32> -> vector<8x32xf32>
    %c0_31 = arith.constant 0 : index
    %c0_32 = arith.constant 0 : index
    %c0_33 = arith.constant 0 : index
    %c0_34 = arith.constant 0 : index
    %50 = vector.load %arg5[%c0_31, %c0_32, %c0_33, %c0_34] : memref<1x4x1x32xf32, #tpu.memory_space<vmem>>, vector<1x1x1x32xf32>
    %51 = vector.shape_cast %50 : vector<1x1x1x32xf32> to vector<1x32xf32>
    %52 = vector.broadcast %51 : vector<1x32xf32> to vector<8x32xf32>
    %53 = arith.addf %49, %52 : vector<8x32xf32>
    %cst_35 = arith.constant 0.000000e+00 : f32
    %54 = vector.broadcast %cst_35 : f32 to vector<8x32xf32>
    %55 = arith.cmpf oge, %53, %54 : vector<8x32xf32>
    %cst_36 = arith.constant 0.00999999977 : f32
    %56 = vector.broadcast %cst_36 : f32 to vector<8x32xf32>
    %57 = arith.mulf %53, %56 : vector<8x32xf32>
    %58 = arith.select %55, %53, %57 : vector<8x32xi1>, vector<8x32xf32>
    %c0_37 = arith.constant 0 : index
    %c0_38 = arith.constant 0 : index
    %c0_39 = arith.constant 0 : index
    %c0_40 = arith.constant 0 : index
    %59 = vector.load %arg6[%c0_37, %c0_38, %c0_39, %c0_40] : memref<1x8x32x32xf32, #tpu.memory_space<vmem>>, vector<1x1x32x32xf32>
    %60 = vector.shape_cast %59 : vector<1x1x32x32xf32> to vector<32x32xf32>
    %cst_41 = arith.constant dense<0.000000e+00> : vector<8x32xf32>
    %61 = tpu.matmul %58, %60, %cst_41 {dimension_numbers = #tpu.dot_dimension_numbers<[1], [0], [0], [1], [0, 0, 1, 1], [], []>} : vector<8x32xf32>, vector<32x32xf32>, vector<8x32xf32> -> vector<8x32xf32>
    %c0_42 = arith.constant 0 : index
    %c0_43 = arith.constant 0 : index
    %c0_44 = arith.constant 0 : index
    %c0_45 = arith.constant 0 : index
    %62 = vector.load %arg7[%c0_42, %c0_43, %c0_44, %c0_45] : memref<1x8x1x32xf32, #tpu.memory_space<vmem>>, vector<1x1x1x32xf32>
    %63 = vector.shape_cast %62 : vector<1x1x1x32xf32> to vector<1x32xf32>
    %64 = vector.broadcast %63 : vector<1x32xf32> to vector<8x32xf32>
    %65 = arith.addf %61, %64 : vector<8x32xf32>
    %cst_46 = arith.constant 0.000000e+00 : f32
    %66 = vector.broadcast %cst_46 : f32 to vector<8x32xf32>
    %67 = arith.cmpf oge, %65, %66 : vector<8x32xf32>
    %cst_47 = arith.constant 0.00999999977 : f32
    %68 = vector.broadcast %cst_47 : f32 to vector<8x32xf32>
    %69 = arith.mulf %65, %68 : vector<8x32xf32>
    %70 = arith.select %67, %65, %69 : vector<8x32xi1>, vector<8x32xf32>
    %c0_48 = arith.constant 0 : index
    %c1_49 = arith.constant 1 : index
    %c0_50 = arith.constant 0 : index
    %c0_51 = arith.constant 0 : index
    %71 = vector.load %arg6[%c0_48, %c1_49, %c0_50, %c0_51] : memref<1x8x32x32xf32, #tpu.memory_space<vmem>>, vector<1x1x32x32xf32>
    %72 = vector.shape_cast %71 : vector<1x1x32x32xf32> to vector<32x32xf32>
    %cst_52 = arith.constant dense<0.000000e+00> : vector<8x32xf32>
    %73 = tpu.matmul %70, %72, %cst_52 {dimension_numbers = #tpu.dot_dimension_numbers<[1], [0], [0], [1], [0, 0, 1, 1], [], []>} : vector<8x32xf32>, vector<32x32xf32>, vector<8x32xf32> -> vector<8x32xf32>
    %c0_53 = arith.constant 0 : index
    %c1_54 = arith.constant 1 : index
    %c0_55 = arith.constant 0 : index
    %c0_56 = arith.constant 0 : index
    %74 = vector.load %arg7[%c0_53, %c1_54, %c0_55, %c0_56] : memref<1x8x1x32xf32, #tpu.memory_space<vmem>>, vector<1x1x1x32xf32>
    %75 = vector.shape_cast %74 : vector<1x1x1x32xf32> to vector<1x32xf32>
    %76 = vector.broadcast %75 : vector<1x32xf32> to vector<8x32xf32>
    %77 = arith.addf %73, %76 : vector<8x32xf32>
    %cst_57 = arith.constant 0.000000e+00 : f32
    %78 = vector.broadcast %cst_57 : f32 to vector<8x32xf32>
    %79 = arith.cmpf oge, %77, %78 : vector<8x32xf32>
    %cst_58 = arith.constant 0.00999999977 : f32
    %80 = vector.broadcast %cst_58 : f32 to vector<8x32xf32>
    %81 = arith.mulf %77, %80 : vector<8x32xf32>
    %82 = arith.select %79, %77, %81 : vector<8x32xi1>, vector<8x32xf32>
    %c0_59 = arith.constant 0 : index
    %c0_60 = arith.constant 0 : index
    %c0_61 = arith.constant 0 : index
    %c0_62 = arith.constant 0 : index
    %83 = vector.load %arg8[%c0_59, %c0_60, %c0_61, %c0_62] : memref<1x4x32x8xf32, #tpu.memory_space<vmem>>, vector<1x1x32x8xf32>
    %84 = vector.shape_cast %83 : vector<1x1x32x8xf32> to vector<32x8xf32>
    %cst_63 = arith.constant dense<0.000000e+00> : vector<8x8xf32>
    %85 = tpu.matmul %82, %84, %cst_63 {dimension_numbers = #tpu.dot_dimension_numbers<[1], [0], [0], [1], [0, 0, 1, 1], [], []>} : vector<8x32xf32>, vector<32x8xf32>, vector<8x8xf32> -> vector<8x8xf32>
    %c0_64 = arith.constant 0 : index
    %c0_65 = arith.constant 0 : index
    %c0_66 = arith.constant 0 : index
    %c0_67 = arith.constant 0 : index
    %86 = vector.load %arg9[%c0_64, %c0_65, %c0_66, %c0_67] : memref<1x4x1x8xf32, #tpu.memory_space<vmem>>, vector<1x1x1x8xf32>
    %87 = vector.shape_cast %86 : vector<1x1x1x8xf32> to vector<1x8xf32>
    %88 = vector.broadcast %87 : vector<1x8xf32> to vector<8x8xf32>
    %89 = arith.addf %85, %88 : vector<8x8xf32>
    %90 = math.tanh %89 : vector<8x8xf32>
    %91 = math.exp %90 : vector<8x8xf32>
    %92 = arith.mulf %46, %91 : vector<8x8xf32>
    %c0_68 = arith.constant 0 : index
    %c2 = arith.constant 2 : index
    %c0_69 = arith.constant 0 : index
    %c0_70 = arith.constant 0 : index
    %93 = vector.load %arg4[%c0_68, %c2, %c0_69, %c0_70] : memref<1x4x8x32xf32, #tpu.memory_space<vmem>>, vector<1x1x8x32xf32>
    %94 = vector.shape_cast %93 : vector<1x1x8x32xf32> to vector<8x32xf32>
    %cst_71 = arith.constant dense<0.000000e+00> : vector<8x32xf32>
    %95 = tpu.matmul %41, %94, %cst_71 {dimension_numbers = #tpu.dot_dimension_numbers<[1], [0], [0], [1], [0, 0, 1, 1], [], []>} : vector<8x8xf32>, vector<8x32xf32>, vector<8x32xf32> -> vector<8x32xf32>
    %c0_72 = arith.constant 0 : index
    %c2_73 = arith.constant 2 : index
    %c0_74 = arith.constant 0 : index
    %c0_75 = arith.constant 0 : index
    %96 = vector.load %arg5[%c0_72, %c2_73, %c0_74, %c0_75] : memref<1x4x1x32xf32, #tpu.memory_space<vmem>>, vector<1x1x1x32xf32>
    %97 = vector.shape_cast %96 : vector<1x1x1x32xf32> to vector<1x32xf32>
    %98 = vector.broadcast %97 : vector<1x32xf32> to vector<8x32xf32>
    %99 = arith.addf %95, %98 : vector<8x32xf32>
    %cst_76 = arith.constant 0.000000e+00 : f32
    %100 = vector.broadcast %cst_76 : f32 to vector<8x32xf32>
    %101 = arith.cmpf oge, %99, %100 : vector<8x32xf32>
    %cst_77 = arith.constant 0.00999999977 : f32
    %102 = vector.broadcast %cst_77 : f32 to vector<8x32xf32>
    %103 = arith.mulf %99, %102 : vector<8x32xf32>
    %104 = arith.select %101, %99, %103 : vector<8x32xi1>, vector<8x32xf32>
    %c0_78 = arith.constant 0 : index
    %c4 = arith.constant 4 : index
    %c0_79 = arith.constant 0 : index
    %c0_80 = arith.constant 0 : index
    %105 = vector.load %arg6[%c0_78, %c4, %c0_79, %c0_80] : memref<1x8x32x32xf32, #tpu.memory_space<vmem>>, vector<1x1x32x32xf32>
    %106 = vector.shape_cast %105 : vector<1x1x32x32xf32> to vector<32x32xf32>
    %cst_81 = arith.constant dense<0.000000e+00> : vector<8x32xf32>
    %107 = tpu.matmul %104, %106, %cst_81 {dimension_numbers = #tpu.dot_dimension_numbers<[1], [0], [0], [1], [0, 0, 1, 1], [], []>} : vector<8x32xf32>, vector<32x32xf32>, vector<8x32xf32> -> vector<8x32xf32>
    %c0_82 = arith.constant 0 : index
    %c4_83 = arith.constant 4 : index
    %c0_84 = arith.constant 0 : index
    %c0_85 = arith.constant 0 : index
    %108 = vector.load %arg7[%c0_82, %c4_83, %c0_84, %c0_85] : memref<1x8x1x32xf32, #tpu.memory_space<vmem>>, vector<1x1x1x32xf32>
    %109 = vector.shape_cast %108 : vector<1x1x1x32xf32> to vector<1x32xf32>
    %110 = vector.broadcast %109 : vector<1x32xf32> to vector<8x32xf32>
    %111 = arith.addf %107, %110 : vector<8x32xf32>
    %cst_86 = arith.constant 0.000000e+00 : f32
    %112 = vector.broadcast %cst_86 : f32 to vector<8x32xf32>
    %113 = arith.cmpf oge, %111, %112 : vector<8x32xf32>
    %cst_87 = arith.constant 0.00999999977 : f32
    %114 = vector.broadcast %cst_87 : f32 to vector<8x32xf32>
    %115 = arith.mulf %111, %114 : vector<8x32xf32>
    %116 = arith.select %113, %111, %115 : vector<8x32xi1>, vector<8x32xf32>
    %c0_88 = arith.constant 0 : index
    %c5 = arith.constant 5 : index
    %c0_89 = arith.constant 0 : index
    %c0_90 = arith.constant 0 : index
    %117 = vector.load %arg6[%c0_88, %c5, %c0_89, %c0_90] : memref<1x8x32x32xf32, #tpu.memory_space<vmem>>, vector<1x1x32x32xf32>
    %118 = vector.shape_cast %117 : vector<1x1x32x32xf32> to vector<32x32xf32>
    %cst_91 = arith.constant dense<0.000000e+00> : vector<8x32xf32>
    %119 = tpu.matmul %116, %118, %cst_91 {dimension_numbers = #tpu.dot_dimension_numbers<[1], [0], [0], [1], [0, 0, 1, 1], [], []>} : vector<8x32xf32>, vector<32x32xf32>, vector<8x32xf32> -> vector<8x32xf32>
    %c0_92 = arith.constant 0 : index
    %c5_93 = arith.constant 5 : index
    %c0_94 = arith.constant 0 : index
    %c0_95 = arith.constant 0 : index
    %120 = vector.load %arg7[%c0_92, %c5_93, %c0_94, %c0_95] : memref<1x8x1x32xf32, #tpu.memory_space<vmem>>, vector<1x1x1x32xf32>
    %121 = vector.shape_cast %120 : vector<1x1x1x32xf32> to vector<1x32xf32>
    %122 = vector.broadcast %121 : vector<1x32xf32> to vector<8x32xf32>
    %123 = arith.addf %119, %122 : vector<8x32xf32>
    %cst_96 = arith.constant 0.000000e+00 : f32
    %124 = vector.broadcast %cst_96 : f32 to vector<8x32xf32>
    %125 = arith.cmpf oge, %123, %124 : vector<8x32xf32>
    %cst_97 = arith.constant 0.00999999977 : f32
    %126 = vector.broadcast %cst_97 : f32 to vector<8x32xf32>
    %127 = arith.mulf %123, %126 : vector<8x32xf32>
    %128 = arith.select %125, %123, %127 : vector<8x32xi1>, vector<8x32xf32>
    %c0_98 = arith.constant 0 : index
    %c2_99 = arith.constant 2 : index
    %c0_100 = arith.constant 0 : index
    %c0_101 = arith.constant 0 : index
    %129 = vector.load %arg8[%c0_98, %c2_99, %c0_100, %c0_101] : memref<1x4x32x8xf32, #tpu.memory_space<vmem>>, vector<1x1x32x8xf32>
    %130 = vector.shape_cast %129 : vector<1x1x32x8xf32> to vector<32x8xf32>
    %cst_102 = arith.constant dense<0.000000e+00> : vector<8x8xf32>
    %131 = tpu.matmul %128, %130, %cst_102 {dimension_numbers = #tpu.dot_dimension_numbers<[1], [0], [0], [1], [0, 0, 1, 1], [], []>} : vector<8x32xf32>, vector<32x8xf32>, vector<8x8xf32> -> vector<8x8xf32>
    %c0_103 = arith.constant 0 : index
    %c2_104 = arith.constant 2 : index
    %c0_105 = arith.constant 0 : index
    %c0_106 = arith.constant 0 : index
    %132 = vector.load %arg9[%c0_103, %c2_104, %c0_105, %c0_106] : memref<1x4x1x8xf32, #tpu.memory_space<vmem>>, vector<1x1x1x8xf32>
    %133 = vector.shape_cast %132 : vector<1x1x1x8xf32> to vector<1x8xf32>
    %134 = vector.broadcast %133 : vector<1x8xf32> to vector<8x8xf32>
    %135 = arith.addf %131, %134 : vector<8x8xf32>
    %136 = arith.addf %92, %135 : vector<8x8xf32>
    %cst_107 = arith.constant dense<0.000000e+00> : vector<8xf32>
    %137 = vector.multi_reduction <add>, %90, %cst_107 [1] : vector<8x8xf32> to vector<8xf32>
    %138 = vector.shape_cast %137 : vector<8xf32> to vector<8x1xf32>
    %139 = arith.addf %36, %138 : vector<8x1xf32>
    %c0_108 = arith.constant 0 : index
    %c1_109 = arith.constant 1 : index
    %c0_110 = arith.constant 0 : index
    %c0_111 = arith.constant 0 : index
    %140 = vector.load %arg4[%c0_108, %c1_109, %c0_110, %c0_111] : memref<1x4x8x32xf32, #tpu.memory_space<vmem>>, vector<1x1x8x32xf32>
    %141 = vector.shape_cast %140 : vector<1x1x8x32xf32> to vector<8x32xf32>
    %cst_112 = arith.constant dense<0.000000e+00> : vector<8x32xf32>
    %142 = tpu.matmul %136, %141, %cst_112 {dimension_numbers = #tpu.dot_dimension_numbers<[1], [0], [0], [1], [0, 0, 1, 1], [], []>} : vector<8x8xf32>, vector<8x32xf32>, vector<8x32xf32> -> vector<8x32xf32>
    %c0_113 = arith.constant 0 : index
    %c1_114 = arith.constant 1 : index
    %c0_115 = arith.constant 0 : index
    %c0_116 = arith.constant 0 : index
    %143 = vector.load %arg5[%c0_113, %c1_114, %c0_115, %c0_116] : memref<1x4x1x32xf32, #tpu.memory_space<vmem>>, vector<1x1x1x32xf32>
    %144 = vector.shape_cast %143 : vector<1x1x1x32xf32> to vector<1x32xf32>
    %145 = vector.broadcast %144 : vector<1x32xf32> to vector<8x32xf32>
    %146 = arith.addf %142, %145 : vector<8x32xf32>
    %cst_117 = arith.constant 0.000000e+00 : f32
    %147 = vector.broadcast %cst_117 : f32 to vector<8x32xf32>
    %148 = arith.cmpf oge, %146, %147 : vector<8x32xf32>
    %cst_118 = arith.constant 0.00999999977 : f32
    %149 = vector.broadcast %cst_118 : f32 to vector<8x32xf32>
    %150 = arith.mulf %146, %149 : vector<8x32xf32>
    %151 = arith.select %148, %146, %150 : vector<8x32xi1>, vector<8x32xf32>
    %c0_119 = arith.constant 0 : index
    %c2_120 = arith.constant 2 : index
    %c0_121 = arith.constant 0 : index
    %c0_122 = arith.constant 0 : index
    %152 = vector.load %arg6[%c0_119, %c2_120, %c0_121, %c0_122] : memref<1x8x32x32xf32, #tpu.memory_space<vmem>>, vector<1x1x32x32xf32>
    %153 = vector.shape_cast %152 : vector<1x1x32x32xf32> to vector<32x32xf32>
    %cst_123 = arith.constant dense<0.000000e+00> : vector<8x32xf32>
    %154 = tpu.matmul %151, %153, %cst_123 {dimension_numbers = #tpu.dot_dimension_numbers<[1], [0], [0], [1], [0, 0, 1, 1], [], []>} : vector<8x32xf32>, vector<32x32xf32>, vector<8x32xf32> -> vector<8x32xf32>
    %c0_124 = arith.constant 0 : index
    %c2_125 = arith.constant 2 : index
    %c0_126 = arith.constant 0 : index
    %c0_127 = arith.constant 0 : index
    %155 = vector.load %arg7[%c0_124, %c2_125, %c0_126, %c0_127] : memref<1x8x1x32xf32, #tpu.memory_space<vmem>>, vector<1x1x1x32xf32>
    %156 = vector.shape_cast %155 : vector<1x1x1x32xf32> to vector<1x32xf32>
    %157 = vector.broadcast %156 : vector<1x32xf32> to vector<8x32xf32>
    %158 = arith.addf %154, %157 : vector<8x32xf32>
    %cst_128 = arith.constant 0.000000e+00 : f32
    %159 = vector.broadcast %cst_128 : f32 to vector<8x32xf32>
    %160 = arith.cmpf oge, %158, %159 : vector<8x32xf32>
    %cst_129 = arith.constant 0.00999999977 : f32
    %161 = vector.broadcast %cst_129 : f32 to vector<8x32xf32>
    %162 = arith.mulf %158, %161 : vector<8x32xf32>
    %163 = arith.select %160, %158, %162 : vector<8x32xi1>, vector<8x32xf32>
    %c0_130 = arith.constant 0 : index
    %c3 = arith.constant 3 : index
    %c0_131 = arith.constant 0 : index
    %c0_132 = arith.constant 0 : index
    %164 = vector.load %arg6[%c0_130, %c3, %c0_131, %c0_132] : memref<1x8x32x32xf32, #tpu.memory_space<vmem>>, vector<1x1x32x32xf32>
    %165 = vector.shape_cast %164 : vector<1x1x32x32xf32> to vector<32x32xf32>
    %cst_133 = arith.constant dense<0.000000e+00> : vector<8x32xf32>
    %166 = tpu.matmul %163, %165, %cst_133 {dimension_numbers = #tpu.dot_dimension_numbers<[1], [0], [0], [1], [0, 0, 1, 1], [], []>} : vector<8x32xf32>, vector<32x32xf32>, vector<8x32xf32> -> vector<8x32xf32>
    %c0_134 = arith.constant 0 : index
    %c3_135 = arith.constant 3 : index
    %c0_136 = arith.constant 0 : index
    %c0_137 = arith.constant 0 : index
    %167 = vector.load %arg7[%c0_134, %c3_135, %c0_136, %c0_137] : memref<1x8x1x32xf32, #tpu.memory_space<vmem>>, vector<1x1x1x32xf32>
    %168 = vector.shape_cast %167 : vector<1x1x1x32xf32> to vector<1x32xf32>
    %169 = vector.broadcast %168 : vector<1x32xf32> to vector<8x32xf32>
    %170 = arith.addf %166, %169 : vector<8x32xf32>
    %cst_138 = arith.constant 0.000000e+00 : f32
    %171 = vector.broadcast %cst_138 : f32 to vector<8x32xf32>
    %172 = arith.cmpf oge, %170, %171 : vector<8x32xf32>
    %cst_139 = arith.constant 0.00999999977 : f32
    %173 = vector.broadcast %cst_139 : f32 to vector<8x32xf32>
    %174 = arith.mulf %170, %173 : vector<8x32xf32>
    %175 = arith.select %172, %170, %174 : vector<8x32xi1>, vector<8x32xf32>
    %c0_140 = arith.constant 0 : index
    %c1_141 = arith.constant 1 : index
    %c0_142 = arith.constant 0 : index
    %c0_143 = arith.constant 0 : index
    %176 = vector.load %arg8[%c0_140, %c1_141, %c0_142, %c0_143] : memref<1x4x32x8xf32, #tpu.memory_space<vmem>>, vector<1x1x32x8xf32>
    %177 = vector.shape_cast %176 : vector<1x1x32x8xf32> to vector<32x8xf32>
    %cst_144 = arith.constant dense<0.000000e+00> : vector<8x8xf32>
    %178 = tpu.matmul %175, %177, %cst_144 {dimension_numbers = #tpu.dot_dimension_numbers<[1], [0], [0], [1], [0, 0, 1, 1], [], []>} : vector<8x32xf32>, vector<32x8xf32>, vector<8x8xf32> -> vector<8x8xf32>
    %c0_145 = arith.constant 0 : index
    %c1_146 = arith.constant 1 : index
    %c0_147 = arith.constant 0 : index
    %c0_148 = arith.constant 0 : index
    %179 = vector.load %arg9[%c0_145, %c1_146, %c0_147, %c0_148] : memref<1x4x1x8xf32, #tpu.memory_space<vmem>>, vector<1x1x1x8xf32>
    %180 = vector.shape_cast %179 : vector<1x1x1x8xf32> to vector<1x8xf32>
    %181 = vector.broadcast %180 : vector<1x8xf32> to vector<8x8xf32>
    %182 = arith.addf %178, %181 : vector<8x8xf32>
    %183 = math.tanh %182 : vector<8x8xf32>
    %184 = math.exp %183 : vector<8x8xf32>
    %185 = arith.mulf %41, %184 : vector<8x8xf32>
    %c0_149 = arith.constant 0 : index
    %c3_150 = arith.constant 3 : index
    %c0_151 = arith.constant 0 : index
    %c0_152 = arith.constant 0 : index
    %186 = vector.load %arg4[%c0_149, %c3_150, %c0_151, %c0_152] : memref<1x4x8x32xf32, #tpu.memory_space<vmem>>, vector<1x1x8x32xf32>
    %187 = vector.shape_cast %186 : vector<1x1x8x32xf32> to vector<8x32xf32>
    %cst_153 = arith.constant dense<0.000000e+00> : vector<8x32xf32>
    %188 = tpu.matmul %136, %187, %cst_153 {dimension_numbers = #tpu.dot_dimension_numbers<[1], [0], [0], [1], [0, 0, 1, 1], [], []>} : vector<8x8xf32>, vector<8x32xf32>, vector<8x32xf32> -> vector<8x32xf32>
    %c0_154 = arith.constant 0 : index
    %c3_155 = arith.constant 3 : index
    %c0_156 = arith.constant 0 : index
    %c0_157 = arith.constant 0 : index
    %189 = vector.load %arg5[%c0_154, %c3_155, %c0_156, %c0_157] : memref<1x4x1x32xf32, #tpu.memory_space<vmem>>, vector<1x1x1x32xf32>
    %190 = vector.shape_cast %189 : vector<1x1x1x32xf32> to vector<1x32xf32>
    %191 = vector.broadcast %190 : vector<1x32xf32> to vector<8x32xf32>
    %192 = arith.addf %188, %191 : vector<8x32xf32>
    %cst_158 = arith.constant 0.000000e+00 : f32
    %193 = vector.broadcast %cst_158 : f32 to vector<8x32xf32>
    %194 = arith.cmpf oge, %192, %193 : vector<8x32xf32>
    %cst_159 = arith.constant 0.00999999977 : f32
    %195 = vector.broadcast %cst_159 : f32 to vector<8x32xf32>
    %196 = arith.mulf %192, %195 : vector<8x32xf32>
    %197 = arith.select %194, %192, %196 : vector<8x32xi1>, vector<8x32xf32>
    %c0_160 = arith.constant 0 : index
    %c6 = arith.constant 6 : index
    %c0_161 = arith.constant 0 : index
    %c0_162 = arith.constant 0 : index
    %198 = vector.load %arg6[%c0_160, %c6, %c0_161, %c0_162] : memref<1x8x32x32xf32, #tpu.memory_space<vmem>>, vector<1x1x32x32xf32>
    %199 = vector.shape_cast %198 : vector<1x1x32x32xf32> to vector<32x32xf32>
    %cst_163 = arith.constant dense<0.000000e+00> : vector<8x32xf32>
    %200 = tpu.matmul %197, %199, %cst_163 {dimension_numbers = #tpu.dot_dimension_numbers<[1], [0], [0], [1], [0, 0, 1, 1], [], []>} : vector<8x32xf32>, vector<32x32xf32>, vector<8x32xf32> -> vector<8x32xf32>
    %c0_164 = arith.constant 0 : index
    %c6_165 = arith.constant 6 : index
    %c0_166 = arith.constant 0 : index
    %c0_167 = arith.constant 0 : index
    %201 = vector.load %arg7[%c0_164, %c6_165, %c0_166, %c0_167] : memref<1x8x1x32xf32, #tpu.memory_space<vmem>>, vector<1x1x1x32xf32>
    %202 = vector.shape_cast %201 : vector<1x1x1x32xf32> to vector<1x32xf32>
    %203 = vector.broadcast %202 : vector<1x32xf32> to vector<8x32xf32>
    %204 = arith.addf %200, %203 : vector<8x32xf32>
    %cst_168 = arith.constant 0.000000e+00 : f32
    %205 = vector.broadcast %cst_168 : f32 to vector<8x32xf32>
    %206 = arith.cmpf oge, %204, %205 : vector<8x32xf32>
    %cst_169 = arith.constant 0.00999999977 : f32
    %207 = vector.broadcast %cst_169 : f32 to vector<8x32xf32>
    %208 = arith.mulf %204, %207 : vector<8x32xf32>
    %209 = arith.select %206, %204, %208 : vector<8x32xi1>, vector<8x32xf32>
    %c0_170 = arith.constant 0 : index
    %c7 = arith.constant 7 : index
    %c0_171 = arith.constant 0 : index
    %c0_172 = arith.constant 0 : index
    %210 = vector.load %arg6[%c0_170, %c7, %c0_171, %c0_172] : memref<1x8x32x32xf32, #tpu.memory_space<vmem>>, vector<1x1x32x32xf32>
    %211 = vector.shape_cast %210 : vector<1x1x32x32xf32> to vector<32x32xf32>
    %cst_173 = arith.constant dense<0.000000e+00> : vector<8x32xf32>
    %212 = tpu.matmul %209, %211, %cst_173 {dimension_numbers = #tpu.dot_dimension_numbers<[1], [0], [0], [1], [0, 0, 1, 1], [], []>} : vector<8x32xf32>, vector<32x32xf32>, vector<8x32xf32> -> vector<8x32xf32>
    %c0_174 = arith.constant 0 : index
    %c7_175 = arith.constant 7 : index
    %c0_176 = arith.constant 0 : index
    %c0_177 = arith.constant 0 : index
    %213 = vector.load %arg7[%c0_174, %c7_175, %c0_176, %c0_177] : memref<1x8x1x32xf32, #tpu.memory_space<vmem>>, vector<1x1x1x32xf32>
    %214 = vector.shape_cast %213 : vector<1x1x1x32xf32> to vector<1x32xf32>
    %215 = vector.broadcast %214 : vector<1x32xf32> to vector<8x32xf32>
    %216 = arith.addf %212, %215 : vector<8x32xf32>
    %cst_178 = arith.constant 0.000000e+00 : f32
    %217 = vector.broadcast %cst_178 : f32 to vector<8x32xf32>
    %218 = arith.cmpf oge, %216, %217 : vector<8x32xf32>
    %cst_179 = arith.constant 0.00999999977 : f32
    %219 = vector.broadcast %cst_179 : f32 to vector<8x32xf32>
    %220 = arith.mulf %216, %219 : vector<8x32xf32>
    %221 = arith.select %218, %216, %220 : vector<8x32xi1>, vector<8x32xf32>
    %c0_180 = arith.constant 0 : index
    %c3_181 = arith.constant 3 : index
    %c0_182 = arith.constant 0 : index
    %c0_183 = arith.constant 0 : index
    %222 = vector.load %arg8[%c0_180, %c3_181, %c0_182, %c0_183] : memref<1x4x32x8xf32, #tpu.memory_space<vmem>>, vector<1x1x32x8xf32>
    %223 = vector.shape_cast %222 : vector<1x1x32x8xf32> to vector<32x8xf32>
    %cst_184 = arith.constant dense<0.000000e+00> : vector<8x8xf32>
    %224 = tpu.matmul %221, %223, %cst_184 {dimension_numbers = #tpu.dot_dimension_numbers<[1], [0], [0], [1], [0, 0, 1, 1], [], []>} : vector<8x32xf32>, vector<32x8xf32>, vector<8x8xf32> -> vector<8x8xf32>
    %c0_185 = arith.constant 0 : index
    %c3_186 = arith.constant 3 : index
    %c0_187 = arith.constant 0 : index
    %c0_188 = arith.constant 0 : index
    %225 = vector.load %arg9[%c0_185, %c3_186, %c0_187, %c0_188] : memref<1x4x1x8xf32, #tpu.memory_space<vmem>>, vector<1x1x1x8xf32>
    %226 = vector.shape_cast %225 : vector<1x1x1x8xf32> to vector<1x8xf32>
    %227 = vector.broadcast %226 : vector<1x8xf32> to vector<8x8xf32>
    %228 = arith.addf %224, %227 : vector<8x8xf32>
    %229 = arith.addf %185, %228 : vector<8x8xf32>
    %cst_189 = arith.constant dense<0.000000e+00> : vector<8xf32>
    %230 = vector.multi_reduction <add>, %183, %cst_189 [1] : vector<8x8xf32> to vector<8xf32>
    %231 = vector.shape_cast %230 : vector<8xf32> to vector<8x1xf32>
    %232 = arith.addf %139, %231 : vector<8x1xf32>
    %c0_190 = arith.constant 0 : index
    %c0_191 = arith.constant 0 : index
    %c0_192 = arith.constant 0 : index
    %c0_193 = arith.constant 0 : index
    %233 = vector.load %arg10[%c0_190, %c0_191, %c0_192, %c0_193] : memref<1x4x8x8xf32, #tpu.memory_space<vmem>>, vector<1x1x8x8xf32>
    %234 = vector.shape_cast %233 : vector<1x1x8x8xf32> to vector<8x8xf32>
    %cst_194 = arith.constant dense<0.000000e+00> : vector<8x8xf32>
    %235 = tpu.matmul %136, %234, %cst_194 {dimension_numbers = #tpu.dot_dimension_numbers<[1], [0], [0], [1], [0, 0, 1, 1], [], []>} : vector<8x8xf32>, vector<8x8xf32>, vector<8x8xf32> -> vector<8x8xf32>
    %c0_195 = arith.constant 0 : index
    %c2_196 = arith.constant 2 : index
    %c0_197 = arith.constant 0 : index
    %c0_198 = arith.constant 0 : index
    %236 = vector.load %arg10[%c0_195, %c2_196, %c0_197, %c0_198] : memref<1x4x8x8xf32, #tpu.memory_space<vmem>>, vector<1x1x8x8xf32>
    %237 = vector.shape_cast %236 : vector<1x1x8x8xf32> to vector<8x8xf32>
    %cst_199 = arith.constant dense<0.000000e+00> : vector<8x8xf32>
    %238 = tpu.matmul %229, %237, %cst_199 {dimension_numbers = #tpu.dot_dimension_numbers<[1], [0], [0], [1], [0, 0, 1, 1], [], []>} : vector<8x8xf32>, vector<8x8xf32>, vector<8x8xf32> -> vector<8x8xf32>
    %239 = arith.addf %235, %238 : vector<8x8xf32>
    %c0_200 = arith.constant 0 : index
    %c1_201 = arith.constant 1 : index
    %c0_202 = arith.constant 0 : index
    %c0_203 = arith.constant 0 : index
    %240 = vector.load %arg10[%c0_200, %c1_201, %c0_202, %c0_203] : memref<1x4x8x8xf32, #tpu.memory_space<vmem>>, vector<1x1x8x8xf32>
    %241 = vector.shape_cast %240 : vector<1x1x8x8xf32> to vector<8x8xf32>
    %cst_204 = arith.constant dense<0.000000e+00> : vector<8x8xf32>
    %242 = tpu.matmul %136, %241, %cst_204 {dimension_numbers = #tpu.dot_dimension_numbers<[1], [0], [0], [1], [0, 0, 1, 1], [], []>} : vector<8x8xf32>, vector<8x8xf32>, vector<8x8xf32> -> vector<8x8xf32>
    %c0_205 = arith.constant 0 : index
    %c3_206 = arith.constant 3 : index
    %c0_207 = arith.constant 0 : index
    %c0_208 = arith.constant 0 : index
    %243 = vector.load %arg10[%c0_205, %c3_206, %c0_207, %c0_208] : memref<1x4x8x8xf32, #tpu.memory_space<vmem>>, vector<1x1x8x8xf32>
    %244 = vector.shape_cast %243 : vector<1x1x8x8xf32> to vector<8x8xf32>
    %cst_209 = arith.constant dense<0.000000e+00> : vector<8x8xf32>
    %245 = tpu.matmul %229, %244, %cst_209 {dimension_numbers = #tpu.dot_dimension_numbers<[1], [0], [0], [1], [0, 0, 1, 1], [], []>} : vector<8x8xf32>, vector<8x8xf32>, vector<8x8xf32> -> vector<8x8xf32>
    %246 = arith.addf %242, %245 : vector<8x8xf32>
    %c0_210 = arith.constant 0 : index
    %c0_211 = arith.constant 0 : index
    %247 = vector.load %arg13[%c0_210, %c0_211] : memref<8x8xf32, #tpu.memory_space<vmem>>, vector<8x8xf32>
    tpu.vector_store %arg13[%c0_210, %c0_211], %239 {strides = array<i32>} : memref<8x8xf32, #tpu.memory_space<vmem>>, vector<8x8xf32>,
    %c0_212 = arith.constant 0 : index
    %c0_213 = arith.constant 0 : index
    %248 = vector.load %arg14[%c0_212, %c0_213] : memref<8x8xf32, #tpu.memory_space<vmem>>, vector<8x8xf32>
    tpu.vector_store %arg14[%c0_212, %c0_213], %246 {strides = array<i32>} : memref<8x8xf32, #tpu.memory_space<vmem>>, vector<8x8xf32>,
    %c0_214 = arith.constant 0 : index
    %c0_215 = arith.constant 0 : index
    %249 = vector.load %arg15[%c0_214, %c0_215] : memref<8x1xf32, #tpu.memory_space<vmem>>, vector<8x1xf32>
    tpu.vector_store %arg15[%c0_214, %c0_215], %232 {strides = array<i32>} : memref<8x1xf32, #tpu.memory_space<vmem>>, vector<8x1xf32>,
    %c3_i32 = arith.constant 3 : i32
    %250 = arith.cmpi eq, %arg0, %c3_i32 : i32
    %251 = arith.extui %250 : i1 to i32
    %c0_i32_216 = arith.constant 0 : i32
    %252 = arith.cmpi ne, %251, %c0_i32_216 : i32
    scf.if %252 {
      %c0_217 = arith.constant 0 : index
      %c0_218 = arith.constant 0 : index
      %c0_219 = arith.constant 0 : index
      %253 = vector.load %arg11[%c0_217, %c0_218, %c0_219] : memref<2x8x8xf32, #tpu.memory_space<vmem>>, vector<1x8x8xf32>
      %254 = vector.shape_cast %253 : vector<1x8x8xf32> to vector<8x8xf32>
      %255 = vector.shape_cast %239 : vector<8x8xf32> to vector<1x8x8xf32>
      tpu.vector_store %arg11[%c0_217, %c0_218, %c0_219], %255 {strides = array<i32>} : memref<2x8x8xf32, #tpu.memory_space<vmem>>, vector<1x8x8xf32>,
      %c1_220 = arith.constant 1 : index
      %c0_221 = arith.constant 0 : index
      %c0_222 = arith.constant 0 : index
      %256 = vector.load %arg11[%c1_220, %c0_221, %c0_222] : memref<2x8x8xf32, #tpu.memory_space<vmem>>, vector<1x8x8xf32>
      %257 = vector.shape_cast %256 : vector<1x8x8xf32> to vector<8x8xf32>
      %258 = vector.shape_cast %246 : vector<8x8xf32> to vector<1x8x8xf32>
      tpu.vector_store %arg11[%c1_220, %c0_221, %c0_222], %258 {strides = array<i32>} : memref<2x8x8xf32, #tpu.memory_space<vmem>>, vector<1x8x8xf32>,
      %c0_223 = arith.constant 0 : index
      %c0_224 = arith.constant 0 : index
      %259 = vector.load %arg12[%c0_223, %c0_224] : memref<8x1xf32, #tpu.memory_space<vmem>>, vector<8x1xf32>
      tpu.vector_store %arg12[%c0_223, %c0_224], %232 {strides = array<i32>} : memref<8x1xf32, #tpu.memory_space<vmem>>, vector<8x1xf32>,
    } else {
    }
    return
  }
  func.func @transform_0(%arg0: i32) -> (i32, i32, i32) {
    %c0_i32 = arith.constant 0 : i32
    %c0_i32_0 = arith.constant 0 : i32
    %c0_i32_1 = arith.constant 0 : i32
    %c0_i32_2 = arith.constant 0 : i32
    return %c0_i32, %c0_i32_0, %c0_i32_1 : i32, i32, i32
  }
  func.func @transform_1(%arg0: i32) -> (i32, i32, i32, i32) {
    %c0_i32 = arith.constant 0 : i32
    %c0_i32_0 = arith.constant 0 : i32
    %c0_i32_1 = arith.constant 0 : i32
    %c0_i32_2 = arith.constant 0 : i32
    return %arg0, %c0_i32, %c0_i32_0, %c0_i32_1 : i32, i32, i32, i32
  }
  func.func @transform_2(%arg0: i32) -> (i32, i32, i32, i32) {
    %c0_i32 = arith.constant 0 : i32
    %c0_i32_0 = arith.constant 0 : i32
    %c0_i32_1 = arith.constant 0 : i32
    %c0_i32_2 = arith.constant 0 : i32
    return %arg0, %c0_i32, %c0_i32_0, %c0_i32_1 : i32, i32, i32, i32
  }
  func.func @transform_3(%arg0: i32) -> (i32, i32, i32, i32) {
    %c0_i32 = arith.constant 0 : i32
    %c0_i32_0 = arith.constant 0 : i32
    %c0_i32_1 = arith.constant 0 : i32
    %c0_i32_2 = arith.constant 0 : i32
    return %arg0, %c0_i32, %c0_i32_0, %c0_i32_1 : i32, i32, i32, i32
  }
  func.func @transform_4(%arg0: i32) -> (i32, i32, i32, i32) {
    %c0_i32 = arith.constant 0 : i32
    %c0_i32_0 = arith.constant 0 : i32
    %c0_i32_1 = arith.constant 0 : i32
    %c0_i32_2 = arith.constant 0 : i32
    return %arg0, %c0_i32, %c0_i32_0, %c0_i32_1 : i32, i32, i32, i32
  }
  func.func @transform_5(%arg0: i32) -> (i32, i32, i32, i32) {
    %c0_i32 = arith.constant 0 : i32
    %c0_i32_0 = arith.constant 0 : i32
    %c0_i32_1 = arith.constant 0 : i32
    %c0_i32_2 = arith.constant 0 : i32
    return %arg0, %c0_i32, %c0_i32_0, %c0_i32_1 : i32, i32, i32, i32
  }
  func.func @transform_6(%arg0: i32) -> (i32, i32, i32, i32) {
    %c0_i32 = arith.constant 0 : i32
    %c0_i32_0 = arith.constant 0 : i32
    %c0_i32_1 = arith.constant 0 : i32
    %c0_i32_2 = arith.constant 0 : i32
    return %arg0, %c0_i32, %c0_i32_0, %c0_i32_1 : i32, i32, i32, i32
  }
  func.func @transform_7(%arg0: i32) -> (i32, i32, i32, i32) {
    %c0_i32 = arith.constant 0 : i32
    %c0_i32_0 = arith.constant 0 : i32
    %c0_i32_1 = arith.constant 0 : i32
    %c0_i32_2 = arith.constant 0 : i32
    return %arg0, %c0_i32, %c0_i32_0, %c0_i32_1 : i32, i32, i32, i32
  }
  func.func @transform_8(%arg0: i32) -> (i32, i32, i32, i32) {
    %c0_i32 = arith.constant 0 : i32
    %c0_i32_0 = arith.constant 0 : i32
    %c0_i32_1 = arith.constant 0 : i32
    %c0_i32_2 = arith.constant 0 : i32
    return %arg0, %c0_i32, %c0_i32_0, %c0_i32_1 : i32, i32, i32, i32
  }
  func.func @transform_9(%arg0: i32) -> (i32, i32, i32, i32) {
    %c0_i32 = arith.constant 0 : i32
    %c0_i32_0 = arith.constant 0 : i32
    %c0_i32_1 = arith.constant 0 : i32
    %c0_i32_2 = arith.constant 0 : i32
    return %arg0, %c0_i32, %c0_i32_0, %c0_i32_1 : i32, i32, i32, i32
  }
  func.func @transform_10(%arg0: i32) -> (i32, i32, i32) {
    %c0_i32 = arith.constant 0 : i32
    %c0_i32_0 = arith.constant 0 : i32
    %c0_i32_1 = arith.constant 0 : i32
    %c0_i32_2 = arith.constant 0 : i32
    return %c0_i32, %c0_i32_0, %c0_i32_1 : i32, i32, i32
  }
  func.func @transform_11(%arg0: i32) -> (i32, i32) {
    %c0_i32 = arith.constant 0 : i32
    %c0_i32_0 = arith.constant 0 : i32
    %c0_i32_1 = arith.constant 0 : i32
    return %c0_i32, %c0_i32_0 : i32, i32
  }
}

</mosaic_0001>

<llo_original>
// kernel: tpu_custom_call.1
$region0: #{tpu_custom_call.1}
  #allocation0 [shape = 'u32[]', space=smem, size = 0x4, offset = 0x4, fixed_abs, tag = 'smem constant byte address 0x4 - core index']
  #allocation1 [shape = 'u32[144,128]{1,0:T(1,128)}', space=vmem, size = 0x12000, scoped, tag = 'internal scratch']
  #allocation2 [shape = 'f32[8,8]{1,0:T(8,128)}', space=vmem, size = 0x1000, scoped, tag = 'scratch operand']
  #allocation3 [shape = 'f32[8,8]{1,0:T(8,128)}', space=vmem, size = 0x1000, scoped, tag = 'scratch operand']
  #allocation4 [shape = 'f32[8,1]{1,0:T(8,128)}', space=vmem, size = 0x1000, scoped, tag = 'scratch operand']
  %s0 = inlined_call_operand.vmem [shape: f32[2,8,8], index: 0, kind: input, shape index: {}]
  %s1 = inlined_call_operand.vmem [shape: f32[4,2,1,8], index: 1, kind: input, shape index: {}]
  %s2 = inlined_call_operand.vmem [shape: f32[4,2,1,8], index: 2, kind: input, shape index: {}]
  %s3 = inlined_call_operand.vmem [shape: f32[4,4,8,32], index: 3, kind: input, shape index: {}]
  %s4 = inlined_call_operand.vmem [shape: f32[4,4,1,32], index: 4, kind: input, shape index: {}]
  %s5 = inlined_call_operand.hbm [shape: f32[4,8,32,32], index: 5, kind: input, shape index: {}]
  %s6 = inlined_call_operand.vmem [shape: f32[4,8,1,32], index: 6, kind: input, shape index: {}]
  %s7 = inlined_call_operand.vmem [shape: f32[4,4,32,8], index: 7, kind: input, shape index: {}]
  %s8 = inlined_call_operand.vmem [shape: f32[4,4,1,8], index: 8, kind: input, shape index: {}]
  %s9 = inlined_call_operand.vmem [shape: f32[4,4,8,8], index: 9, kind: input, shape index: {}]
  %s10 = inlined_call_operand.hbm [shape: f32[2,8,8], index: 10, kind: output, shape index: {0}]
  %s11 = inlined_call_operand.vmem [shape: f32[8,1], index: 11, kind: output, shape index: {1}]
  %12 = xla_tuple %s10, %s11
  %s13 = sld [smem:[#allocation0]]
  $region93: #{tpu_custom_call.1} parent=0
    _
  %s15 = ssub.s32 1, %s13
  %s16 = scalar_select 0, %s15, %s13
  $region1: #{tpu_custom_call.1} parent=0
    #allocation5 [shape = 'u8[262144]{0}', space=vmem, size = 0x40000, scoped, tag = 'input window, operand 5']
    #allocation6 [shape = 's32[2]{0}', space=sflag, size = 0x8, scoped, tag = 'scoped memory for tpu_custom_call.1']
    #allocation7 [shape = 's32[2]{0}', space=sflag, size = 0x8, scoped, tag = 'scoped memory for tpu_custom_call.1']
    #allocation8 [shape = 'u8[8192]{0}', space=vmem, size = 0x2000, scoped, tag = 'output window, operand 0, single buffered']
    %17 = vsyncpa [#allocation6], 0
    %s18 = scalar_lea.sflag [#allocation6], 1
    %19 = vsyncpa %s18, 0
    %20 = vsyncpa [#allocation7], 0
    loop: start=0, step=1, limit=6
    $region2: #{tpu_custom_call.1} parent=1 // loop_pre_header
      _
    $region3: #{tpu_custom_call.1} parent=1 // loop_header
      %s22 = sphi 0, %s26
      %p23 = scmp.ge.s32.totalorder %s22, 6
      %s30 = sphi 0, %s30
      %s32 = sphi 0, %s30
      %s33 = sphi 0, %s32
      %s47 = sphi 0, %s33
      %s53 = sphi 0, %s55
      %s56 = sphi 0, %s53
      %s57 = sphi 0, %s56
      %s73 = sphi 0, %s57
      %s79 = sphi 0, %s81
      %s82 = sphi 0, %s79
      %s83 = sphi 0, %s82
      %s99 = sphi 0, %s83
      %s105 = sphi 0, %s107
      %s108 = sphi 0, %s105
      %s109 = sphi 0, %s108
      %s125 = sphi 0, %s109
      %s131 = sphi 0, %s133
      %s134 = sphi 0, %s131
      %s135 = sphi 0, %s134
      %s151 = sphi 0, %s135
      %s157 = sphi 0, %s159
      %s160 = sphi 0, %s157
      %s161 = sphi 0, %s160
      %s177 = sphi 0, %s161
      %s183 = sphi 0, %s185
      %s186 = sphi 0, %s183
      %s187 = sphi 0, %s186
      %s203 = sphi 0, %s187
      %s209 = sphi 0, %s211
      %s212 = sphi 0, %s209
      %s213 = sphi 0, %s212
      %s229 = sphi 0, %s213
      %s235 = sphi 0, %s237
      %s238 = sphi 0, %s235
      %s239 = sphi 0, %s238
      %s255 = sphi 0, %s239
      %s261 = sphi 0, %s263
      %s264 = sphi 0, %s261
      %s265 = sphi 0, %s264
      %s281 = sphi 0, %s265
      %s285 = sphi 0, %s285
      %s287 = sphi 0, %s285
      %s288 = sphi 0, %s287
      %s302 = sphi 0, %s288
      %s306 = sphi 0, %s306
      %s308 = sphi 0, %s306
      %s309 = sphi 0, %s308
      %s323 = sphi 0, %s309
    $region4: #{tpu_custom_call.1} parent=1 // loop_header_branch
      %25 = sbr.rel (%p23) target = $region8
    $region5: #{tpu_custom_call.1} parent=1 // loop_body
      %s27 = ssub.s32 %s22, 1
      %s28 = ssub.s32 %s22, 2
      %s29 = sadd.s32 %s22, 1
      %s31 = sadd.s32 %s30, 1
      %p34 = scmp.eq.s32.totalorder %s22, 3
      %p35 = scmp.ne.s32.totalorder %s30, %s32
      %p36 = scmp.eq.s32.totalorder %s22, 0
      %p37 = por %p35, %p36
      %p38 = scmp.ne.s32.totalorder %s30, %s32
      %p39 = scmp.eq.s32.totalorder %s27, 3
      %p40 = por %p38, %p39
      %p41 = scmp.ne.s32.totalorder %s32, %s33
      %p42 = scmp.eq.s32.totalorder %s27, 0
      %p43 = por %p41, %p42
      %p44 = scmp.ne.s32.totalorder %s32, %s33
      %p45 = scmp.eq.s32.totalorder %s28, 3
      %p46 = por %p44, %p45
      %p48 = scmp.ne.s32.totalorder %s33, %s47
      %p49 = scmp.eq.s32.totalorder %s28, 0
      %p50 = por %p48, %p49
      %s51 = ssub.s32 %s22, %s29
      %p52 = scmp.eq.s32.totalorder %s51, 0
      %s54 = sadd.s32 %s53, 1
      %s55 = scalar_select %p52, %s53, %s54
      %p58 = pneg %p52
      %p59 = scmp.eq.s32.totalorder %s22, 3
      %p60 = por %p58, %p59
      %p61 = scmp.ne.s32.totalorder %s53, %s56
      %p62 = scmp.eq.s32.totalorder %s22, 0
      %p63 = por %p61, %p62
      %p64 = scmp.ne.s32.totalorder %s53, %s56
      %p65 = scmp.eq.s32.totalorder %s27, 3
      %p66 = por %p64, %p65
      %p67 = scmp.ne.s32.totalorder %s56, %s57
      %p68 = scmp.eq.s32.totalorder %s27, 0
      %p69 = por %p67, %p68
      %p70 = scmp.ne.s32.totalorder %s56, %s57
      %p71 = scmp.eq.s32.totalorder %s28, 3
      %p72 = por %p70, %p71
      %p74 = scmp.ne.s32.totalorder %s57, %s73
      %p75 = scmp.eq.s32.totalorder %s28, 0
      %p76 = por %p74, %p75
      %s77 = ssub.s32 %s22, %s29
      %p78 = scmp.eq.s32.totalorder %s77, 0
      %s80 = sadd.s32 %s79, 1
      %s81 = scalar_select %p78, %s79, %s80
      %p84 = pneg %p78
      %p85 = scmp.eq.s32.totalorder %s22, 3
      %p86 = por %p84, %p85
      %p87 = scmp.ne.s32.totalorder %s79, %s82
      %p88 = scmp.eq.s32.totalorder %s22, 0
      %p89 = por %p87, %p88
      %p90 = scmp.ne.s32.totalorder %s79, %s82
      %p91 = scmp.eq.s32.totalorder %s27, 3
      %p92 = por %p90, %p91
      %p93 = scmp.ne.s32.totalorder %s82, %s83
      %p94 = scmp.eq.s32.totalorder %s27, 0
      %p95 = por %p93, %p94
      %p96 = scmp.ne.s32.totalorder %s82, %s83
      %p97 = scmp.eq.s32.totalorder %s28, 3
      %p98 = por %p96, %p97
      %p100 = scmp.ne.s32.totalorder %s83, %s99
      %p101 = scmp.eq.s32.totalorder %s28, 0
      %p102 = por %p100, %p101
      %s103 = ssub.s32 %s22, %s29
      %p104 = scmp.eq.s32.totalorder %s103, 0
      %s106 = sadd.s32 %s105, 1
      %s107 = scalar_select %p104, %s105, %s106
      %p110 = pneg %p104
      %p111 = scmp.eq.s32.totalorder %s22, 3
      %p112 = por %p110, %p111
      %p113 = scmp.ne.s32.totalorder %s105, %s108
      %p114 = scmp.eq.s32.totalorder %s22, 0
      %p115 = por %p113, %p114
      %p116 = scmp.ne.s32.totalorder %s105, %s108
      %p117 = scmp.eq.s32.totalorder %s27, 3
      %p118 = por %p116, %p117
      %p119 = scmp.ne.s32.totalorder %s108, %s109
      %p120 = scmp.eq.s32.totalorder %s27, 0
      %p121 = por %p119, %p120
      %p122 = scmp.ne.s32.totalorder %s108, %s109
      %p123 = scmp.eq.s32.totalorder %s28, 3
      %p124 = por %p122, %p123
      %p126 = scmp.ne.s32.totalorder %s109, %s125
      %p127 = scmp.eq.s32.totalorder %s28, 0
      %p128 = por %p126, %p127
      %s129 = ssub.s32 %s22, %s29
      %p130 = scmp.eq.s32.totalorder %s129, 0
      %s132 = sadd.s32 %s131, 1
      %s133 = scalar_select %p130, %s131, %s132
      %p136 = pneg %p130
      %p137 = scmp.eq.s32.totalorder %s22, 3
      %p138 = por %p136, %p137
      %p139 = scmp.ne.s32.totalorder %s131, %s134
      %p140 = scmp.eq.s32.totalorder %s22, 0
      %p141 = por %p139, %p140
      %p142 = scmp.ne.s32.totalorder %s131, %s134
      %p143 = scmp.eq.s32.totalorder %s27, 3
      %p144 = por %p142, %p143
      %p145 = scmp.ne.s32.totalorder %s134, %s135
      %p146 = scmp.eq.s32.totalorder %s27, 0
      %p147 = por %p145, %p146
      %p148 = scmp.ne.s32.totalorder %s134, %s135
      %p149 = scmp.eq.s32.totalorder %s28, 3
      %p150 = por %p148, %p149
      %p152 = scmp.ne.s32.totalorder %s135, %s151
      %p153 = scmp.eq.s32.totalorder %s28, 0
      %p154 = por %p152, %p153
      %s155 = ssub.s32 %s22, %s29
      %p156 = scmp.eq.s32.totalorder %s155, 0
      %s158 = sadd.s32 %s157, 1
      %s159 = scalar_select %p156, %s157, %s158
      %p162 = pneg %p156
      %p163 = scmp.eq.s32.totalorder %s22, 3
      %p164 = por %p162, %p163
      %p165 = scmp.ne.s32.totalorder %s157, %s160
      %p166 = scmp.eq.s32.totalorder %s22, 0
      %p167 = por %p165, %p166
      %p168 = scmp.ne.s32.totalorder %s157, %s160
      %p169 = scmp.eq.s32.totalorder %s27, 3
      %p170 = por %p168, %p169
      %p171 = scmp.ne.s32.totalorder %s160, %s161
      %p172 = scmp.eq.s32.totalorder %s27, 0
      %p173 = por %p171, %p172
      %p174 = scmp.ne.s32.totalorder %s160, %s161
      %p175 = scmp.eq.s32.totalorder %s28, 3
      %p176 = por %p174, %p175
      %p178 = scmp.ne.s32.totalorder %s161, %s177
      %p179 = scmp.eq.s32.totalorder %s28, 0
      %p180 = por %p178, %p179
      %s181 = ssub.s32 %s22, %s29
      %p182 = scmp.eq.s32.totalorder %s181, 0
      %s184 = sadd.s32 %s183, 1
      %s185 = scalar_select %p182, %s183, %s184
      %p188 = pneg %p182
      %p189 = scmp.eq.s32.totalorder %s22, 3
      %p190 = por %p188, %p189
      %p191 = scmp.ne.s32.totalorder %s183, %s186
      %p192 = scmp.eq.s32.totalorder %s22, 0
      %p193 = por %p191, %p192
      %p194 = scmp.ne.s32.totalorder %s183, %s186
      %p195 = scmp.eq.s32.totalorder %s27, 3
      %p196 = por %p194, %p195
      %p197 = scmp.ne.s32.totalorder %s186, %s187
      %p198 = scmp.eq.s32.totalorder %s27, 0
      %p199 = por %p197, %p198
      %p200 = scmp.ne.s32.totalorder %s186, %s187
      %p201 = scmp.eq.s32.totalorder %s28, 3
      %p202 = por %p200, %p201
      %p204 = scmp.ne.s32.totalorder %s187, %s203
      %p205 = scmp.eq.s32.totalorder %s28, 0
      %p206 = por %p204, %p205
      %s207 = ssub.s32 %s22, %s29
      %p208 = scmp.eq.s32.totalorder %s207, 0
      %s210 = sadd.s32 %s209, 1
      %s211 = scalar_select %p208, %s209, %s210
      %p214 = pneg %p208
      %p215 = scmp.eq.s32.totalorder %s22, 3
      %p216 = por %p214, %p215
      %p217 = scmp.ne.s32.totalorder %s209, %s212
      %p218 = scmp.eq.s32.totalorder %s22, 0
      %p219 = por %p217, %p218
      %p220 = scmp.ne.s32.totalorder %s209, %s212
      %p221 = scmp.eq.s32.totalorder %s27, 3
      %p222 = por %p220, %p221
      %p223 = scmp.ne.s32.totalorder %s212, %s213
      %p224 = scmp.eq.s32.totalorder %s27, 0
      %p225 = por %p223, %p224
      %p226 = scmp.ne.s32.totalorder %s212, %s213
      %p227 = scmp.eq.s32.totalorder %s28, 3
      %p228 = por %p226, %p227
      %p230 = scmp.ne.s32.totalorder %s213, %s229
      %p231 = scmp.eq.s32.totalorder %s28, 0
      %p232 = por %p230, %p231
      %s233 = ssub.s32 %s22, %s29
      %p234 = scmp.eq.s32.totalorder %s233, 0
      %s236 = sadd.s32 %s235, 1
      %s237 = scalar_select %p234, %s235, %s236
      %p240 = pneg %p234
      %p241 = scmp.eq.s32.totalorder %s22, 3
      %p242 = por %p240, %p241
      %p243 = scmp.ne.s32.totalorder %s235, %s238
      %p244 = scmp.eq.s32.totalorder %s22, 0
      %p245 = por %p243, %p244
      %p246 = scmp.ne.s32.totalorder %s235, %s238
      %p247 = scmp.eq.s32.totalorder %s27, 3
      %p248 = por %p246, %p247
      %p249 = scmp.ne.s32.totalorder %s238, %s239
      %p250 = scmp.eq.s32.totalorder %s27, 0
      %p251 = por %p249, %p250
      %p252 = scmp.ne.s32.totalorder %s238, %s239
      %p253 = scmp.eq.s32.totalorder %s28, 3
      %p254 = por %p252, %p253
      %p256 = scmp.ne.s32.totalorder %s239, %s255
      %p257 = scmp.eq.s32.totalorder %s28, 0
      %p258 = por %p256, %p257
      %s259 = ssub.s32 %s22, %s29
      %p260 = scmp.eq.s32.totalorder %s259, 0
      %s262 = sadd.s32 %s261, 1
      %s263 = scalar_select %p260, %s261, %s262
      %p266 = pneg %p260
      %p267 = scmp.eq.s32.totalorder %s22, 3
      %p268 = por %p266, %p267
      %p269 = scmp.ne.s32.totalorder %s261, %s264
      %p270 = scmp.eq.s32.totalorder %s22, 0
      %p271 = por %p269, %p270
      %p272 = scmp.ne.s32.totalorder %s261, %s264
      %p273 = scmp.eq.s32.totalorder %s27, 3
      %p274 = por %p272, %p273
      %p275 = scmp.ne.s32.totalorder %s264, %s265
      %p276 = scmp.eq.s32.totalorder %s27, 0
      %p277 = por %p275, %p276
      %p278 = scmp.ne.s32.totalorder %s264, %s265
      %p279 = scmp.eq.s32.totalorder %s28, 3
      %p280 = por %p278, %p279
      %p282 = scmp.ne.s32.totalorder %s265, %s281
      %p283 = scmp.eq.s32.totalorder %s28, 0
      %p284 = por %p282, %p283
      %s286 = sadd.s32 %s285, 1
      %p289 = scmp.eq.s32.totalorder %s22, 3
      %p290 = scmp.ne.s32.totalorder %s285, %s287
      %p291 = scmp.eq.s32.totalorder %s22, 0
      %p292 = por %p290, %p291
      %p293 = scmp.ne.s32.totalorder %s285, %s287
      %p294 = scmp.eq.s32.totalorder %s27, 3
      %p295 = por %p293, %p294
      %p296 = scmp.ne.s32.totalorder %s287, %s288
      %p297 = scmp.eq.s32.totalorder %s27, 0
      %p298 = por %p296, %p297
      %p299 = scmp.ne.s32.totalorder %s287, %s288
      %p300 = scmp.eq.s32.totalorder %s28, 3
      %p301 = por %p299, %p300
      %p303 = scmp.ne.s32.totalorder %s288, %s302
      %p304 = scmp.eq.s32.totalorder %s28, 0
      %p305 = por %p303, %p304
      %s307 = sadd.s32 %s306, 1
      %p310 = scmp.eq.s32.totalorder %s22, 3
      %p311 = scmp.ne.s32.totalorder %s306, %s308
      %p312 = scmp.eq.s32.totalorder %s22, 0
      %p313 = por %p311, %p312
      %p314 = scmp.ne.s32.totalorder %s306, %s308
      %p315 = scmp.eq.s32.totalorder %s27, 3
      %p316 = por %p314, %p315
      %p317 = scmp.ne.s32.totalorder %s308, %s309
      %p318 = scmp.eq.s32.totalorder %s27, 0
      %p319 = por %p317, %p318
      %p320 = scmp.ne.s32.totalorder %s308, %s309
      %p321 = scmp.eq.s32.totalorder %s28, 3
      %p322 = por %p320, %p321
      %p324 = scmp.ne.s32.totalorder %s309, %s323
      %p325 = scmp.eq.s32.totalorder %s28, 0
      %p326 = por %p324, %p325
      %p327 = scmp.le.s32.totalorder 1, %s22
      %p328 = scmp.lt.s32.totalorder %s22, 5
      %p329 = pnand %p327, %p328
      %p330 = pneg %p329
      // Predicated region
      $region9: #{tpu_custom_call.1} parent=5 // pred_check
        _
      $region10: #{tpu_custom_call.1} parent=5 // pred_check_branch
        %332 = sbr.rel (%p329) target = $region12
      $region11: #{tpu_custom_call.1} parent=5 // pred_region
        %s333 = ssub.s32 %s22, 1
        // Predicated region
        $region13: #{tpu_custom_call.1} parent=11 // pred_check
          %p334 = pneg %p43
        $region14: #{tpu_custom_call.1} parent=11 // pred_check_branch
          %336 = sbr.rel (%p334) target = $region16
        $region15: #{tpu_custom_call.1} parent=11 // pred_region
          _
        $region16: #{tpu_custom_call.1} parent=11 // pred_fallthru
          _
      $region12: #{tpu_custom_call.1} parent=5 // pred_fallthru
        _
      %p337 = scmp.lt.s32.totalorder %s22, 4
      // Predicated region
      $region17: #{tpu_custom_call.1} parent=5 // pred_check
        %p338 = pneg %p337
      $region18: #{tpu_custom_call.1} parent=5 // pred_check_branch
        %340 = sbr.rel (%p338) target = $region20
      $region19: #{tpu_custom_call.1} parent=5 // pred_region
        // Predicated region
        $region21: #{tpu_custom_call.1} parent=19 // pred_check
          %p341 = pneg %p63
        $region22: #{tpu_custom_call.1} parent=19 // pred_check_branch
          %343 = sbr.rel (%p341) target = $region24
        $region23: #{tpu_custom_call.1} parent=19 // pred_region
          %p344 = scmp.lt.s32.totalorder %s22, 3
          %s345 = scalar_select %p344, %s22, 3
          %s346 = smul.addr %s345, 2
          %s347 = scalar_lea.vmem %s1, %s346
        $region24: #{tpu_custom_call.1} parent=19 // pred_fallthru
          _
        // Predicated region
        $region25: #{tpu_custom_call.1} parent=19 // pred_check
          %p348 = pneg %p89
        $region26: #{tpu_custom_call.1} parent=19 // pred_check_branch
          %350 = sbr.rel (%p348) target = $region28
        $region27: #{tpu_custom_call.1} parent=19 // pred_region
          %p351 = scmp.lt.s32.totalorder %s22, 3
          %s352 = scalar_select %p351, %s22, 3
          %s353 = smul.addr %s352, 2
          %s354 = scalar_lea.vmem %s2, %s353
        $region28: #{tpu_custom_call.1} parent=19 // pred_fallthru
          _
        // Predicated region
        $region29: #{tpu_custom_call.1} parent=19 // pred_check
          %p355 = pneg %p115
        $region30: #{tpu_custom_call.1} parent=19 // pred_check_branch
          %357 = sbr.rel (%p355) target = $region32
        $region31: #{tpu_custom_call.1} parent=19 // pred_region
          %p358 = scmp.lt.s32.totalorder %s22, 3
          %s359 = scalar_select %p358, %s22, 3
          %s360 = smul.addr %s359, 4
          %s361 = smul.addr %s360, 8
          %s362 = scalar_lea.vmem %s3, %s361
        $region32: #{tpu_custom_call.1} parent=19 // pred_fallthru
          _
        // Predicated region
        $region33: #{tpu_custom_call.1} parent=19 // pred_check
          %p363 = pneg %p141
        $region34: #{tpu_custom_call.1} parent=19 // pred_check_branch
          %365 = sbr.rel (%p363) target = $region36
        $region35: #{tpu_custom_call.1} parent=19 // pred_region
          %p366 = scmp.lt.s32.totalorder %s22, 3
          %s367 = scalar_select %p366, %s22, 3
          %s368 = smul.addr %s367, 4
          %s369 = scalar_lea.vmem %s4, %s368
        $region36: #{tpu_custom_call.1} parent=19 // pred_fallthru
          _
        // Predicated region
        $region37: #{tpu_custom_call.1} parent=19 // pred_check
          %p370 = pneg %p167
        $region38: #{tpu_custom_call.1} parent=19 // pred_check_branch
          %372 = sbr.rel (%p370) target = $region40
        $region39: #{tpu_custom_call.1} parent=19 // pred_region
          %s373 = sand.u32 %s157, 1
          %s374 = scalar_lea.sflag [#allocation6], %s373
          %s375 = sand.u32 %s157, 1
          %s376 = smul.addr %s375, 256
          %s377 = scalar_lea.vmem [#allocation5], %s376
          %s379 = ssub.s32 4096, 4096
          %380 = vsyncadd %s374, %s379
          %s381 = smul.addr %s22, 32
          %s382 = smul.addr %s381, 128
          %s383 = scalar_lea.hbm %s5, %s382
          %s384 = sshll.u32 %s377, 4
          %s385 = int_to_ptr.vmem [resolvable:$true] %s384
          %390 = dma.hbm_to_vmem [thread:$0]  %s383, 4096, %s385, %s374, 128, 128, 8
        $region40: #{tpu_custom_call.1} parent=19 // pred_fallthru
          _
        // Predicated region
        $region41: #{tpu_custom_call.1} parent=19 // pred_check
          %p391 = pneg %p193
        $region42: #{tpu_custom_call.1} parent=19 // pred_check_branch
          %393 = sbr.rel (%p391) target = $region44
        $region43: #{tpu_custom_call.1} parent=19 // pred_region
          %p394 = scmp.lt.s32.totalorder %s22, 3
          %s395 = scalar_select %p394, %s22, 3
          %s396 = smul.addr %s395, 8
          %s397 = scalar_lea.vmem %s6, %s396
        $region44: #{tpu_custom_call.1} parent=19 // pred_fallthru
          _
        // Predicated region
        $region45: #{tpu_custom_call.1} parent=19 // pred_check
          %p398 = pneg %p219
        $region46: #{tpu_custom_call.1} parent=19 // pred_check_branch
          %400 = sbr.rel (%p398) target = $region48
        $region47: #{tpu_custom_call.1} parent=19 // pred_region
          %p401 = scmp.lt.s32.totalorder %s22, 3
          %s402 = scalar_select %p401, %s22, 3
          %s403 = smul.addr %s402, 16
          %s404 = smul.addr %s403, 8
          %s405 = scalar_lea.vmem %s7, %s404
        $region48: #{tpu_custom_call.1} parent=19 // pred_fallthru
          _
        // Predicated region
        $region49: #{tpu_custom_call.1} parent=19 // pred_check
          %p406 = pneg %p245
        $region50: #{tpu_custom_call.1} parent=19 // pred_check_branch
          %408 = sbr.rel (%p406) target = $region52
        $region51: #{tpu_custom_call.1} parent=19 // pred_region
          %p409 = scmp.lt.s32.totalorder %s22, 3
          %s410 = scalar_select %p409, %s22, 3
          %s411 = smul.addr %s410, 4
          %s412 = scalar_lea.vmem %s8, %s411
        $region52: #{tpu_custom_call.1} parent=19 // pred_fallthru
          _
        // Predicated region
        $region53: #{tpu_custom_call.1} parent=19 // pred_check
          %p413 = pneg %p271
        $region54: #{tpu_custom_call.1} parent=19 // pred_check_branch
          %415 = sbr.rel (%p413) target = $region56
        $region55: #{tpu_custom_call.1} parent=19 // pred_region
          %p416 = scmp.lt.s32.totalorder %s22, 3
          %s417 = scalar_select %p416, %s22, 3
          %s418 = smul.addr %s417, 4
          %s419 = smul.addr %s418, 8
          %s420 = scalar_lea.vmem %s9, %s419
        $region56: #{tpu_custom_call.1} parent=19 // pred_fallthru
          _
      $region20: #{tpu_custom_call.1} parent=5 // pred_fallthru
        _
      %p421 = scmp.le.s32.totalorder 1, %s22
      %p422 = scmp.lt.s32.totalorder %s22, 5
      %p423 = pnand %p421, %p422
      %p424 = pneg %p423
      // Predicated region
      $region57: #{tpu_custom_call.1} parent=5 // pred_check
        _
      $region58: #{tpu_custom_call.1} parent=5 // pred_check_branch
        %426 = sbr.rel (%p423) target = $region60
      $region59: #{tpu_custom_call.1} parent=5 // pred_region
        %s427 = ssub.s32 %s22, 1
        %s428 = sand.u32 %s160, 1
        %s429 = scalar_lea.sflag [#allocation6], %s428
        %s430 = sand.u32 %s160, 1
        %s431 = smul.addr %s430, 256
        %s432 = scalar_lea.vmem [#allocation5], %s431
        // Predicated region
        $region61: #{tpu_custom_call.1} parent=59 // pred_check
          %p433 = pneg %p173
        $region62: #{tpu_custom_call.1} parent=59 // pred_check_branch
          %435 = sbr.rel (%p433) target = $region64
        $region63: #{tpu_custom_call.1} parent=59 // pred_region
          %436 = dma.done %s429, 4096
        $region64: #{tpu_custom_call.1} parent=59 // pred_fallthru
          _
        %p437 = pneg %p43
        %p438 = pneg %p40
        %p439 = scmp.lt.s32.totalorder %s27, 3
        %s440 = scalar_select %p439, %s27, 3
        %s441 = smul.addr %s440, 2
        %s442 = scalar_lea.vmem %s1, %s441
        %p443 = pneg %p69
        %p444 = pneg %p66
        %p445 = scmp.lt.s32.totalorder %s27, 3
        %s446 = scalar_select %p445, %s27, 3
        %s447 = smul.addr %s446, 2
        %s448 = scalar_lea.vmem %s2, %s447
        %p449 = pneg %p95
        %p450 = pneg %p92
        %p451 = scmp.lt.s32.totalorder %s27, 3
        %s452 = scalar_select %p451, %s27, 3
        %s453 = smul.addr %s452, 4
        %s454 = smul.addr %s453, 8
        %s455 = scalar_lea.vmem %s3, %s454
        %p456 = pneg %p121
        %p457 = pneg %p118
        %p458 = scmp.lt.s32.totalorder %s27, 3
        %s459 = scalar_select %p458, %s27, 3
        %s460 = smul.addr %s459, 4
        %s461 = scalar_lea.vmem %s4, %s460
        %p462 = pneg %p147
        %p463 = pneg %p144
        %s464 = sand.u32 %s160, 1
        %s465 = scalar_lea.sflag [#allocation6], %s464
        %s466 = sand.u32 %s160, 1
        %s467 = smul.addr %s466, 256
        %s468 = scalar_lea.vmem [#allocation5], %s467
        %p469 = pneg %p173
        %p470 = pneg %p170
        %p471 = scmp.lt.s32.totalorder %s27, 3
        %s472 = scalar_select %p471, %s27, 3
        %s473 = smul.addr %s472, 8
        %s474 = scalar_lea.vmem %s6, %s473
        %p475 = pneg %p199
        %p476 = pneg %p196
        %p477 = scmp.lt.s32.totalorder %s27, 3
        %s478 = scalar_select %p477, %s27, 3
        %s479 = smul.addr %s478, 16
        %s480 = smul.addr %s479, 8
        %s481 = scalar_lea.vmem %s7, %s480
        %p482 = pneg %p225
        %p483 = pneg %p222
        %p484 = scmp.lt.s32.totalorder %s27, 3
        %s485 = scalar_select %p484, %s27, 3
        %s486 = smul.addr %s485, 4
        %s487 = scalar_lea.vmem %s8, %s486
        %p488 = pneg %p251
        %p489 = pneg %p248
        %p490 = scmp.lt.s32.totalorder %s27, 3
        %s491 = scalar_select %p490, %s27, 3
        %s492 = smul.addr %s491, 4
        %s493 = smul.addr %s492, 8
        %s494 = scalar_lea.vmem %s9, %s493
        %p495 = pneg %p277
        %p496 = pneg %p274
        %p497 = pneg %p298
        %p498 = pneg %p295
        %p499 = pneg %p319
        %p500 = pneg %p316
        %p501 = scmp.lt.s32.totalorder %s27, 3
        %s502 = scalar_select %p501, %s27, 3
        %s503 = smul.addr %s502, 2
        %s504 = scalar_lea.vmem %s1, %s503
        %p505 = scmp.lt.s32.totalorder %s27, 3
        %s506 = scalar_select %p505, %s27, 3
        %s507 = smul.addr %s506, 2
        %s508 = scalar_lea.vmem %s2, %s507
        %p509 = scmp.lt.s32.totalorder %s27, 3
        %s510 = scalar_select %p509, %s27, 3
        %s511 = smul.addr %s510, 4
        %s512 = smul.addr %s511, 8
        %s513 = scalar_lea.vmem %s3, %s512
        %p514 = scmp.lt.s32.totalorder %s27, 3
        %s515 = scalar_select %p514, %s27, 3
        %s516 = smul.addr %s515, 4
        %s517 = scalar_lea.vmem %s4, %s516
        %p518 = scmp.lt.s32.totalorder %s27, 3
        %s519 = scalar_select %p518, %s27, 3
        %s520 = smul.addr %s519, 8
        %s521 = scalar_lea.vmem %s6, %s520
        %p522 = scmp.lt.s32.totalorder %s27, 3
        %s523 = scalar_select %p522, %s27, 3
        %s524 = smul.addr %s523, 16
        %s525 = smul.addr %s524, 8
        %s526 = scalar_lea.vmem %s7, %s525
        %p527 = scmp.lt.s32.totalorder %s27, 3
        %s528 = scalar_select %p527, %s27, 3
        %s529 = smul.addr %s528, 4
        %s530 = scalar_lea.vmem %s8, %s529
        %p531 = scmp.lt.s32.totalorder %s27, 3
        %s532 = scalar_select %p531, %s27, 3
        %s533 = smul.addr %s532, 4
        %s534 = smul.addr %s533, 8
        %s535 = scalar_lea.vmem %s9, %s534
        %p536 = scmp.eq.s32.totalorder %s27, 0
        // Predicated region
        $region65: #{tpu_custom_call.1} parent=59 // pred_check
          %p537 = pneg %p536
        $region66: #{tpu_custom_call.1} parent=59 // pred_check_branch
          %539 = sbr.rel (%p537) target = $region68
        $region67: #{tpu_custom_call.1} parent=59 // pred_region
          %v540 = vld [vmem:[%s0] sm:$0xff]
          %vm541 = vcmask 64512
          %542 = vst.msk [vmem:[#allocation2] sm:$0xff] %vm541, %v540
          %s543 = scalar_lea.vmem %s0, 8
          %v544 = vld [vmem:[%s543] sm:$0xff]
          %545 = vst.msk [vmem:[#allocation3] sm:$0xff] %vm541, %v544
          %vm546 = vcmask 7168
          %547 = vst.msk [vmem:[#allocation4] sm:$0xff] %vm546, 0.0
        $region68: #{tpu_custom_call.1} parent=59 // pred_fallthru
          _
        %v548 = vld [vmem:[#allocation2] sm:$0xff]
        %v549 = vld [vmem:[#allocation3] sm:$0xff]
        %v550 = vld [vmem:[#allocation4] sm:$0xff]
        %v551 = vld [vmem:[%s504] sm:$0x1]
        %s552 = scalar_lea.vmem %s504, 1
        %v553 = vld [vmem:[%s552] sm:$0x1]
        %v554 = vld [vmem:[%s508] sm:$0x1]
        %s555 = scalar_lea.vmem %s508, 1
        %v556 = vld [vmem:[%s555] sm:$0x1]
        %v558 = vlaneseq
        %v559 = vshrl.u32 %v558, 7
        %v560 = vsub.s32 0, %v559
        %v561 = vrot.slane %v551, %v560
        %v563 = vadd.f32 %v548, %v561
        %v565 = vlaneseq
        %v566 = vshrl.u32 %v565, 7
        %v567 = vsub.s32 0, %v566
        %v568 = vrot.slane %v554, %v567
        %v570 = vmul.f32 %v568, %v563
        %v572 = vlaneseq
        %v573 = vshrl.u32 %v572, 7
        %v574 = vsub.s32 0, %v573
        %v575 = vrot.slane %v553, %v574
        %v577 = vadd.f32 %v549, %v575
        %v579 = vlaneseq
        %v580 = vshrl.u32 %v579, 7
        %v581 = vsub.s32 0, %v580
        %v582 = vrot.slane %v556, %v581
        %v584 = vmul.f32 %v582, %v577
        %v585 = vand.u32 2147483647, %v554
        %v586 = vlog2.pop %v585
        %v587 = vmul.f32 %v586, 0.6931472
        %vm588 = vcmask 57344
        %v589 = vsel %vm588, %v587, 0.0
        %590 = vadd.xlane.f32.xlu0 %v589
        %v591 = vpop.xlane.xlu0 %590
        %v592 = vrot.slane %v591, 4
        %v593 = vadd.f32 %v591, %v592
        %v594 = vrot.slane %v593, 2
        %v595 = vadd.f32 %v593, %v594
        %v596 = vrot.slane %v595, 1
        %v597 = vadd.f32 %v595, %v596
        %s598 = vtos %v597
        %v599 = vand.u32 2147483647, %v556
        %v600 = vlog2.pop %v599
        %v601 = vmul.f32 %v600, 0.6931472
        %v602 = vsel %vm588, %v601, 0.0
        %603 = vadd.xlane.f32.xlu0 %v602
        %v604 = vpop.xlane.xlu0 %603
        %v605 = vrot.slane %v604, 4
        %v606 = vadd.f32 %v604, %v605
        %v607 = vrot.slane %v606, 2
        %v608 = vadd.f32 %v606, %v607
        %v609 = vrot.slane %v608, 1
        %v610 = vadd.f32 %v608, %v609
        %s611 = vtos %v610
        %s612 = sadd.f32 %s598, %s611
        %v613 = vstv %s612
        %v614 = vadd.f32 %v550, %v613
        %vm615 = vcmp.ge.f32.partialorder %v570, 0.0
        %v616 = vmul.f32 %v570, 0.95
        %v617 = vsel %vm615, %v570, %v616
        %vm618 = vcmp.ge.f32.partialorder %v584, 0.0
        %v619 = vmul.f32 %v584, 0.95
        %v620 = vsel %vm618, %v584, %v619
        %v621 = vld [vmem:[%s513] sm:$0xff]
        %v622 = vld [vmem:[%s517] sm:$0x1]
        %v624 = vlaneseq
        %v625 = vshrl.u32 %v624, 7
        %v626 = vsub.s32 0, %v625
        %v627 = vrot.slane %v622, %v626
        %vm629 = vcmask 64512
        %v631 = vsel %vm629, %v617, 0
        %633 = vmatprep.subr.mxu0 0.0
        %634 = vmatpush1.msra.mxu0 0.0
        %635 = vmatprep.subr.mxu0 0.0
        %636 = vmatpush1.msra.mxu0 0.0
        %637 = vmatprep.subr.mxu0 0.0
        %638 = vmatpush1.msra.mxu0 0.0
        %639 = vmatprep.subr.mxu0 0.0
        %640 = vmatpush1.msra.mxu0 0.0
        %641 = vmatprep.subr.mxu0 0.0
        %642 = vmatpush1.msra.mxu0 0.0
        %643 = vmatprep.subr.mxu0 0.0
        %644 = vmatpush1.msra.mxu0 0.0
        %645 = vmatprep.subr.mxu0 0.0
        %646 = vmatpush1.msra.mxu0 0.0
        %647 = vmatprep.subr.mxu0 0.0
        %648 = vmatpush1.msra.mxu0 0.0
        %649 = vmatprep.subr.mxu0 0.0
        %650 = vmatpush1.msra.mxu0 0.0
        %651 = vmatprep.subr.mxu0 0.0
        %652 = vmatpush1.msra.mxu0 0.0
        %653 = vmatprep.subr.mxu0 0.0
        %654 = vmatpush1.msra.mxu0 0.0
        %655 = vmatprep.subr.mxu0 0.0
        %656 = vmatpush1.msra.mxu0 0.0
        %657 = vmatprep.subr.mxu0 0.0
        %658 = vmatpush1.msra.mxu0 0.0
        %659 = vmatprep.subr.mxu0 0.0
        %660 = vmatpush1.msra.mxu0 0.0
        %661 = vmatprep.subr.mxu0 0.0
        %662 = vmatpush1.msra.mxu0 0.0
        %663 = vmatprep.subr.mxu0 0.0
        %664 = vmatpush1.msra.mxu0 %v621
        %665 = vmatprep.subr.mxu0 0.0
        %666 = vmatpush2.msra.mxu0 0.0
        %667 = vmatprep.subr.mxu0 0.0
        %668 = vmatpush2.msra.mxu0 0.0
        %669 = vmatprep.subr.mxu0 0.0
        %670 = vmatpush2.msra.mxu0 0.0
        %671 = vmatprep.subr.mxu0 0.0
        %672 = vmatpush2.msra.mxu0 0.0
        %673 = vmatprep.subr.mxu0 0.0
        %674 = vmatpush2.msra.mxu0 0.0
        %675 = vmatprep.subr.mxu0 0.0
        %676 = vmatpush2.msra.mxu0 0.0
        %677 = vmatprep.subr.mxu0 0.0
        %678 = vmatpush2.msra.mxu0 0.0
        %679 = vmatprep.subr.mxu0 0.0
        %680 = vmatpush2.msra.mxu0 0.0
        %681 = vmatprep.subr.mxu0 0.0
        %682 = vmatpush2.msra.mxu0 0.0
        %683 = vmatprep.subr.mxu0 0.0
        %684 = vmatpush2.msra.mxu0 0.0
        %685 = vmatprep.subr.mxu0 0.0
        %686 = vmatpush2.msra.mxu0 0.0
        %687 = vmatprep.subr.mxu0 0.0
        %688 = vmatpush2.msra.mxu0 0.0
        %689 = vmatprep.subr.mxu0 0.0
        %690 = vmatpush2.msra.mxu0 0.0
        %691 = vmatprep.subr.mxu0 0.0
        %692 = vmatpush2.msra.mxu0 0.0
        %693 = vmatprep.subr.mxu0 0.0
        %694 = vmatpush2.msra.mxu0 0.0
        %695 = vmatprep.subr.mxu0 0.0
        %696 = vmatpush2.msra.mxu0 0.0
        %697 = vmatprep.mubr.f32.mxu0 0.0
        %698 = vmatmul.mubr.f32.gmra.mxu0 %v631
        %v699 = vpop.f32.mrf.mxu0
        %v700 = vadd.f32 %v627, %v699
        %v701 = vpop.f32.mrf.mxu0
        %702 = vdwg.mxu0
        %vm703 = vcmp.ge.f32.partialorder %v700, 0.0
        %v704 = vmul.f32 %v700, 0.01
        %v705 = vsel %vm703, %v700, %v704
        %v706 = vld [vmem:[%s432] sm:$0xff]
        %v707 = vld [vmem:[%s432 + $0x8] sm:$0xff]
        %v708 = vld [vmem:[%s432 + $0x10] sm:$0xff]
        %v709 = vld [vmem:[%s432 + $0x18] sm:$0xff]
        %v710 = vld [vmem:[%s521] sm:$0x1]
        %v712 = vlaneseq
        %v713 = vshrl.u32 %v712, 7
        %v714 = vsub.s32 0, %v713
        %v715 = vrot.slane %v710, %v714
        %vm717 = vcmask 261120
        %v719 = vsel %vm717, %v705, 0
        %721 = vmatprep.subr.mxu0 0.0
        %722 = vmatpush1.msra.mxu0 0.0
        %723 = vmatprep.subr.mxu0 0.0
        %724 = vmatpush1.msra.mxu0 0.0
        %725 = vmatprep.subr.mxu0 0.0
        %726 = vmatpush1.msra.mxu0 0.0
        %727 = vmatprep.subr.mxu0 0.0
        %728 = vmatpush1.msra.mxu0 0.0
        %729 = vmatprep.subr.mxu0 0.0
        %730 = vmatpush1.msra.mxu0 0.0
        %731 = vmatprep.subr.mxu0 0.0
        %732 = vmatpush1.msra.mxu0 0.0
        %733 = vmatprep.subr.mxu0 0.0
        %734 = vmatpush1.msra.mxu0 0.0
        %735 = vmatprep.subr.mxu0 0.0
        %736 = vmatpush1.msra.mxu0 0.0
        %737 = vmatprep.subr.mxu0 0.0
        %738 = vmatpush1.msra.mxu0 0.0
        %739 = vmatprep.subr.mxu0 0.0
        %740 = vmatpush1.msra.mxu0 0.0
        %741 = vmatprep.subr.mxu0 0.0
        %742 = vmatpush1.msra.mxu0 0.0
        %743 = vmatprep.subr.mxu0 0.0
        %744 = vmatpush1.msra.mxu0 0.0
        %745 = vmatprep.subr.mxu0 0.0
        %746 = vmatpush1.msra.mxu0 %v709
        %747 = vmatprep.subr.mxu0 0.0
        %748 = vmatpush1.msra.mxu0 %v708
        %749 = vmatprep.subr.mxu0 0.0
        %750 = vmatpush1.msra.mxu0 %v707
        %751 = vmatprep.subr.mxu0 0.0
        %752 = vmatpush1.msra.mxu0 %v706
        %753 = vmatprep.subr.mxu0 0.0
        %754 = vmatpush2.msra.mxu0 0.0
        %755 = vmatprep.subr.mxu0 0.0
        %756 = vmatpush2.msra.mxu0 0.0
        %757 = vmatprep.subr.mxu0 0.0
        %758 = vmatpush2.msra.mxu0 0.0
        %759 = vmatprep.subr.mxu0 0.0
        %760 = vmatpush2.msra.mxu0 0.0
        %761 = vmatprep.subr.mxu0 0.0
        %762 = vmatpush2.msra.mxu0 0.0
        %763 = vmatprep.subr.mxu0 0.0
        %764 = vmatpush2.msra.mxu0 0.0
        %765 = vmatprep.subr.mxu0 0.0
        %766 = vmatpush2.msra.mxu0 0.0
        %767 = vmatprep.subr.mxu0 0.0
        %768 = vmatpush2.msra.mxu0 0.0
        %769 = vmatprep.subr.mxu0 0.0
        %770 = vmatpush2.msra.mxu0 0.0
        %771 = vmatprep.subr.mxu0 0.0
        %772 = vmatpush2.msra.mxu0 0.0
        %773 = vmatprep.subr.mxu0 0.0
        %774 = vmatpush2.msra.mxu0 0.0
        %775 = vmatprep.subr.mxu0 0.0
        %776 = vmatpush2.msra.mxu0 0.0
        %777 = vmatprep.subr.mxu0 0.0
        %778 = vmatpush2.msra.mxu0 0.0
        %779 = vmatprep.subr.mxu0 0.0
        %780 = vmatpush2.msra.mxu0 0.0
        %781 = vmatprep.subr.mxu0 0.0
        %782 = vmatpush2.msra.mxu0 0.0
        %783 = vmatprep.subr.mxu0 0.0
        %784 = vmatpush2.msra.mxu0 0.0
        %785 = vmatprep.mubr.f32.mxu0 0.0
        %786 = vmatmul.mubr.f32.gmra.mxu0 %v719
        %v787 = vpop.f32.mrf.mxu0
        %v788 = vadd.f32 %v715, %v787
        %v789 = vpop.f32.mrf.mxu0
        %790 = vdwg.mxu0
        %vm791 = vcmp.ge.f32.partialorder %v788, 0.0
        %v792 = vmul.f32 %v788, 0.01
        %v793 = vsel %vm791, %v788, %v792
        %s794 = scalar_lea.vmem %s432, 32 [#allocation5]
        %v795 = vld [vmem:[%s794] sm:$0xff]
        %v796 = vld [vmem:[%s794 + $0x8] sm:$0xff]
        %v797 = vld [vmem:[%s794 + $0x10] sm:$0xff]
        %v798 = vld [vmem:[%s794 + $0x18] sm:$0xff]
        %s799 = scalar_lea.vmem %s521, 1
        %v800 = vld [vmem:[%s799] sm:$0x1]
        %v802 = vlaneseq
        %v803 = vshrl.u32 %v802, 7
        %v804 = vsub.s32 0, %v803
        %v805 = vrot.slane %v800, %v804
        %v808 = vsel %vm717, %v793, 0
        %810 = vmatprep.subr.mxu0 0.0
        %811 = vmatpush1.msra.mxu0 0.0
        %812 = vmatprep.subr.mxu0 0.0
        %813 = vmatpush1.msra.mxu0 0.0
        %814 = vmatprep.subr.mxu0 0.0
        %815 = vmatpush1.msra.mxu0 0.0
        %816 = vmatprep.subr.mxu0 0.0
        %817 = vmatpush1.msra.mxu0 0.0
        %818 = vmatprep.subr.mxu0 0.0
        %819 = vmatpush1.msra.mxu0 0.0
        %820 = vmatprep.subr.mxu0 0.0
        %821 = vmatpush1.msra.mxu0 0.0
        %822 = vmatprep.subr.mxu0 0.0
        %823 = vmatpush1.msra.mxu0 0.0
        %824 = vmatprep.subr.mxu0 0.0
        %825 = vmatpush1.msra.mxu0 0.0
        %826 = vmatprep.subr.mxu0 0.0
        %827 = vmatpush1.msra.mxu0 0.0
        %828 = vmatprep.subr.mxu0 0.0
        %829 = vmatpush1.msra.mxu0 0.0
        %830 = vmatprep.subr.mxu0 0.0
        %831 = vmatpush1.msra.mxu0 0.0
        %832 = vmatprep.subr.mxu0 0.0
        %833 = vmatpush1.msra.mxu0 0.0
        %834 = vmatprep.subr.mxu0 0.0
        %835 = vmatpush1.msra.mxu0 %v798
        %836 = vmatprep.subr.mxu0 0.0
        %837 = vmatpush1.msra.mxu0 %v797
        %838 = vmatprep.subr.mxu0 0.0
        %839 = vmatpush1.msra.mxu0 %v796
        %840 = vmatprep.subr.mxu0 0.0
        %841 = vmatpush1.msra.mxu0 %v795
        %842 = vmatprep.subr.mxu0 0.0
        %843 = vmatpush2.msra.mxu0 0.0
        %844 = vmatprep.subr.mxu0 0.0
        %845 = vmatpush2.msra.mxu0 0.0
        %846 = vmatprep.subr.mxu0 0.0
        %847 = vmatpush2.msra.mxu0 0.0
        %848 = vmatprep.subr.mxu0 0.0
        %849 = vmatpush2.msra.mxu0 0.0
        %850 = vmatprep.subr.mxu0 0.0
        %851 = vmatpush2.msra.mxu0 0.0
        %852 = vmatprep.subr.mxu0 0.0
        %853 = vmatpush2.msra.mxu0 0.0
        %854 = vmatprep.subr.mxu0 0.0
        %855 = vmatpush2.msra.mxu0 0.0
        %856 = vmatprep.subr.mxu0 0.0
        %857 = vmatpush2.msra.mxu0 0.0
        %858 = vmatprep.subr.mxu0 0.0
        %859 = vmatpush2.msra.mxu0 0.0
        %860 = vmatprep.subr.mxu0 0.0
        %861 = vmatpush2.msra.mxu0 0.0
        %862 = vmatprep.subr.mxu0 0.0
        %863 = vmatpush2.msra.mxu0 0.0
        %864 = vmatprep.subr.mxu0 0.0
        %865 = vmatpush2.msra.mxu0 0.0
        %866 = vmatprep.subr.mxu0 0.0
        %867 = vmatpush2.msra.mxu0 0.0
        %868 = vmatprep.subr.mxu0 0.0
        %869 = vmatpush2.msra.mxu0 0.0
        %870 = vmatprep.subr.mxu0 0.0
        %871 = vmatpush2.msra.mxu0 0.0
        %872 = vmatprep.subr.mxu0 0.0
        %873 = vmatpush2.msra.mxu0 0.0
        %874 = vmatprep.mubr.f32.mxu0 0.0
        %875 = vmatmul.mubr.f32.gmra.mxu0 %v808
        %v876 = vpop.f32.mrf.mxu0
        %v877 = vadd.f32 %v805, %v876
        %v878 = vpop.f32.mrf.mxu0
        %879 = vdwg.mxu0
        %vm880 = vcmp.ge.f32.partialorder %v877, 0.0
        %v881 = vmul.f32 %v877, 0.01
        %v882 = vsel %vm880, %v877, %v881
        %v883 = vld [vmem:[%s526] sm:$0xff]
        %v884 = vld [vmem:[%s526 + $0x8] sm:$0xff]
        %v885 = vld [vmem:[%s526 + $0x10] sm:$0xff]
        %v886 = vld [vmem:[%s526 + $0x18] sm:$0xff]
        %v887 = vld [vmem:[%s530] sm:$0x1]
        %v889 = vlaneseq
        %v890 = vshrl.u32 %v889, 7
        %v891 = vsub.s32 0, %v890
        %v892 = vrot.slane %v887, %v891
        %v895 = vsel %vm717, %v882, 0
        %897 = vmatprep.subr.mxu0 0.0
        %898 = vmatpush1.msra.mxu0 0.0
        %899 = vmatprep.subr.mxu0 0.0
        %900 = vmatpush1.msra.mxu0 0.0
        %901 = vmatprep.subr.mxu0 0.0
        %902 = vmatpush1.msra.mxu0 0.0
        %903 = vmatprep.subr.mxu0 0.0
        %904 = vmatpush1.msra.mxu0 0.0
        %905 = vmatprep.subr.mxu0 0.0
        %906 = vmatpush1.msra.mxu0 0.0
        %907 = vmatprep.subr.mxu0 0.0
        %908 = vmatpush1.msra.mxu0 0.0
        %909 = vmatprep.subr.mxu0 0.0
        %910 = vmatpush1.msra.mxu0 0.0
        %911 = vmatprep.subr.mxu0 0.0
        %912 = vmatpush1.msra.mxu0 0.0
        %913 = vmatprep.subr.mxu0 0.0
        %914 = vmatpush1.msra.mxu0 0.0
        %915 = vmatprep.subr.mxu0 0.0
        %916 = vmatpush1.msra.mxu0 0.0
        %917 = vmatprep.subr.mxu0 0.0
        %918 = vmatpush1.msra.mxu0 0.0
        %919 = vmatprep.subr.mxu0 0.0
        %920 = vmatpush1.msra.mxu0 0.0
        %921 = vmatprep.subr.mxu0 0.0
        %922 = vmatpush1.msra.mxu0 %v886
        %923 = vmatprep.subr.mxu0 0.0
        %924 = vmatpush1.msra.mxu0 %v885
        %925 = vmatprep.subr.mxu0 0.0
        %926 = vmatpush1.msra.mxu0 %v884
        %927 = vmatprep.subr.mxu0 0.0
        %928 = vmatpush1.msra.mxu0 %v883
        %929 = vmatprep.subr.mxu0 0.0
        %930 = vmatpush2.msra.mxu0 0.0
        %931 = vmatprep.subr.mxu0 0.0
        %932 = vmatpush2.msra.mxu0 0.0
        %933 = vmatprep.subr.mxu0 0.0
        %934 = vmatpush2.msra.mxu0 0.0
        %935 = vmatprep.subr.mxu0 0.0
        %936 = vmatpush2.msra.mxu0 0.0
        %937 = vmatprep.subr.mxu0 0.0
        %938 = vmatpush2.msra.mxu0 0.0
        %939 = vmatprep.subr.mxu0 0.0
        %940 = vmatpush2.msra.mxu0 0.0
        %941 = vmatprep.subr.mxu0 0.0
        %942 = vmatpush2.msra.mxu0 0.0
        %943 = vmatprep.subr.mxu0 0.0
        %944 = vmatpush2.msra.mxu0 0.0
        %945 = vmatprep.subr.mxu0 0.0
        %946 = vmatpush2.msra.mxu0 0.0
        %947 = vmatprep.subr.mxu0 0.0
        %948 = vmatpush2.msra.mxu0 0.0
        %949 = vmatprep.subr.mxu0 0.0
        %950 = vmatpush2.msra.mxu0 0.0
        %951 = vmatprep.subr.mxu0 0.0
        %952 = vmatpush2.msra.mxu0 0.0
        %953 = vmatprep.subr.mxu0 0.0
        %954 = vmatpush2.msra.mxu0 0.0
        %955 = vmatprep.subr.mxu0 0.0
        %956 = vmatpush2.msra.mxu0 0.0
        %957 = vmatprep.subr.mxu0 0.0
        %958 = vmatpush2.msra.mxu0 0.0
        %959 = vmatprep.subr.mxu0 0.0
        %960 = vmatpush2.msra.mxu0 0.0
        %961 = vmatprep.mubr.f32.mxu0 0.0
        %962 = vmatmul.mubr.f32.gmra.mxu0 %v895
        %v963 = vpop.f32.mrf.mxu0
        %v964 = vadd.f32 %v892, %v963
        %v965 = vpop.f32.mrf.mxu0
        %966 = vdwg.mxu0
        %v967 = vtanh.pop %v964
        %v968 = vmul.f32 %v967, 1.442695
        %v969 = vpow.pop %v968
        %v970 = vmul.f32 %v620, %v969
        %s971 = scalar_lea.vmem %s513, 16
        %v972 = vld [vmem:[%s971] sm:$0xff]
        %s973 = scalar_lea.vmem %s517, 2
        %v974 = vld [vmem:[%s973] sm:$0x1]
        %v976 = vlaneseq
        %v977 = vshrl.u32 %v976, 7
        %v978 = vsub.s32 0, %v977
        %v979 = vrot.slane %v974, %v978
        %981 = vmatprep.subr.mxu0 0.0
        %982 = vmatpush1.msra.mxu0 0.0
        %983 = vmatprep.subr.mxu0 0.0
        %984 = vmatpush1.msra.mxu0 0.0
        %985 = vmatprep.subr.mxu0 0.0
        %986 = vmatpush1.msra.mxu0 0.0
        %987 = vmatprep.subr.mxu0 0.0
        %988 = vmatpush1.msra.mxu0 0.0
        %989 = vmatprep.subr.mxu0 0.0
        %990 = vmatpush1.msra.mxu0 0.0
        %991 = vmatprep.subr.mxu0 0.0
        %992 = vmatpush1.msra.mxu0 0.0
        %993 = vmatprep.subr.mxu0 0.0
        %994 = vmatpush1.msra.mxu0 0.0
        %995 = vmatprep.subr.mxu0 0.0
        %996 = vmatpush1.msra.mxu0 0.0
        %997 = vmatprep.subr.mxu0 0.0
        %998 = vmatpush1.msra.mxu0 0.0
        %999 = vmatprep.subr.mxu0 0.0
        %1000 = vmatpush1.msra.mxu0 0.0
        %1001 = vmatprep.subr.mxu0 0.0
        %1002 = vmatpush1.msra.mxu0 0.0
        %1003 = vmatprep.subr.mxu0 0.0
        %1004 = vmatpush1.msra.mxu0 0.0
        %1005 = vmatprep.subr.mxu0 0.0
        %1006 = vmatpush1.msra.mxu0 0.0
        %1007 = vmatprep.subr.mxu0 0.0
        %1008 = vmatpush1.msra.mxu0 0.0
        %1009 = vmatprep.subr.mxu0 0.0
        %1010 = vmatpush1.msra.mxu0 0.0
        %1011 = vmatprep.subr.mxu0 0.0
        %1012 = vmatpush1.msra.mxu0 %v972
        %1013 = vmatprep.subr.mxu0 0.0
        %1014 = vmatpush2.msra.mxu0 0.0
        %1015 = vmatprep.subr.mxu0 0.0
        %1016 = vmatpush2.msra.mxu0 0.0
        %1017 = vmatprep.subr.mxu0 0.0
        %1018 = vmatpush2.msra.mxu0 0.0
        %1019 = vmatprep.subr.mxu0 0.0
        %1020 = vmatpush2.msra.mxu0 0.0
        %1021 = vmatprep.subr.mxu0 0.0
        %1022 = vmatpush2.msra.mxu0 0.0
        %1023 = vmatprep.subr.mxu0 0.0
        %1024 = vmatpush2.msra.mxu0 0.0
        %1025 = vmatprep.subr.mxu0 0.0
        %1026 = vmatpush2.msra.mxu0 0.0
        %1027 = vmatprep.subr.mxu0 0.0
        %1028 = vmatpush2.msra.mxu0 0.0
        %1029 = vmatprep.subr.mxu0 0.0
        %1030 = vmatpush2.msra.mxu0 0.0
        %1031 = vmatprep.subr.mxu0 0.0
        %1032 = vmatpush2.msra.mxu0 0.0
        %1033 = vmatprep.subr.mxu0 0.0
        %1034 = vmatpush2.msra.mxu0 0.0
        %1035 = vmatprep.subr.mxu0 0.0
        %1036 = vmatpush2.msra.mxu0 0.0
        %1037 = vmatprep.subr.mxu0 0.0
        %1038 = vmatpush2.msra.mxu0 0.0
        %1039 = vmatprep.subr.mxu0 0.0
        %1040 = vmatpush2.msra.mxu0 0.0
        %1041 = vmatprep.subr.mxu0 0.0
        %1042 = vmatpush2.msra.mxu0 0.0
        %1043 = vmatprep.subr.mxu0 0.0
        %1044 = vmatpush2.msra.mxu0 0.0
        %1045 = vmatprep.mubr.f32.mxu0 0.0
        %1046 = vmatmul.mubr.f32.gmra.mxu0 %v631
        %v1047 = vpop.f32.mrf.mxu0
        %v1048 = vadd.f32 %v979, %v1047
        %v1049 = vpop.f32.mrf.mxu0
        %1050 = vdwg.mxu0
        %vm1051 = vcmp.ge.f32.partialorder %v1048, 0.0
        %v1052 = vmul.f32 %v1048, 0.01
        %v1053 = vsel %vm1051, %v1048, %v1052
        %s1054 = scalar_lea.vmem %s432, 128 [#allocation5]
        %v1055 = vld [vmem:[%s1054] sm:$0xff]
        %v1056 = vld [vmem:[%s1054 + $0x8] sm:$0xff]
        %v1057 = vld [vmem:[%s1054 + $0x10] sm:$0xff]
        %v1058 = vld [vmem:[%s1054 + $0x18] sm:$0xff]
        %s1059 = scalar_lea.vmem %s521, 4
        %v1060 = vld [vmem:[%s1059] sm:$0x1]
        %v1062 = vlaneseq
        %v1063 = vshrl.u32 %v1062, 7
        %v1064 = vsub.s32 0, %v1063
        %v1065 = vrot.slane %v1060, %v1064
        %v1068 = vsel %vm717, %v1053, 0
        %1070 = vmatprep.subr.mxu0 0.0
        %1071 = vmatpush1.msra.mxu0 0.0
        %1072 = vmatprep.subr.mxu0 0.0
        %1073 = vmatpush1.msra.mxu0 0.0
        %1074 = vmatprep.subr.mxu0 0.0
        %1075 = vmatpush1.msra.mxu0 0.0
        %1076 = vmatprep.subr.mxu0 0.0
        %1077 = vmatpush1.msra.mxu0 0.0
        %1078 = vmatprep.subr.mxu0 0.0
        %1079 = vmatpush1.msra.mxu0 0.0
        %1080 = vmatprep.subr.mxu0 0.0
        %1081 = vmatpush1.msra.mxu0 0.0
        %1082 = vmatprep.subr.mxu0 0.0
        %1083 = vmatpush1.msra.mxu0 0.0
        %1084 = vmatprep.subr.mxu0 0.0
        %1085 = vmatpush1.msra.mxu0 0.0
        %1086 = vmatprep.subr.mxu0 0.0
        %1087 = vmatpush1.msra.mxu0 0.0
        %1088 = vmatprep.subr.mxu0 0.0
        %1089 = vmatpush1.msra.mxu0 0.0
        %1090 = vmatprep.subr.mxu0 0.0
        %1091 = vmatpush1.msra.mxu0 0.0
        %1092 = vmatprep.subr.mxu0 0.0
        %1093 = vmatpush1.msra.mxu0 0.0
        %1094 = vmatprep.subr.mxu0 0.0
        %1095 = vmatpush1.msra.mxu0 %v1058
        %1096 = vmatprep.subr.mxu0 0.0
        %1097 = vmatpush1.msra.mxu0 %v1057
        %1098 = vmatprep.subr.mxu0 0.0
        %1099 = vmatpush1.msra.mxu0 %v1056
        %1100 = vmatprep.subr.mxu0 0.0
        %1101 = vmatpush1.msra.mxu0 %v1055
        %1102 = vmatprep.subr.mxu0 0.0
        %1103 = vmatpush2.msra.mxu0 0.0
        %1104 = vmatprep.subr.mxu0 0.0
        %1105 = vmatpush2.msra.mxu0 0.0
        %1106 = vmatprep.subr.mxu0 0.0
        %1107 = vmatpush2.msra.mxu0 0.0
        %1108 = vmatprep.subr.mxu0 0.0
        %1109 = vmatpush2.msra.mxu0 0.0
        %1110 = vmatprep.subr.mxu0 0.0
        %1111 = vmatpush2.msra.mxu0 0.0
        %1112 = vmatprep.subr.mxu0 0.0
        %1113 = vmatpush2.msra.mxu0 0.0
        %1114 = vmatprep.subr.mxu0 0.0
        %1115 = vmatpush2.msra.mxu0 0.0
        %1116 = vmatprep.subr.mxu0 0.0
        %1117 = vmatpush2.msra.mxu0 0.0
        %1118 = vmatprep.subr.mxu0 0.0
        %1119 = vmatpush2.msra.mxu0 0.0
        %1120 = vmatprep.subr.mxu0 0.0
        %1121 = vmatpush2.msra.mxu0 0.0
        %1122 = vmatprep.subr.mxu0 0.0
        %1123 = vmatpush2.msra.mxu0 0.0
        %1124 = vmatprep.subr.mxu0 0.0
        %1125 = vmatpush2.msra.mxu0 0.0
        %1126 = vmatprep.subr.mxu0 0.0
        %1127 = vmatpush2.msra.mxu0 0.0
        %1128 = vmatprep.subr.mxu0 0.0
        %1129 = vmatpush2.msra.mxu0 0.0
        %1130 = vmatprep.subr.mxu0 0.0
        %1131 = vmatpush2.msra.mxu0 0.0
        %1132 = vmatprep.subr.mxu0 0.0
        %1133 = vmatpush2.msra.mxu0 0.0
        %1134 = vmatprep.mubr.f32.mxu0 0.0
        %1135 = vmatmul.mubr.f32.gmra.mxu0 %v1068
        %v1136 = vpop.f32.mrf.mxu0
        %v1137 = vadd.f32 %v1065, %v1136
        %v1138 = vpop.f32.mrf.mxu0
        %1139 = vdwg.mxu0
        %vm1140 = vcmp.ge.f32.partialorder %v1137, 0.0
        %v1141 = vmul.f32 %v1137, 0.01
        %v1142 = vsel %vm1140, %v1137, %v1141
        %s1143 = scalar_lea.vmem %s432, 160 [#allocation5]
        %v1144 = vld [vmem:[%s1143] sm:$0xff]
        %v1145 = vld [vmem:[%s1143 + $0x8] sm:$0xff]
        %v1146 = vld [vmem:[%s1143 + $0x10] sm:$0xff]
        %v1147 = vld [vmem:[%s1143 + $0x18] sm:$0xff]
        %s1148 = scalar_lea.vmem %s521, 5
        %v1149 = vld [vmem:[%s1148] sm:$0x1]
        %v1151 = vlaneseq
        %v1152 = vshrl.u32 %v1151, 7
        %v1153 = vsub.s32 0, %v1152
        %v1154 = vrot.slane %v1149, %v1153
        %v1157 = vsel %vm717, %v1142, 0
        %1159 = vmatprep.subr.mxu0 0.0
        %1160 = vmatpush1.msra.mxu0 0.0
        %1161 = vmatprep.subr.mxu0 0.0
        %1162 = vmatpush1.msra.mxu0 0.0
        %1163 = vmatprep.subr.mxu0 0.0
        %1164 = vmatpush1.msra.mxu0 0.0
        %1165 = vmatprep.subr.mxu0 0.0
        %1166 = vmatpush1.msra.mxu0 0.0
        %1167 = vmatprep.subr.mxu0 0.0
        %1168 = vmatpush1.msra.mxu0 0.0
        %1169 = vmatprep.subr.mxu0 0.0
        %1170 = vmatpush1.msra.mxu0 0.0
        %1171 = vmatprep.subr.mxu0 0.0
        %1172 = vmatpush1.msra.mxu0 0.0
        %1173 = vmatprep.subr.mxu0 0.0
        %1174 = vmatpush1.msra.mxu0 0.0
        %1175 = vmatprep.subr.mxu0 0.0
        %1176 = vmatpush1.msra.mxu0 0.0
        %1177 = vmatprep.subr.mxu0 0.0
        %1178 = vmatpush1.msra.mxu0 0.0
        %1179 = vmatprep.subr.mxu0 0.0
        %1180 = vmatpush1.msra.mxu0 0.0
        %1181 = vmatprep.subr.mxu0 0.0
        %1182 = vmatpush1.msra.mxu0 0.0
        %1183 = vmatprep.subr.mxu0 0.0
        %1184 = vmatpush1.msra.mxu0 %v1147
        %1185 = vmatprep.subr.mxu0 0.0
        %1186 = vmatpush1.msra.mxu0 %v1146
        %1187 = vmatprep.subr.mxu0 0.0
        %1188 = vmatpush1.msra.mxu0 %v1145
        %1189 = vmatprep.subr.mxu0 0.0
        %1190 = vmatpush1.msra.mxu0 %v1144
        %1191 = vmatprep.subr.mxu0 0.0
        %1192 = vmatpush2.msra.mxu0 0.0
        %1193 = vmatprep.subr.mxu0 0.0
        %1194 = vmatpush2.msra.mxu0 0.0
        %1195 = vmatprep.subr.mxu0 0.0
        %1196 = vmatpush2.msra.mxu0 0.0
        %1197 = vmatprep.subr.mxu0 0.0
        %1198 = vmatpush2.msra.mxu0 0.0
        %1199 = vmatprep.subr.mxu0 0.0
        %1200 = vmatpush2.msra.mxu0 0.0
        %1201 = vmatprep.subr.mxu0 0.0
        %1202 = vmatpush2.msra.mxu0 0.0
        %1203 = vmatprep.subr.mxu0 0.0
        %1204 = vmatpush2.msra.mxu0 0.0
        %1205 = vmatprep.subr.mxu0 0.0
        %1206 = vmatpush2.msra.mxu0 0.0
        %1207 = vmatprep.subr.mxu0 0.0
        %1208 = vmatpush2.msra.mxu0 0.0
        %1209 = vmatprep.subr.mxu0 0.0
        %1210 = vmatpush2.msra.mxu0 0.0
        %1211 = vmatprep.subr.mxu0 0.0
        %1212 = vmatpush2.msra.mxu0 0.0
        %1213 = vmatprep.subr.mxu0 0.0
        %1214 = vmatpush2.msra.mxu0 0.0
        %1215 = vmatprep.subr.mxu0 0.0
        %1216 = vmatpush2.msra.mxu0 0.0
        %1217 = vmatprep.subr.mxu0 0.0
        %1218 = vmatpush2.msra.mxu0 0.0
        %1219 = vmatprep.subr.mxu0 0.0
        %1220 = vmatpush2.msra.mxu0 0.0
        %1221 = vmatprep.subr.mxu0 0.0
        %1222 = vmatpush2.msra.mxu0 0.0
        %1223 = vmatprep.mubr.f32.mxu0 0.0
        %1224 = vmatmul.mubr.f32.gmra.mxu0 %v1157
        %v1225 = vpop.f32.mrf.mxu0
        %v1226 = vadd.f32 %v1154, %v1225
        %v1227 = vpop.f32.mrf.mxu0
        %1228 = vdwg.mxu0
        %vm1229 = vcmp.ge.f32.partialorder %v1226, 0.0
        %v1230 = vmul.f32 %v1226, 0.01
        %v1231 = vsel %vm1229, %v1226, %v1230
        %s1232 = scalar_lea.vmem %s526, 64
        %v1233 = vld [vmem:[%s1232] sm:$0xff]
        %v1234 = vld [vmem:[%s1232 + $0x8] sm:$0xff]
        %v1235 = vld [vmem:[%s1232 + $0x10] sm:$0xff]
        %v1236 = vld [vmem:[%s1232 + $0x18] sm:$0xff]
        %s1237 = scalar_lea.vmem %s530, 2
        %v1238 = vld [vmem:[%s1237] sm:$0x1]
        %v1240 = vlaneseq
        %v1241 = vshrl.u32 %v1240, 7
        %v1242 = vsub.s32 0, %v1241
        %v1243 = vrot.slane %v1238, %v1242
        %v1246 = vsel %vm717, %v1231, 0
        %1248 = vmatprep.subr.mxu0 0.0
        %1249 = vmatpush1.msra.mxu0 0.0
        %1250 = vmatprep.subr.mxu0 0.0
        %1251 = vmatpush1.msra.mxu0 0.0
        %1252 = vmatprep.subr.mxu0 0.0
        %1253 = vmatpush1.msra.mxu0 0.0
        %1254 = vmatprep.subr.mxu0 0.0
        %1255 = vmatpush1.msra.mxu0 0.0
        %1256 = vmatprep.subr.mxu0 0.0
        %1257 = vmatpush1.msra.mxu0 0.0
        %1258 = vmatprep.subr.mxu0 0.0
        %1259 = vmatpush1.msra.mxu0 0.0
        %1260 = vmatprep.subr.mxu0 0.0
        %1261 = vmatpush1.msra.mxu0 0.0
        %1262 = vmatprep.subr.mxu0 0.0
        %1263 = vmatpush1.msra.mxu0 0.0
        %1264 = vmatprep.subr.mxu0 0.0
        %1265 = vmatpush1.msra.mxu0 0.0
        %1266 = vmatprep.subr.mxu0 0.0
        %1267 = vmatpush1.msra.mxu0 0.0
        %1268 = vmatprep.subr.mxu0 0.0
        %1269 = vmatpush1.msra.mxu0 0.0
        %1270 = vmatprep.subr.mxu0 0.0
        %1271 = vmatpush1.msra.mxu0 0.0
        %1272 = vmatprep.subr.mxu0 0.0
        %1273 = vmatpush1.msra.mxu0 %v1236
        %1274 = vmatprep.subr.mxu0 0.0
        %1275 = vmatpush1.msra.mxu0 %v1235
        %1276 = vmatprep.subr.mxu0 0.0
        %1277 = vmatpush1.msra.mxu0 %v1234
        %1278 = vmatprep.subr.mxu0 0.0
        %1279 = vmatpush1.msra.mxu0 %v1233
        %1280 = vmatprep.subr.mxu0 0.0
        %1281 = vmatpush2.msra.mxu0 0.0
        %1282 = vmatprep.subr.mxu0 0.0
        %1283 = vmatpush2.msra.mxu0 0.0
        %1284 = vmatprep.subr.mxu0 0.0
        %1285 = vmatpush2.msra.mxu0 0.0
        %1286 = vmatprep.subr.mxu0 0.0
        %1287 = vmatpush2.msra.mxu0 0.0
        %1288 = vmatprep.subr.mxu0 0.0
        %1289 = vmatpush2.msra.mxu0 0.0
        %1290 = vmatprep.subr.mxu0 0.0
        %1291 = vmatpush2.msra.mxu0 0.0
        %1292 = vmatprep.subr.mxu0 0.0
        %1293 = vmatpush2.msra.mxu0 0.0
        %1294 = vmatprep.subr.mxu0 0.0
        %1295 = vmatpush2.msra.mxu0 0.0
        %1296 = vmatprep.subr.mxu0 0.0
        %1297 = vmatpush2.msra.mxu0 0.0
        %1298 = vmatprep.subr.mxu0 0.0
        %1299 = vmatpush2.msra.mxu0 0.0
        %1300 = vmatprep.subr.mxu0 0.0
        %1301 = vmatpush2.msra.mxu0 0.0
        %1302 = vmatprep.subr.mxu0 0.0
        %1303 = vmatpush2.msra.mxu0 0.0
        %1304 = vmatprep.subr.mxu0 0.0
        %1305 = vmatpush2.msra.mxu0 0.0
        %1306 = vmatprep.subr.mxu0 0.0
        %1307 = vmatpush2.msra.mxu0 0.0
        %1308 = vmatprep.subr.mxu0 0.0
        %1309 = vmatpush2.msra.mxu0 0.0
        %1310 = vmatprep.subr.mxu0 0.0
        %1311 = vmatpush2.msra.mxu0 0.0
        %1312 = vmatprep.mubr.f32.mxu0 0.0
        %1313 = vmatmul.mubr.f32.gmra.mxu0 %v1246
        %v1314 = vpop.f32.mrf.mxu0
        %v1315 = vadd.f32 %v1243, %v1314
        %v1316 = vpop.f32.mrf.mxu0
        %1317 = vdwg.mxu0
        %v1318 = vadd.f32 %v970, %v1315
        %v1319 = vsel %vm629, %v967, 0.0
        %1320 = vadd.xlane.f32.xlu0 %v1319
        %v1321 = vpop.xlane.xlu0 %1320
        %v1322 = vadd.f32 %v614, %v1321
        %s1323 = scalar_lea.vmem %s513, 8
        %v1324 = vld [vmem:[%s1323] sm:$0xff]
        %s1325 = scalar_lea.vmem %s517, 1
        %v1326 = vld [vmem:[%s1325] sm:$0x1]
        %v1328 = vlaneseq
        %v1329 = vshrl.u32 %v1328, 7
        %v1330 = vsub.s32 0, %v1329
        %v1331 = vrot.slane %v1326, %v1330
        %v1334 = vsel %vm629, %v1318, 0
        %1336 = vmatprep.subr.mxu0 0.0
        %1337 = vmatpush1.msra.mxu0 0.0
        %1338 = vmatprep.subr.mxu0 0.0
        %1339 = vmatpush1.msra.mxu0 0.0
        %1340 = vmatprep.subr.mxu0 0.0
        %1341 = vmatpush1.msra.mxu0 0.0
        %1342 = vmatprep.subr.mxu0 0.0
        %1343 = vmatpush1.msra.mxu0 0.0
        %1344 = vmatprep.subr.mxu0 0.0
        %1345 = vmatpush1.msra.mxu0 0.0
        %1346 = vmatprep.subr.mxu0 0.0
        %1347 = vmatpush1.msra.mxu0 0.0
        %1348 = vmatprep.subr.mxu0 0.0
        %1349 = vmatpush1.msra.mxu0 0.0
        %1350 = vmatprep.subr.mxu0 0.0
        %1351 = vmatpush1.msra.mxu0 0.0
        %1352 = vmatprep.subr.mxu0 0.0
        %1353 = vmatpush1.msra.mxu0 0.0
        %1354 = vmatprep.subr.mxu0 0.0
        %1355 = vmatpush1.msra.mxu0 0.0
        %1356 = vmatprep.subr.mxu0 0.0
        %1357 = vmatpush1.msra.mxu0 0.0
        %1358 = vmatprep.subr.mxu0 0.0
        %1359 = vmatpush1.msra.mxu0 0.0
        %1360 = vmatprep.subr.mxu0 0.0
        %1361 = vmatpush1.msra.mxu0 0.0
        %1362 = vmatprep.subr.mxu0 0.0
        %1363 = vmatpush1.msra.mxu0 0.0
        %1364 = vmatprep.subr.mxu0 0.0
        %1365 = vmatpush1.msra.mxu0 0.0
        %1366 = vmatprep.subr.mxu0 0.0
        %1367 = vmatpush1.msra.mxu0 %v1324
        %1368 = vmatprep.subr.mxu0 0.0
        %1369 = vmatpush2.msra.mxu0 0.0
        %1370 = vmatprep.subr.mxu0 0.0
        %1371 = vmatpush2.msra.mxu0 0.0
        %1372 = vmatprep.subr.mxu0 0.0
        %1373 = vmatpush2.msra.mxu0 0.0
        %1374 = vmatprep.subr.mxu0 0.0
        %1375 = vmatpush2.msra.mxu0 0.0
        %1376 = vmatprep.subr.mxu0 0.0
        %1377 = vmatpush2.msra.mxu0 0.0
        %1378 = vmatprep.subr.mxu0 0.0
        %1379 = vmatpush2.msra.mxu0 0.0
        %1380 = vmatprep.subr.mxu0 0.0
        %1381 = vmatpush2.msra.mxu0 0.0
        %1382 = vmatprep.subr.mxu0 0.0
        %1383 = vmatpush2.msra.mxu0 0.0
        %1384 = vmatprep.subr.mxu0 0.0
        %1385 = vmatpush2.msra.mxu0 0.0
        %1386 = vmatprep.subr.mxu0 0.0
        %1387 = vmatpush2.msra.mxu0 0.0
        %1388 = vmatprep.subr.mxu0 0.0
        %1389 = vmatpush2.msra.mxu0 0.0
        %1390 = vmatprep.subr.mxu0 0.0
        %1391 = vmatpush2.msra.mxu0 0.0
        %1392 = vmatprep.subr.mxu0 0.0
        %1393 = vmatpush2.msra.mxu0 0.0
        %1394 = vmatprep.subr.mxu0 0.0
        %1395 = vmatpush2.msra.mxu0 0.0
        %1396 = vmatprep.subr.mxu0 0.0
        %1397 = vmatpush2.msra.mxu0 0.0
        %1398 = vmatprep.subr.mxu0 0.0
        %1399 = vmatpush2.msra.mxu0 0.0
        %1400 = vmatprep.mubr.f32.mxu0 0.0
        %1401 = vmatmul.mubr.f32.gmra.mxu0 %v1334
        %v1402 = vpop.f32.mrf.mxu0
        %v1403 = vadd.f32 %v1331, %v1402
        %v1404 = vpop.f32.mrf.mxu0
        %1405 = vdwg.mxu0
        %vm1406 = vcmp.ge.f32.partialorder %v1403, 0.0
        %v1407 = vmul.f32 %v1403, 0.01
        %v1408 = vsel %vm1406, %v1403, %v1407
        %s1409 = scalar_lea.vmem %s432, 64 [#allocation5]
        %v1410 = vld [vmem:[%s1409] sm:$0xff]
        %v1411 = vld [vmem:[%s1409 + $0x8] sm:$0xff]
        %v1412 = vld [vmem:[%s1409 + $0x10] sm:$0xff]
        %v1413 = vld [vmem:[%s1409 + $0x18] sm:$0xff]
        %s1414 = scalar_lea.vmem %s521, 2
        %v1415 = vld [vmem:[%s1414] sm:$0x1]
        %v1417 = vlaneseq
        %v1418 = vshrl.u32 %v1417, 7
        %v1419 = vsub.s32 0, %v1418
        %v1420 = vrot.slane %v1415, %v1419
        %v1423 = vsel %vm717, %v1408, 0
        %1425 = vmatprep.subr.mxu0 0.0
        %1426 = vmatpush1.msra.mxu0 0.0
        %1427 = vmatprep.subr.mxu0 0.0
        %1428 = vmatpush1.msra.mxu0 0.0
        %1429 = vmatprep.subr.mxu0 0.0
        %1430 = vmatpush1.msra.mxu0 0.0
        %1431 = vmatprep.subr.mxu0 0.0
        %1432 = vmatpush1.msra.mxu0 0.0
        %1433 = vmatprep.subr.mxu0 0.0
        %1434 = vmatpush1.msra.mxu0 0.0
        %1435 = vmatprep.subr.mxu0 0.0
        %1436 = vmatpush1.msra.mxu0 0.0
        %1437 = vmatprep.subr.mxu0 0.0
        %1438 = vmatpush1.msra.mxu0 0.0
        %1439 = vmatprep.subr.mxu0 0.0
        %1440 = vmatpush1.msra.mxu0 0.0
        %1441 = vmatprep.subr.mxu0 0.0
        %1442 = vmatpush1.msra.mxu0 0.0
        %1443 = vmatprep.subr.mxu0 0.0
        %1444 = vmatpush1.msra.mxu0 0.0
        %1445 = vmatprep.subr.mxu0 0.0
        %1446 = vmatpush1.msra.mxu0 0.0
        %1447 = vmatprep.subr.mxu0 0.0
        %1448 = vmatpush1.msra.mxu0 0.0
        %1449 = vmatprep.subr.mxu0 0.0
        %1450 = vmatpush1.msra.mxu0 %v1413
        %1451 = vmatprep.subr.mxu0 0.0
        %1452 = vmatpush1.msra.mxu0 %v1412
        %1453 = vmatprep.subr.mxu0 0.0
        %1454 = vmatpush1.msra.mxu0 %v1411
        %1455 = vmatprep.subr.mxu0 0.0
        %1456 = vmatpush1.msra.mxu0 %v1410
        %1457 = vmatprep.subr.mxu0 0.0
        %1458 = vmatpush2.msra.mxu0 0.0
        %1459 = vmatprep.subr.mxu0 0.0
        %1460 = vmatpush2.msra.mxu0 0.0
        %1461 = vmatprep.subr.mxu0 0.0
        %1462 = vmatpush2.msra.mxu0 0.0
        %1463 = vmatprep.subr.mxu0 0.0
        %1464 = vmatpush2.msra.mxu0 0.0
        %1465 = vmatprep.subr.mxu0 0.0
        %1466 = vmatpush2.msra.mxu0 0.0
        %1467 = vmatprep.subr.mxu0 0.0
        %1468 = vmatpush2.msra.mxu0 0.0
        %1469 = vmatprep.subr.mxu0 0.0
        %1470 = vmatpush2.msra.mxu0 0.0
        %1471 = vmatprep.subr.mxu0 0.0
        %1472 = vmatpush2.msra.mxu0 0.0
        %1473 = vmatprep.subr.mxu0 0.0
        %1474 = vmatpush2.msra.mxu0 0.0
        %1475 = vmatprep.subr.mxu0 0.0
        %1476 = vmatpush2.msra.mxu0 0.0
        %1477 = vmatprep.subr.mxu0 0.0
        %1478 = vmatpush2.msra.mxu0 0.0
        %1479 = vmatprep.subr.mxu0 0.0
        %1480 = vmatpush2.msra.mxu0 0.0
        %1481 = vmatprep.subr.mxu0 0.0
        %1482 = vmatpush2.msra.mxu0 0.0
        %1483 = vmatprep.subr.mxu0 0.0
        %1484 = vmatpush2.msra.mxu0 0.0
        %1485 = vmatprep.subr.mxu0 0.0
        %1486 = vmatpush2.msra.mxu0 0.0
        %1487 = vmatprep.subr.mxu0 0.0
        %1488 = vmatpush2.msra.mxu0 0.0
        %1489 = vmatprep.mubr.f32.mxu0 0.0
        %1490 = vmatmul.mubr.f32.gmra.mxu0 %v1423
        %v1491 = vpop.f32.mrf.mxu0
        %v1492 = vadd.f32 %v1420, %v1491
        %v1493 = vpop.f32.mrf.mxu0
        %1494 = vdwg.mxu0
        %vm1495 = vcmp.ge.f32.partialorder %v1492, 0.0
        %v1496 = vmul.f32 %v1492, 0.01
        %v1497 = vsel %vm1495, %v1492, %v1496
        %s1498 = scalar_lea.vmem %s432, 96 [#allocation5]
        %v1499 = vld [vmem:[%s1498] sm:$0xff]
        %v1500 = vld [vmem:[%s1498 + $0x8] sm:$0xff]
        %v1501 = vld [vmem:[%s1498 + $0x10] sm:$0xff]
        %v1502 = vld [vmem:[%s1498 + $0x18] sm:$0xff]
        %s1503 = scalar_lea.vmem %s521, 3
        %v1504 = vld [vmem:[%s1503] sm:$0x1]
        %v1506 = vlaneseq
        %v1507 = vshrl.u32 %v1506, 7
        %v1508 = vsub.s32 0, %v1507
        %v1509 = vrot.slane %v1504, %v1508
        %v1512 = vsel %vm717, %v1497, 0
        %1514 = vmatprep.subr.mxu0 0.0
        %1515 = vmatpush1.msra.mxu0 0.0
        %1516 = vmatprep.subr.mxu0 0.0
        %1517 = vmatpush1.msra.mxu0 0.0
        %1518 = vmatprep.subr.mxu0 0.0
        %1519 = vmatpush1.msra.mxu0 0.0
        %1520 = vmatprep.subr.mxu0 0.0
        %1521 = vmatpush1.msra.mxu0 0.0
        %1522 = vmatprep.subr.mxu0 0.0
        %1523 = vmatpush1.msra.mxu0 0.0
        %1524 = vmatprep.subr.mxu0 0.0
        %1525 = vmatpush1.msra.mxu0 0.0
        %1526 = vmatprep.subr.mxu0 0.0
        %1527 = vmatpush1.msra.mxu0 0.0
        %1528 = vmatprep.subr.mxu0 0.0
        %1529 = vmatpush1.msra.mxu0 0.0
        %1530 = vmatprep.subr.mxu0 0.0
        %1531 = vmatpush1.msra.mxu0 0.0
        %1532 = vmatprep.subr.mxu0 0.0
        %1533 = vmatpush1.msra.mxu0 0.0
        %1534 = vmatprep.subr.mxu0 0.0
        %1535 = vmatpush1.msra.mxu0 0.0
        %1536 = vmatprep.subr.mxu0 0.0
        %1537 = vmatpush1.msra.mxu0 0.0
        %1538 = vmatprep.subr.mxu0 0.0
        %1539 = vmatpush1.msra.mxu0 %v1502
        %1540 = vmatprep.subr.mxu0 0.0
        %1541 = vmatpush1.msra.mxu0 %v1501
        %1542 = vmatprep.subr.mxu0 0.0
        %1543 = vmatpush1.msra.mxu0 %v1500
        %1544 = vmatprep.subr.mxu0 0.0
        %1545 = vmatpush1.msra.mxu0 %v1499
        %1546 = vmatprep.subr.mxu0 0.0
        %1547 = vmatpush2.msra.mxu0 0.0
        %1548 = vmatprep.subr.mxu0 0.0
        %1549 = vmatpush2.msra.mxu0 0.0
        %1550 = vmatprep.subr.mxu0 0.0
        %1551 = vmatpush2.msra.mxu0 0.0
        %1552 = vmatprep.subr.mxu0 0.0
        %1553 = vmatpush2.msra.mxu0 0.0
        %1554 = vmatprep.subr.mxu0 0.0
        %1555 = vmatpush2.msra.mxu0 0.0
        %1556 = vmatprep.subr.mxu0 0.0
        %1557 = vmatpush2.msra.mxu0 0.0
        %1558 = vmatprep.subr.mxu0 0.0
        %1559 = vmatpush2.msra.mxu0 0.0
        %1560 = vmatprep.subr.mxu0 0.0
        %1561 = vmatpush2.msra.mxu0 0.0
        %1562 = vmatprep.subr.mxu0 0.0
        %1563 = vmatpush2.msra.mxu0 0.0
        %1564 = vmatprep.subr.mxu0 0.0
        %1565 = vmatpush2.msra.mxu0 0.0
        %1566 = vmatprep.subr.mxu0 0.0
        %1567 = vmatpush2.msra.mxu0 0.0
        %1568 = vmatprep.subr.mxu0 0.0
        %1569 = vmatpush2.msra.mxu0 0.0
        %1570 = vmatprep.subr.mxu0 0.0
        %1571 = vmatpush2.msra.mxu0 0.0
        %1572 = vmatprep.subr.mxu0 0.0
        %1573 = vmatpush2.msra.mxu0 0.0
        %1574 = vmatprep.subr.mxu0 0.0
        %1575 = vmatpush2.msra.mxu0 0.0
        %1576 = vmatprep.subr.mxu0 0.0
        %1577 = vmatpush2.msra.mxu0 0.0
        %1578 = vmatprep.mubr.f32.mxu0 0.0
        %1579 = vmatmul.mubr.f32.gmra.mxu0 %v1512
        %v1580 = vpop.f32.mrf.mxu0
        %v1581 = vadd.f32 %v1509, %v1580
        %v1582 = vpop.f32.mrf.mxu0
        %1583 = vdwg.mxu0
        %vm1584 = vcmp.ge.f32.partialorder %v1581, 0.0
        %v1585 = vmul.f32 %v1581, 0.01
        %v1586 = vsel %vm1584, %v1581, %v1585
        %s1587 = scalar_lea.vmem %s526, 32
        %v1588 = vld [vmem:[%s1587] sm:$0xff]
        %v1589 = vld [vmem:[%s1587 + $0x8] sm:$0xff]
        %v1590 = vld [vmem:[%s1587 + $0x10] sm:$0xff]
        %v1591 = vld [vmem:[%s1587 + $0x18] sm:$0xff]
        %s1592 = scalar_lea.vmem %s530, 1
        %v1593 = vld [vmem:[%s1592] sm:$0x1]
        %v1595 = vlaneseq
        %v1596 = vshrl.u32 %v1595, 7
        %v1597 = vsub.s32 0, %v1596
        %v1598 = vrot.slane %v1593, %v1597
        %v1601 = vsel %vm717, %v1586, 0
        %1603 = vmatprep.subr.mxu0 0.0
        %1604 = vmatpush1.msra.mxu0 0.0
        %1605 = vmatprep.subr.mxu0 0.0
        %1606 = vmatpush1.msra.mxu0 0.0
        %1607 = vmatprep.subr.mxu0 0.0
        %1608 = vmatpush1.msra.mxu0 0.0
        %1609 = vmatprep.subr.mxu0 0.0
        %1610 = vmatpush1.msra.mxu0 0.0
        %1611 = vmatprep.subr.mxu0 0.0
        %1612 = vmatpush1.msra.mxu0 0.0
        %1613 = vmatprep.subr.mxu0 0.0
        %1614 = vmatpush1.msra.mxu0 0.0
        %1615 = vmatprep.subr.mxu0 0.0
        %1616 = vmatpush1.msra.mxu0 0.0
        %1617 = vmatprep.subr.mxu0 0.0
        %1618 = vmatpush1.msra.mxu0 0.0
        %1619 = vmatprep.subr.mxu0 0.0
        %1620 = vmatpush1.msra.mxu0 0.0
        %1621 = vmatprep.subr.mxu0 0.0
        %1622 = vmatpush1.msra.mxu0 0.0
        %1623 = vmatprep.subr.mxu0 0.0
        %1624 = vmatpush1.msra.mxu0 0.0
        %1625 = vmatprep.subr.mxu0 0.0
        %1626 = vmatpush1.msra.mxu0 0.0
        %1627 = vmatprep.subr.mxu0 0.0
        %1628 = vmatpush1.msra.mxu0 %v1591
        %1629 = vmatprep.subr.mxu0 0.0
        %1630 = vmatpush1.msra.mxu0 %v1590
        %1631 = vmatprep.subr.mxu0 0.0
        %1632 = vmatpush1.msra.mxu0 %v1589
        %1633 = vmatprep.subr.mxu0 0.0
        %1634 = vmatpush1.msra.mxu0 %v1588
        %1635 = vmatprep.subr.mxu0 0.0
        %1636 = vmatpush2.msra.mxu0 0.0
        %1637 = vmatprep.subr.mxu0 0.0
        %1638 = vmatpush2.msra.mxu0 0.0
        %1639 = vmatprep.subr.mxu0 0.0
        %1640 = vmatpush2.msra.mxu0 0.0
        %1641 = vmatprep.subr.mxu0 0.0
        %1642 = vmatpush2.msra.mxu0 0.0
        %1643 = vmatprep.subr.mxu0 0.0
        %1644 = vmatpush2.msra.mxu0 0.0
        %1645 = vmatprep.subr.mxu0 0.0
        %1646 = vmatpush2.msra.mxu0 0.0
        %1647 = vmatprep.subr.mxu0 0.0
        %1648 = vmatpush2.msra.mxu0 0.0
        %1649 = vmatprep.subr.mxu0 0.0
        %1650 = vmatpush2.msra.mxu0 0.0
        %1651 = vmatprep.subr.mxu0 0.0
        %1652 = vmatpush2.msra.mxu0 0.0
        %1653 = vmatprep.subr.mxu0 0.0
        %1654 = vmatpush2.msra.mxu0 0.0
        %1655 = vmatprep.subr.mxu0 0.0
        %1656 = vmatpush2.msra.mxu0 0.0
        %1657 = vmatprep.subr.mxu0 0.0
        %1658 = vmatpush2.msra.mxu0 0.0
        %1659 = vmatprep.subr.mxu0 0.0
        %1660 = vmatpush2.msra.mxu0 0.0
        %1661 = vmatprep.subr.mxu0 0.0
        %1662 = vmatpush2.msra.mxu0 0.0
        %1663 = vmatprep.subr.mxu0 0.0
        %1664 = vmatpush2.msra.mxu0 0.0
        %1665 = vmatprep.subr.mxu0 0.0
        %1666 = vmatpush2.msra.mxu0 0.0
        %1667 = vmatprep.mubr.f32.mxu0 0.0
        %1668 = vmatmul.mubr.f32.gmra.mxu0 %v1601
        %v1669 = vpop.f32.mrf.mxu0
        %v1670 = vadd.f32 %v1598, %v1669
        %v1671 = vpop.f32.mrf.mxu0
        %1672 = vdwg.mxu0
        %v1673 = vtanh.pop %v1670
        %v1674 = vmul.f32 %v1673, 1.442695
        %v1675 = vpow.pop %v1674
        %v1676 = vmul.f32 %v617, %v1675
        %s1677 = scalar_lea.vmem %s513, 24
        %v1678 = vld [vmem:[%s1677] sm:$0xff]
        %s1679 = scalar_lea.vmem %s517, 3
        %v1680 = vld [vmem:[%s1679] sm:$0x1]
        %v1682 = vlaneseq
        %v1683 = vshrl.u32 %v1682, 7
        %v1684 = vsub.s32 0, %v1683
        %v1685 = vrot.slane %v1680, %v1684
        %1687 = vmatprep.subr.mxu0 0.0
        %1688 = vmatpush1.msra.mxu0 0.0
        %1689 = vmatprep.subr.mxu0 0.0
        %1690 = vmatpush1.msra.mxu0 0.0
        %1691 = vmatprep.subr.mxu0 0.0
        %1692 = vmatpush1.msra.mxu0 0.0
        %1693 = vmatprep.subr.mxu0 0.0
        %1694 = vmatpush1.msra.mxu0 0.0
        %1695 = vmatprep.subr.mxu0 0.0
        %1696 = vmatpush1.msra.mxu0 0.0
        %1697 = vmatprep.subr.mxu0 0.0
        %1698 = vmatpush1.msra.mxu0 0.0
        %1699 = vmatprep.subr.mxu0 0.0
        %1700 = vmatpush1.msra.mxu0 0.0
        %1701 = vmatprep.subr.mxu0 0.0
        %1702 = vmatpush1.msra.mxu0 0.0
        %1703 = vmatprep.subr.mxu0 0.0
        %1704 = vmatpush1.msra.mxu0 0.0
        %1705 = vmatprep.subr.mxu0 0.0
        %1706 = vmatpush1.msra.mxu0 0.0
        %1707 = vmatprep.subr.mxu0 0.0
        %1708 = vmatpush1.msra.mxu0 0.0
        %1709 = vmatprep.subr.mxu0 0.0
        %1710 = vmatpush1.msra.mxu0 0.0
        %1711 = vmatprep.subr.mxu0 0.0
        %1712 = vmatpush1.msra.mxu0 0.0
        %1713 = vmatprep.subr.mxu0 0.0
        %1714 = vmatpush1.msra.mxu0 0.0
        %1715 = vmatprep.subr.mxu0 0.0
        %1716 = vmatpush1.msra.mxu0 0.0
        %1717 = vmatprep.subr.mxu0 0.0
        %1718 = vmatpush1.msra.mxu0 %v1678
        %1719 = vmatprep.subr.mxu0 0.0
        %1720 = vmatpush2.msra.mxu0 0.0
        %1721 = vmatprep.subr.mxu0 0.0
        %1722 = vmatpush2.msra.mxu0 0.0
        %1723 = vmatprep.subr.mxu0 0.0
        %1724 = vmatpush2.msra.mxu0 0.0
        %1725 = vmatprep.subr.mxu0 0.0
        %1726 = vmatpush2.msra.mxu0 0.0
        %1727 = vmatprep.subr.mxu0 0.0
        %1728 = vmatpush2.msra.mxu0 0.0
        %1729 = vmatprep.subr.mxu0 0.0
        %1730 = vmatpush2.msra.mxu0 0.0
        %1731 = vmatprep.subr.mxu0 0.0
        %1732 = vmatpush2.msra.mxu0 0.0
        %1733 = vmatprep.subr.mxu0 0.0
        %1734 = vmatpush2.msra.mxu0 0.0
        %1735 = vmatprep.subr.mxu0 0.0
        %1736 = vmatpush2.msra.mxu0 0.0
        %1737 = vmatprep.subr.mxu0 0.0
        %1738 = vmatpush2.msra.mxu0 0.0
        %1739 = vmatprep.subr.mxu0 0.0
        %1740 = vmatpush2.msra.mxu0 0.0
        %1741 = vmatprep.subr.mxu0 0.0
        %1742 = vmatpush2.msra.mxu0 0.0
        %1743 = vmatprep.subr.mxu0 0.0
        %1744 = vmatpush2.msra.mxu0 0.0
        %1745 = vmatprep.subr.mxu0 0.0
        %1746 = vmatpush2.msra.mxu0 0.0
        %1747 = vmatprep.subr.mxu0 0.0
        %1748 = vmatpush2.msra.mxu0 0.0
        %1749 = vmatprep.subr.mxu0 0.0
        %1750 = vmatpush2.msra.mxu0 0.0
        %1751 = vmatprep.mubr.f32.mxu0 0.0
        %1752 = vmatmul.mubr.f32.gmra.mxu0 %v1334
        %v1753 = vpop.f32.mrf.mxu0
        %v1754 = vadd.f32 %v1685, %v1753
        %v1755 = vpop.f32.mrf.mxu0
        %1756 = vdwg.mxu0
        %vm1757 = vcmp.ge.f32.partialorder %v1754, 0.0
        %v1758 = vmul.f32 %v1754, 0.01
        %v1759 = vsel %vm1757, %v1754, %v1758
        %s1760 = scalar_lea.vmem %s432, 192 [#allocation5]
        %v1761 = vld [vmem:[%s1760] sm:$0xff]
        %v1762 = vld [vmem:[%s1760 + $0x8] sm:$0xff]
        %v1763 = vld [vmem:[%s1760 + $0x10] sm:$0xff]
        %v1764 = vld [vmem:[%s1760 + $0x18] sm:$0xff]
        %s1765 = scalar_lea.vmem %s521, 6
        %v1766 = vld [vmem:[%s1765] sm:$0x1]
        %v1768 = vlaneseq
        %v1769 = vshrl.u32 %v1768, 7
        %v1770 = vsub.s32 0, %v1769
        %v1771 = vrot.slane %v1766, %v1770
        %v1774 = vsel %vm717, %v1759, 0
        %1776 = vmatprep.subr.mxu0 0.0
        %1777 = vmatpush1.msra.mxu0 0.0
        %1778 = vmatprep.subr.mxu0 0.0
        %1779 = vmatpush1.msra.mxu0 0.0
        %1780 = vmatprep.subr.mxu0 0.0
        %1781 = vmatpush1.msra.mxu0 0.0
        %1782 = vmatprep.subr.mxu0 0.0
        %1783 = vmatpush1.msra.mxu0 0.0
        %1784 = vmatprep.subr.mxu0 0.0
        %1785 = vmatpush1.msra.mxu0 0.0
        %1786 = vmatprep.subr.mxu0 0.0
        %1787 = vmatpush1.msra.mxu0 0.0
        %1788 = vmatprep.subr.mxu0 0.0
        %1789 = vmatpush1.msra.mxu0 0.0
        %1790 = vmatprep.subr.mxu0 0.0
        %1791 = vmatpush1.msra.mxu0 0.0
        %1792 = vmatprep.subr.mxu0 0.0
        %1793 = vmatpush1.msra.mxu0 0.0
        %1794 = vmatprep.subr.mxu0 0.0
        %1795 = vmatpush1.msra.mxu0 0.0
        %1796 = vmatprep.subr.mxu0 0.0
        %1797 = vmatpush1.msra.mxu0 0.0
        %1798 = vmatprep.subr.mxu0 0.0
        %1799 = vmatpush1.msra.mxu0 0.0
        %1800 = vmatprep.subr.mxu0 0.0
        %1801 = vmatpush1.msra.mxu0 %v1764
        %1802 = vmatprep.subr.mxu0 0.0
        %1803 = vmatpush1.msra.mxu0 %v1763
        %1804 = vmatprep.subr.mxu0 0.0
        %1805 = vmatpush1.msra.mxu0 %v1762
        %1806 = vmatprep.subr.mxu0 0.0
        %1807 = vmatpush1.msra.mxu0 %v1761
        %1808 = vmatprep.subr.mxu0 0.0
        %1809 = vmatpush2.msra.mxu0 0.0
        %1810 = vmatprep.subr.mxu0 0.0
        %1811 = vmatpush2.msra.mxu0 0.0
        %1812 = vmatprep.subr.mxu0 0.0
        %1813 = vmatpush2.msra.mxu0 0.0
        %1814 = vmatprep.subr.mxu0 0.0
        %1815 = vmatpush2.msra.mxu0 0.0
        %1816 = vmatprep.subr.mxu0 0.0
        %1817 = vmatpush2.msra.mxu0 0.0
        %1818 = vmatprep.subr.mxu0 0.0
        %1819 = vmatpush2.msra.mxu0 0.0
        %1820 = vmatprep.subr.mxu0 0.0
        %1821 = vmatpush2.msra.mxu0 0.0
        %1822 = vmatprep.subr.mxu0 0.0
        %1823 = vmatpush2.msra.mxu0 0.0
        %1824 = vmatprep.subr.mxu0 0.0
        %1825 = vmatpush2.msra.mxu0 0.0
        %1826 = vmatprep.subr.mxu0 0.0
        %1827 = vmatpush2.msra.mxu0 0.0
        %1828 = vmatprep.subr.mxu0 0.0
        %1829 = vmatpush2.msra.mxu0 0.0
        %1830 = vmatprep.subr.mxu0 0.0
        %1831 = vmatpush2.msra.mxu0 0.0
        %1832 = vmatprep.subr.mxu0 0.0
        %1833 = vmatpush2.msra.mxu0 0.0
        %1834 = vmatprep.subr.mxu0 0.0
        %1835 = vmatpush2.msra.mxu0 0.0
        %1836 = vmatprep.subr.mxu0 0.0
        %1837 = vmatpush2.msra.mxu0 0.0
        %1838 = vmatprep.subr.mxu0 0.0
        %1839 = vmatpush2.msra.mxu0 0.0
        %1840 = vmatprep.mubr.f32.mxu0 0.0
        %1841 = vmatmul.mubr.f32.gmra.mxu0 %v1774
        %v1842 = vpop.f32.mrf.mxu0
        %v1843 = vadd.f32 %v1771, %v1842
        %v1844 = vpop.f32.mrf.mxu0
        %1845 = vdwg.mxu0
        %vm1846 = vcmp.ge.f32.partialorder %v1843, 0.0
        %v1847 = vmul.f32 %v1843, 0.01
        %v1848 = vsel %vm1846, %v1843, %v1847
        %s1849 = scalar_lea.vmem %s432, 224 [#allocation5]
        %v1850 = vld [vmem:[%s1849] sm:$0xff]
        %v1851 = vld [vmem:[%s1849 + $0x8] sm:$0xff]
        %v1852 = vld [vmem:[%s1849 + $0x10] sm:$0xff]
        %v1853 = vld [vmem:[%s1849 + $0x18] sm:$0xff]
        %s1854 = scalar_lea.vmem %s521, 7
        %v1855 = vld [vmem:[%s1854] sm:$0x1]
        %v1857 = vlaneseq
        %v1858 = vshrl.u32 %v1857, 7
        %v1859 = vsub.s32 0, %v1858
        %v1860 = vrot.slane %v1855, %v1859
        %v1863 = vsel %vm717, %v1848, 0
        %1865 = vmatprep.subr.mxu0 0.0
        %1866 = vmatpush1.msra.mxu0 0.0
        %1867 = vmatprep.subr.mxu0 0.0
        %1868 = vmatpush1.msra.mxu0 0.0
        %1869 = vmatprep.subr.mxu0 0.0
        %1870 = vmatpush1.msra.mxu0 0.0
        %1871 = vmatprep.subr.mxu0 0.0
        %1872 = vmatpush1.msra.mxu0 0.0
        %1873 = vmatprep.subr.mxu0 0.0
        %1874 = vmatpush1.msra.mxu0 0.0
        %1875 = vmatprep.subr.mxu0 0.0
        %1876 = vmatpush1.msra.mxu0 0.0
        %1877 = vmatprep.subr.mxu0 0.0
        %1878 = vmatpush1.msra.mxu0 0.0
        %1879 = vmatprep.subr.mxu0 0.0
        %1880 = vmatpush1.msra.mxu0 0.0
        %1881 = vmatprep.subr.mxu0 0.0
        %1882 = vmatpush1.msra.mxu0 0.0
        %1883 = vmatprep.subr.mxu0 0.0
        %1884 = vmatpush1.msra.mxu0 0.0
        %1885 = vmatprep.subr.mxu0 0.0
        %1886 = vmatpush1.msra.mxu0 0.0
        %1887 = vmatprep.subr.mxu0 0.0
        %1888 = vmatpush1.msra.mxu0 0.0
        %1889 = vmatprep.subr.mxu0 0.0
        %1890 = vmatpush1.msra.mxu0 %v1853
        %1891 = vmatprep.subr.mxu0 0.0
        %1892 = vmatpush1.msra.mxu0 %v1852
        %1893 = vmatprep.subr.mxu0 0.0
        %1894 = vmatpush1.msra.mxu0 %v1851
        %1895 = vmatprep.subr.mxu0 0.0
        %1896 = vmatpush1.msra.mxu0 %v1850
        %1897 = vmatprep.subr.mxu0 0.0
        %1898 = vmatpush2.msra.mxu0 0.0
        %1899 = vmatprep.subr.mxu0 0.0
        %1900 = vmatpush2.msra.mxu0 0.0
        %1901 = vmatprep.subr.mxu0 0.0
        %1902 = vmatpush2.msra.mxu0 0.0
        %1903 = vmatprep.subr.mxu0 0.0
        %1904 = vmatpush2.msra.mxu0 0.0
        %1905 = vmatprep.subr.mxu0 0.0
        %1906 = vmatpush2.msra.mxu0 0.0
        %1907 = vmatprep.subr.mxu0 0.0
        %1908 = vmatpush2.msra.mxu0 0.0
        %1909 = vmatprep.subr.mxu0 0.0
        %1910 = vmatpush2.msra.mxu0 0.0
        %1911 = vmatprep.subr.mxu0 0.0
        %1912 = vmatpush2.msra.mxu0 0.0
        %1913 = vmatprep.subr.mxu0 0.0
        %1914 = vmatpush2.msra.mxu0 0.0
        %1915 = vmatprep.subr.mxu0 0.0
        %1916 = vmatpush2.msra.mxu0 0.0
        %1917 = vmatprep.subr.mxu0 0.0
        %1918 = vmatpush2.msra.mxu0 0.0
        %1919 = vmatprep.subr.mxu0 0.0
        %1920 = vmatpush2.msra.mxu0 0.0
        %1921 = vmatprep.subr.mxu0 0.0
        %1922 = vmatpush2.msra.mxu0 0.0
        %1923 = vmatprep.subr.mxu0 0.0
        %1924 = vmatpush2.msra.mxu0 0.0
        %1925 = vmatprep.subr.mxu0 0.0
        %1926 = vmatpush2.msra.mxu0 0.0
        %1927 = vmatprep.subr.mxu0 0.0
        %1928 = vmatpush2.msra.mxu0 0.0
        %1929 = vmatprep.mubr.f32.mxu0 0.0
        %1930 = vmatmul.mubr.f32.gmra.mxu0 %v1863
        %v1931 = vpop.f32.mrf.mxu0
        %v1932 = vadd.f32 %v1860, %v1931
        %v1933 = vpop.f32.mrf.mxu0
        %1934 = vdwg.mxu0
        %vm1935 = vcmp.ge.f32.partialorder %v1932, 0.0
        %v1936 = vmul.f32 %v1932, 0.01
        %v1937 = vsel %vm1935, %v1932, %v1936
        %s1938 = scalar_lea.vmem %s526, 96
        %v1939 = vld [vmem:[%s1938] sm:$0xff]
        %v1940 = vld [vmem:[%s1938 + $0x8] sm:$0xff]
        %v1941 = vld [vmem:[%s1938 + $0x10] sm:$0xff]
        %v1942 = vld [vmem:[%s1938 + $0x18] sm:$0xff]
        %s1943 = scalar_lea.vmem %s530, 3
        %v1944 = vld [vmem:[%s1943] sm:$0x1]
        %v1946 = vlaneseq
        %v1947 = vshrl.u32 %v1946, 7
        %v1948 = vsub.s32 0, %v1947
        %v1949 = vrot.slane %v1944, %v1948
        %v1952 = vsel %vm717, %v1937, 0
        %1954 = vmatprep.subr.mxu0 0.0
        %1955 = vmatpush1.msra.mxu0 0.0
        %1956 = vmatprep.subr.mxu0 0.0
        %1957 = vmatpush1.msra.mxu0 0.0
        %1958 = vmatprep.subr.mxu0 0.0
        %1959 = vmatpush1.msra.mxu0 0.0
        %1960 = vmatprep.subr.mxu0 0.0
        %1961 = vmatpush1.msra.mxu0 0.0
        %1962 = vmatprep.subr.mxu0 0.0
        %1963 = vmatpush1.msra.mxu0 0.0
        %1964 = vmatprep.subr.mxu0 0.0
        %1965 = vmatpush1.msra.mxu0 0.0
        %1966 = vmatprep.subr.mxu0 0.0
        %1967 = vmatpush1.msra.mxu0 0.0
        %1968 = vmatprep.subr.mxu0 0.0
        %1969 = vmatpush1.msra.mxu0 0.0
        %1970 = vmatprep.subr.mxu0 0.0
        %1971 = vmatpush1.msra.mxu0 0.0
        %1972 = vmatprep.subr.mxu0 0.0
        %1973 = vmatpush1.msra.mxu0 0.0
        %1974 = vmatprep.subr.mxu0 0.0
        %1975 = vmatpush1.msra.mxu0 0.0
        %1976 = vmatprep.subr.mxu0 0.0
        %1977 = vmatpush1.msra.mxu0 0.0
        %1978 = vmatprep.subr.mxu0 0.0
        %1979 = vmatpush1.msra.mxu0 %v1942
        %1980 = vmatprep.subr.mxu0 0.0
        %1981 = vmatpush1.msra.mxu0 %v1941
        %1982 = vmatprep.subr.mxu0 0.0
        %1983 = vmatpush1.msra.mxu0 %v1940
        %1984 = vmatprep.subr.mxu0 0.0
        %1985 = vmatpush1.msra.mxu0 %v1939
        %1986 = vmatprep.subr.mxu0 0.0
        %1987 = vmatpush2.msra.mxu0 0.0
        %1988 = vmatprep.subr.mxu0 0.0
        %1989 = vmatpush2.msra.mxu0 0.0
        %1990 = vmatprep.subr.mxu0 0.0
        %1991 = vmatpush2.msra.mxu0 0.0
        %1992 = vmatprep.subr.mxu0 0.0
        %1993 = vmatpush2.msra.mxu0 0.0
        %1994 = vmatprep.subr.mxu0 0.0
        %1995 = vmatpush2.msra.mxu0 0.0
        %1996 = vmatprep.subr.mxu0 0.0
        %1997 = vmatpush2.msra.mxu0 0.0
        %1998 = vmatprep.subr.mxu0 0.0
        %1999 = vmatpush2.msra.mxu0 0.0
        %2000 = vmatprep.subr.mxu0 0.0
        %2001 = vmatpush2.msra.mxu0 0.0
        %2002 = vmatprep.subr.mxu0 0.0
        %2003 = vmatpush2.msra.mxu0 0.0
        %2004 = vmatprep.subr.mxu0 0.0
        %2005 = vmatpush2.msra.mxu0 0.0
        %2006 = vmatprep.subr.mxu0 0.0
        %2007 = vmatpush2.msra.mxu0 0.0
        %2008 = vmatprep.subr.mxu0 0.0
        %2009 = vmatpush2.msra.mxu0 0.0
        %2010 = vmatprep.subr.mxu0 0.0
        %2011 = vmatpush2.msra.mxu0 0.0
        %2012 = vmatprep.subr.mxu0 0.0
        %2013 = vmatpush2.msra.mxu0 0.0
        %2014 = vmatprep.subr.mxu0 0.0
        %2015 = vmatpush2.msra.mxu0 0.0
        %2016 = vmatprep.subr.mxu0 0.0
        %2017 = vmatpush2.msra.mxu0 0.0
        %2018 = vmatprep.mubr.f32.mxu0 0.0
        %2019 = vmatmul.mubr.f32.gmra.mxu0 %v1952
        %v2020 = vpop.f32.mrf.mxu0
        %v2021 = vadd.f32 %v1949, %v2020
        %v2022 = vpop.f32.mrf.mxu0
        %2023 = vdwg.mxu0
        %v2024 = vadd.f32 %v1676, %v2021
        %v2025 = vsel %vm629, %v1673, 0.0
        %2026 = vadd.xlane.f32.xlu0 %v2025
        %v2027 = vpop.xlane.xlu0 %2026
        %v2028 = vadd.f32 %v1322, %v2027
        %v2029 = vld [vmem:[%s535] sm:$0xff]
        %s2030 = scalar_lea.vmem %s535, 16
        %v2031 = vld [vmem:[%s2030] sm:$0xff]
        %v2033 = vsel %vm629, %v2024, 0
        %2035 = vmatprep.subr.mxu0 0.0
        %2036 = vmatpush1.msra.mxu0 0.0
        %2037 = vmatprep.subr.mxu0 0.0
        %2038 = vmatpush1.msra.mxu0 0.0
        %2039 = vmatprep.subr.mxu0 0.0
        %2040 = vmatpush1.msra.mxu0 0.0
        %2041 = vmatprep.subr.mxu0 0.0
        %2042 = vmatpush1.msra.mxu0 0.0
        %2043 = vmatprep.subr.mxu0 0.0
        %2044 = vmatpush1.msra.mxu0 0.0
        %2045 = vmatprep.subr.mxu0 0.0
        %2046 = vmatpush1.msra.mxu0 0.0
        %2047 = vmatprep.subr.mxu0 0.0
        %2048 = vmatpush1.msra.mxu0 0.0
        %2049 = vmatprep.subr.mxu0 0.0
        %2050 = vmatpush1.msra.mxu0 0.0
        %2051 = vmatprep.subr.mxu0 0.0
        %2052 = vmatpush1.msra.mxu0 0.0
        %2053 = vmatprep.subr.mxu0 0.0
        %2054 = vmatpush1.msra.mxu0 0.0
        %2055 = vmatprep.subr.mxu0 0.0
        %2056 = vmatpush1.msra.mxu0 0.0
        %2057 = vmatprep.subr.mxu0 0.0
        %2058 = vmatpush1.msra.mxu0 0.0
        %2059 = vmatprep.subr.mxu0 0.0
        %2060 = vmatpush1.msra.mxu0 0.0
        %2061 = vmatprep.subr.mxu0 0.0
        %2062 = vmatpush1.msra.mxu0 0.0
        %2063 = vmatprep.subr.mxu0 0.0
        %2064 = vmatpush1.msra.mxu0 0.0
        %2065 = vmatprep.subr.mxu0 0.0
        %2066 = vmatpush1.msra.mxu0 %v2031
        %2067 = vmatprep.subr.mxu0 0.0
        %2068 = vmatpush2.msra.mxu0 0.0
        %2069 = vmatprep.subr.mxu0 0.0
        %2070 = vmatpush2.msra.mxu0 0.0
        %2071 = vmatprep.subr.mxu0 0.0
        %2072 = vmatpush2.msra.mxu0 0.0
        %2073 = vmatprep.subr.mxu0 0.0
        %2074 = vmatpush2.msra.mxu0 0.0
        %2075 = vmatprep.subr.mxu0 0.0
        %2076 = vmatpush2.msra.mxu0 0.0
        %2077 = vmatprep.subr.mxu0 0.0
        %2078 = vmatpush2.msra.mxu0 0.0
        %2079 = vmatprep.subr.mxu0 0.0
        %2080 = vmatpush2.msra.mxu0 0.0
        %2081 = vmatprep.subr.mxu0 0.0
        %2082 = vmatpush2.msra.mxu0 0.0
        %2083 = vmatprep.subr.mxu0 0.0
        %2084 = vmatpush2.msra.mxu0 0.0
        %2085 = vmatprep.subr.mxu0 0.0
        %2086 = vmatpush2.msra.mxu0 0.0
        %2087 = vmatprep.subr.mxu0 0.0
        %2088 = vmatpush2.msra.mxu0 0.0
        %2089 = vmatprep.subr.mxu0 0.0
        %2090 = vmatpush2.msra.mxu0 0.0
        %2091 = vmatprep.subr.mxu0 0.0
        %2092 = vmatpush2.msra.mxu0 0.0
        %2093 = vmatprep.subr.mxu0 0.0
        %2094 = vmatpush2.msra.mxu0 0.0
        %2095 = vmatprep.subr.mxu0 0.0
        %2096 = vmatpush2.msra.mxu0 0.0
        %2097 = vmatprep.subr.mxu0 0.0
        %2098 = vmatpush2.msra.mxu0 0.0
        %2099 = vmatprep.mubr.f32.mxu0 0.0
        %2100 = vmatmul.mubr.f32.gmra.mxu0 %v2033
        %v2101 = vpop.f32.mrf.mxu0
        %v2102 = vadd.f32 0.0, %v2101
        %v2103 = vpop.f32.mrf.mxu0
        %2104 = vdwg.mxu0
        %2105 = vmatprep.subr.mxu0 0.0
        %2106 = vmatpush1.msra.mxu0 0.0
        %2107 = vmatprep.subr.mxu0 0.0
        %2108 = vmatpush1.msra.mxu0 0.0
        %2109 = vmatprep.subr.mxu0 0.0
        %2110 = vmatpush1.msra.mxu0 0.0
        %2111 = vmatprep.subr.mxu0 0.0
        %2112 = vmatpush1.msra.mxu0 0.0
        %2113 = vmatprep.subr.mxu0 0.0
        %2114 = vmatpush1.msra.mxu0 0.0
        %2115 = vmatprep.subr.mxu0 0.0
        %2116 = vmatpush1.msra.mxu0 0.0
        %2117 = vmatprep.subr.mxu0 0.0
        %2118 = vmatpush1.msra.mxu0 0.0
        %2119 = vmatprep.subr.mxu0 0.0
        %2120 = vmatpush1.msra.mxu0 0.0
        %2121 = vmatprep.subr.mxu0 0.0
        %2122 = vmatpush1.msra.mxu0 0.0
        %2123 = vmatprep.subr.mxu0 0.0
        %2124 = vmatpush1.msra.mxu0 0.0
        %2125 = vmatprep.subr.mxu0 0.0
        %2126 = vmatpush1.msra.mxu0 0.0
        %2127 = vmatprep.subr.mxu0 0.0
        %2128 = vmatpush1.msra.mxu0 0.0
        %2129 = vmatprep.subr.mxu0 0.0
        %2130 = vmatpush1.msra.mxu0 0.0
        %2131 = vmatprep.subr.mxu0 0.0
        %2132 = vmatpush1.msra.mxu0 0.0
        %2133 = vmatprep.subr.mxu0 0.0
        %2134 = vmatpush1.msra.mxu0 0.0
        %2135 = vmatprep.subr.mxu0 0.0
        %2136 = vmatpush1.msra.mxu0 %v2029
        %2137 = vmatprep.subr.mxu0 0.0
        %2138 = vmatpush2.msra.mxu0 0.0
        %2139 = vmatprep.subr.mxu0 0.0
        %2140 = vmatpush2.msra.mxu0 0.0
        %2141 = vmatprep.subr.mxu0 0.0
        %2142 = vmatpush2.msra.mxu0 0.0
        %2143 = vmatprep.subr.mxu0 0.0
        %2144 = vmatpush2.msra.mxu0 0.0
        %2145 = vmatprep.subr.mxu0 0.0
        %2146 = vmatpush2.msra.mxu0 0.0
        %2147 = vmatprep.subr.mxu0 0.0
        %2148 = vmatpush2.msra.mxu0 0.0
        %2149 = vmatprep.subr.mxu0 0.0
        %2150 = vmatpush2.msra.mxu0 0.0
        %2151 = vmatprep.subr.mxu0 0.0
        %2152 = vmatpush2.msra.mxu0 0.0
        %2153 = vmatprep.subr.mxu0 0.0
        %2154 = vmatpush2.msra.mxu0 0.0
        %2155 = vmatprep.subr.mxu0 0.0
        %2156 = vmatpush2.msra.mxu0 0.0
        %2157 = vmatprep.subr.mxu0 0.0
        %2158 = vmatpush2.msra.mxu0 0.0
        %2159 = vmatprep.subr.mxu0 0.0
        %2160 = vmatpush2.msra.mxu0 0.0
        %2161 = vmatprep.subr.mxu0 0.0
        %2162 = vmatpush2.msra.mxu0 0.0
        %2163 = vmatprep.subr.mxu0 0.0
        %2164 = vmatpush2.msra.mxu0 0.0
        %2165 = vmatprep.subr.mxu0 0.0
        %2166 = vmatpush2.msra.mxu0 0.0
        %2167 = vmatprep.subr.mxu0 0.0
        %2168 = vmatpush2.msra.mxu0 0.0
        %2169 = vmatprep.mubr.f32.mxu0 0.0
        %2170 = vmatmul.mubr.f32.gmra.mxu0 %v1334
        %v2171 = vpop.f32.mrf.mxu0
        %v2172 = vadd.f32 %v2102, %v2171
        %v2173 = vpop.f32.mrf.mxu0
        %2174 = vdwg.mxu0
        %s2175 = scalar_lea.vmem %s535, 8
        %v2176 = vld [vmem:[%s2175] sm:$0xff]
        %s2177 = scalar_lea.vmem %s535, 24
        %v2178 = vld [vmem:[%s2177] sm:$0xff]
        %2179 = vmatprep.subr.mxu0 0.0
        %2180 = vmatpush1.msra.mxu0 0.0
        %2181 = vmatprep.subr.mxu0 0.0
        %2182 = vmatpush1.msra.mxu0 0.0
        %2183 = vmatprep.subr.mxu0 0.0
        %2184 = vmatpush1.msra.mxu0 0.0
        %2185 = vmatprep.subr.mxu0 0.0
        %2186 = vmatpush1.msra.mxu0 0.0
        %2187 = vmatprep.subr.mxu0 0.0
        %2188 = vmatpush1.msra.mxu0 0.0
        %2189 = vmatprep.subr.mxu0 0.0
        %2190 = vmatpush1.msra.mxu0 0.0
        %2191 = vmatprep.subr.mxu0 0.0
        %2192 = vmatpush1.msra.mxu0 0.0
        %2193 = vmatprep.subr.mxu0 0.0
        %2194 = vmatpush1.msra.mxu0 0.0
        %2195 = vmatprep.subr.mxu0 0.0
        %2196 = vmatpush1.msra.mxu0 0.0
        %2197 = vmatprep.subr.mxu0 0.0
        %2198 = vmatpush1.msra.mxu0 0.0
        %2199 = vmatprep.subr.mxu0 0.0
        %2200 = vmatpush1.msra.mxu0 0.0
        %2201 = vmatprep.subr.mxu0 0.0
        %2202 = vmatpush1.msra.mxu0 0.0
        %2203 = vmatprep.subr.mxu0 0.0
        %2204 = vmatpush1.msra.mxu0 0.0
        %2205 = vmatprep.subr.mxu0 0.0
        %2206 = vmatpush1.msra.mxu0 0.0
        %2207 = vmatprep.subr.mxu0 0.0
        %2208 = vmatpush1.msra.mxu0 0.0
        %2209 = vmatprep.subr.mxu0 0.0
        %2210 = vmatpush1.msra.mxu0 %v2178
        %2211 = vmatprep.subr.mxu0 0.0
        %2212 = vmatpush2.msra.mxu0 0.0
        %2213 = vmatprep.subr.mxu0 0.0
        %2214 = vmatpush2.msra.mxu0 0.0
        %2215 = vmatprep.subr.mxu0 0.0
        %2216 = vmatpush2.msra.mxu0 0.0
        %2217 = vmatprep.subr.mxu0 0.0
        %2218 = vmatpush2.msra.mxu0 0.0
        %2219 = vmatprep.subr.mxu0 0.0
        %2220 = vmatpush2.msra.mxu0 0.0
        %2221 = vmatprep.subr.mxu0 0.0
        %2222 = vmatpush2.msra.mxu0 0.0
        %2223 = vmatprep.subr.mxu0 0.0
        %2224 = vmatpush2.msra.mxu0 0.0
        %2225 = vmatprep.subr.mxu0 0.0
        %2226 = vmatpush2.msra.mxu0 0.0
        %2227 = vmatprep.subr.mxu0 0.0
        %2228 = vmatpush2.msra.mxu0 0.0
        %2229 = vmatprep.subr.mxu0 0.0
        %2230 = vmatpush2.msra.mxu0 0.0
        %2231 = vmatprep.subr.mxu0 0.0
        %2232 = vmatpush2.msra.mxu0 0.0
        %2233 = vmatprep.subr.mxu0 0.0
        %2234 = vmatpush2.msra.mxu0 0.0
        %2235 = vmatprep.subr.mxu0 0.0
        %2236 = vmatpush2.msra.mxu0 0.0
        %2237 = vmatprep.subr.mxu0 0.0
        %2238 = vmatpush2.msra.mxu0 0.0
        %2239 = vmatprep.subr.mxu0 0.0
        %2240 = vmatpush2.msra.mxu0 0.0
        %2241 = vmatprep.subr.mxu0 0.0
        %2242 = vmatpush2.msra.mxu0 0.0
        %2243 = vmatprep.mubr.f32.mxu0 0.0
        %2244 = vmatmul.mubr.f32.gmra.mxu0 %v2033
        %v2245 = vpop.f32.mrf.mxu0
        %v2246 = vadd.f32 0.0, %v2245
        %v2247 = vpop.f32.mrf.mxu0
        %2248 = vdwg.mxu0
        %2249 = vmatprep.subr.mxu0 0.0
        %2250 = vmatpush1.msra.mxu0 0.0
        %2251 = vmatprep.subr.mxu0 0.0
        %2252 = vmatpush1.msra.mxu0 0.0
        %2253 = vmatprep.subr.mxu0 0.0
        %2254 = vmatpush1.msra.mxu0 0.0
        %2255 = vmatprep.subr.mxu0 0.0
        %2256 = vmatpush1.msra.mxu0 0.0
        %2257 = vmatprep.subr.mxu0 0.0
        %2258 = vmatpush1.msra.mxu0 0.0
        %2259 = vmatprep.subr.mxu0 0.0
        %2260 = vmatpush1.msra.mxu0 0.0
        %2261 = vmatprep.subr.mxu0 0.0
        %2262 = vmatpush1.msra.mxu0 0.0
        %2263 = vmatprep.subr.mxu0 0.0
        %2264 = vmatpush1.msra.mxu0 0.0
        %2265 = vmatprep.subr.mxu0 0.0
        %2266 = vmatpush1.msra.mxu0 0.0
        %2267 = vmatprep.subr.mxu0 0.0
        %2268 = vmatpush1.msra.mxu0 0.0
        %2269 = vmatprep.subr.mxu0 0.0
        %2270 = vmatpush1.msra.mxu0 0.0
        %2271 = vmatprep.subr.mxu0 0.0
        %2272 = vmatpush1.msra.mxu0 0.0
        %2273 = vmatprep.subr.mxu0 0.0
        %2274 = vmatpush1.msra.mxu0 0.0
        %2275 = vmatprep.subr.mxu0 0.0
        %2276 = vmatpush1.msra.mxu0 0.0
        %2277 = vmatprep.subr.mxu0 0.0
        %2278 = vmatpush1.msra.mxu0 0.0
        %2279 = vmatprep.subr.mxu0 0.0
        %2280 = vmatpush1.msra.mxu0 %v2176
        %2281 = vmatprep.subr.mxu0 0.0
        %2282 = vmatpush2.msra.mxu0 0.0
        %2283 = vmatprep.subr.mxu0 0.0
        %2284 = vmatpush2.msra.mxu0 0.0
        %2285 = vmatprep.subr.mxu0 0.0
        %2286 = vmatpush2.msra.mxu0 0.0
        %2287 = vmatprep.subr.mxu0 0.0
        %2288 = vmatpush2.msra.mxu0 0.0
        %2289 = vmatprep.subr.mxu0 0.0
        %2290 = vmatpush2.msra.mxu0 0.0
        %2291 = vmatprep.subr.mxu0 0.0
        %2292 = vmatpush2.msra.mxu0 0.0
        %2293 = vmatprep.subr.mxu0 0.0
        %2294 = vmatpush2.msra.mxu0 0.0
        %2295 = vmatprep.subr.mxu0 0.0
        %2296 = vmatpush2.msra.mxu0 0.0
        %2297 = vmatprep.subr.mxu0 0.0
        %2298 = vmatpush2.msra.mxu0 0.0
        %2299 = vmatprep.subr.mxu0 0.0
        %2300 = vmatpush2.msra.mxu0 0.0
        %2301 = vmatprep.subr.mxu0 0.0
        %2302 = vmatpush2.msra.mxu0 0.0
        %2303 = vmatprep.subr.mxu0 0.0
        %2304 = vmatpush2.msra.mxu0 0.0
        %2305 = vmatprep.subr.mxu0 0.0
        %2306 = vmatpush2.msra.mxu0 0.0
        %2307 = vmatprep.subr.mxu0 0.0
        %2308 = vmatpush2.msra.mxu0 0.0
        %2309 = vmatprep.subr.mxu0 0.0
        %2310 = vmatpush2.msra.mxu0 0.0
        %2311 = vmatprep.subr.mxu0 0.0
        %2312 = vmatpush2.msra.mxu0 0.0
        %2313 = vmatprep.mubr.f32.mxu0 0.0
        %2314 = vmatmul.mubr.f32.gmra.mxu0 %v1334
        %v2315 = vpop.f32.mrf.mxu0
        %v2316 = vadd.f32 %v2246, %v2315
        %v2317 = vpop.f32.mrf.mxu0
        %2318 = vdwg.mxu0
        %2319 = vst.msk [vmem:[#allocation2] sm:$0xff] %vm629, %v2172
        %2320 = vst.msk [vmem:[#allocation3] sm:$0xff] %vm629, %v2316
        %vm2321 = vcmask 7168
        %2322 = vst.msk [vmem:[#allocation4] sm:$0xff] %vm2321, %v2028
        %p2323 = scmp.eq.s32.totalorder %s27, 3
        // Predicated region
        $region69: #{tpu_custom_call.1} parent=59 // pred_check
          %p2324 = pneg %p2323
        $region70: #{tpu_custom_call.1} parent=59 // pred_check_branch
          %2326 = sbr.rel (%p2324) target = $region72
        $region71: #{tpu_custom_call.1} parent=59 // pred_region
          %2327 = vst.msk [vmem:[#allocation8] sm:$0xff] %vm629, %v2172
          %s2328 = scalar_lea.vmem [#allocation8], 8
          %2329 = vst.msk [vmem:[%s2328] sm:$0xff] %vm629, %v2316
          %2330 = vst.msk [vmem:[%s11] sm:$0xff] %vm2321, %v2028
        $region72: #{tpu_custom_call.1} parent=59 // pred_fallthru
          _
        // Predicated region
        $region73: #{tpu_custom_call.1} parent=59 // pred_check
          %p2331 = pneg %p295
        $region74: #{tpu_custom_call.1} parent=59 // pred_check_branch
          %2333 = sbr.rel (%p2331) target = $region76
        $region75: #{tpu_custom_call.1} parent=59 // pred_region
          %s2335 = ssub.s32 256, 256
          %2336 = vsyncadd [#allocation7], %s2335
          %s2337 = sshll.u32 [#allocation8], 4
          %s2338 = int_to_ptr.vmem [resolvable:$true] %s2337
          %2343 = dma.vmem_to_hbm [thread:$0]  %s2338, 256, %s10, [#allocation7], 128, 128, 8
        $region76: #{tpu_custom_call.1} parent=59 // pred_fallthru
          _
        // Predicated region
        $region77: #{tpu_custom_call.1} parent=59 // pred_check
          %p2344 = pneg %p316
        $region78: #{tpu_custom_call.1} parent=59 // pred_check_branch
          %2346 = sbr.rel (%p2344) target = $region80
        $region79: #{tpu_custom_call.1} parent=59 // pred_region
          _
        $region80: #{tpu_custom_call.1} parent=59 // pred_fallthru
          _
        // Predicated region
        $region81: #{tpu_custom_call.1} parent=59 // pred_check
          %p2347 = pneg %p295
        $region82: #{tpu_custom_call.1} parent=59 // pred_check_branch
          %2349 = sbr.rel (%p2347) target = $region84
        $region83: #{tpu_custom_call.1} parent=59 // pred_region
          %2350 = dma.done [#allocation7], 256
        $region84: #{tpu_custom_call.1} parent=59 // pred_fallthru
          _
        // Predicated region
        $region85: #{tpu_custom_call.1} parent=59 // pred_check
          %p2351 = pneg %p316
        $region86: #{tpu_custom_call.1} parent=59 // pred_check_branch
          %2353 = sbr.rel (%p2351) target = $region88
        $region87: #{tpu_custom_call.1} parent=59 // pred_region
          _
        $region88: #{tpu_custom_call.1} parent=59 // pred_fallthru
          _
      $region60: #{tpu_custom_call.1} parent=5 // pred_fallthru
        _
      %p2354 = scmp.le.s32.totalorder 2, %s22
      // Predicated region
      $region89: #{tpu_custom_call.1} parent=5 // pred_check
        %p2355 = pneg %p2354
      $region90: #{tpu_custom_call.1} parent=5 // pred_check_branch
        %2357 = sbr.rel (%p2355) target = $region92
      $region91: #{tpu_custom_call.1} parent=5 // pred_region
        %s2358 = ssub.s32 %s22, 2
      $region92: #{tpu_custom_call.1} parent=5 // pred_fallthru
        _
    $region6: #{tpu_custom_call.1} parent=1 // loop_footer
      %s26 = sadd.s32 1, %s22
    $region7: #{tpu_custom_call.1} parent=1 // loop_footer_branch
      %21 = sbr.rel target = $region3
    $region8: #{tpu_custom_call.1} parent=1 // loop_exit
      _
    %2359 = vsyncpa [#allocation6], 1
    %s2360 = scalar_lea.sflag [#allocation6], 1
    %2361 = vsyncpa %s2360, 1
    %2362 = vsyncpa [#allocation7], 1
    %s2363 = scalar_lea.sflag [#allocation7], 1
    %2364 = vsyncpa %s2363, 1

</llo_original>
